<compile_context>
chip_gen: v7x
topology: tpu7x:2x2x1
jax: 0.10.0
libtpu: 0.0.40
codegen_flags: <defaults>
</compile_context>

<pallas_src>
import jax
import jax.numpy as jnp
import numpy as np
from jax.experimental import pallas as pl
from jax.experimental.pallas import tpu as pltpu


# --------------------------------------------------------------------------- #
# Kernel 1: fused [theta | phi | g] 1x1 projection + 2x2/stride-2 max-pool.
# Grid = (batch, pooled-row chunk).
# --------------------------------------------------------------------------- #
def _proj_pool_kernel(x_ref, wqkv_ref, theta_ref, phiT_ref, g_ref):
    """
    x_ref     : (1, 4, TC, C)     bf16  4 pool candidates x TC pooled rows
    wqkv_ref  : (C, 2*C8p + C2)   bf16  fused, zero-padded projection weight
    theta_ref : (1, 4, TC, C8p)   bf16  theta for all 4*TC input rows of chunk
    phiT_ref  : (1, C8p, TC)      bf16  pooled phi, pre-transposed
    g_ref     : (1, TC, C2)       bf16  pooled g
    """
    c8p = theta_ref.shape[3]

    pooled = None
    for blk in range(4):                                   # static, unrolled
        qkv = jnp.dot(x_ref[0, blk], wqkv_ref[...],
                      preferred_element_type=jnp.float32)  # (TC, 2*C8p+C2) f32
        # theta keeps all (un-pooled) rows; column slice is 128-lane aligned.
        theta_ref[0, blk] = qkv[:, :c8p].astype(jnp.bfloat16)
        kv = qkv[:, c8p:]                                  # [phi | g] part
        pooled = kv if pooled is None else jnp.maximum(pooled, kv)

    # One small XLU transpose here so the hot-loop score matmul is a plain dot.
    phiT_ref[0] = pooled[:, :c8p].T.astype(jnp.bfloat16)   # (C8p, TC)
    g_ref[0] = pooled[:, c8p:].astype(jnp.bfloat16)        # (TC, C2)


# --------------------------------------------------------------------------- #
# Kernel 2: scores -> softmax -> attention -> output 1x1 conv -> residual.
# Grid = (batch, query tile); both axes "parallel" (no cross-step state).
# --------------------------------------------------------------------------- #
def _attention_kernel(gamma_ref, x_ref, theta_ref, phiT_ref, g_ref, wo_ref,
                      out_ref):
    """
    gamma_ref : (1,)            f32 SMEM
    x_ref     : (1, TQ, C)      bf16  residual tile (permuted row order)
    theta_ref : (1, TQ, C8p)    bf16  theta tile
    phiT_ref  : (1, C8p, HW4)   bf16  pooled phi (transposed), full per batch
    g_ref     : (1, HW4, C2)    bf16  pooled g, full per batch
    wo_ref    : (C2, C)         bf16  output 1x1 weight (transposed)
    out_ref   : (1, TQ, C)      bf16
    """
    s = jnp.dot(theta_ref[0], phiT_ref[0],
                preferred_element_type=jnp.float32)            # (TQ, HW4)
    s = s - jnp.max(s, axis=-1, keepdims=True)
    e = jnp.exp(s)
    beta = e * pl.reciprocal(jnp.sum(e, axis=-1, keepdims=True), approx=True)

    attn = jnp.dot(beta.astype(jnp.bfloat16), g_ref[0],
                   preferred_element_type=jnp.float32)         # (TQ, C2)
    o = jnp.dot(attn.astype(jnp.bfloat16), wo_ref[...],
                preferred_element_type=jnp.float32)            # (TQ, C)

    out_ref[0] = (gamma_ref[0] * o
                  + x_ref[0].astype(jnp.float32)).astype(out_ref.dtype)


# --------------------------------------------------------------------------- #
# Tiling / budget helpers.
# --------------------------------------------------------------------------- #
def _pick_pool_chunk(hw4, cap=256):
    """Pooled-row chunk for kernel 1: divides HW4 and is lane-friendly."""
    if hw4 <= cap:
        return hw4
    for t in (256, 128):
        if hw4 % t == 0:
            return t
    return hw4


def _pick_query_tile(hw):
    """Query tile: 256 (512 for HW >= 4096) per perf review; must divide HW."""
    target = 512 if hw >= 4096 else 256
    if hw <= target:
        return hw
    t = target
    while t >= 8:
        if hw % t == 0:
            return t
        t //= 2
    return hw


def _vmem_limit(est_bytes):
    """Override scoped VMEM only when the estimate exceeds the smallest
    per-generation default (16 MiB on v5e).  Returns None for small shapes."""
    need = int(est_bytes) + (4 << 20)
    if need <= (16 << 20):
        return None
    return min(need, 56 << 20)


# --------------------------------------------------------------------------- #
# One-time weight preparation (hoisted out of the forward call).
# --------------------------------------------------------------------------- #
def prepare_attention_params(w_theta, w_phi, w_g, w_o):
    """PyTorch Conv2d(k=1, bias=False) weights are (C_out, C_in).  Transpose
    once, zero-pad theta/phi output channels up to a multiple of 128 (lane-
    aligned slices + full MXU contraction depth; padded channels contribute
    exactly 0 to the scores), fuse [theta|phi|g], cast to bf16."""
    w_theta = jnp.asarray(w_theta, jnp.float32)
    w_phi = jnp.asarray(w_phi, jnp.float32)
    w_g = jnp.asarray(w_g, jnp.float32)
    w_o = jnp.asarray(w_o, jnp.float32)

    c8 = w_theta.shape[0]
    c8p = ((c8 + 127) // 128) * 128
    pad = ((0, 0), (0, c8p - c8))
    w_qkv = jnp.concatenate(
        [jnp.pad(w_theta.T, pad), jnp.pad(w_phi.T, pad), w_g.T],
        axis=1).astype(jnp.bfloat16)                    # (C, 2*C8p + C2)
    w_ot = w_o.T.astype(jnp.bfloat16)                   # (C2, C)
    return w_qkv, w_ot


# --------------------------------------------------------------------------- #
# AttentionBlock.forward (NCHW in, NCHW bf16 out).
# --------------------------------------------------------------------------- #
def attention_block(x_nchw, w_qkv, w_ot, gamma, *, tq=None, tc=None):
    B, C, H, W = x_nchw.shape
    assert H % 2 == 0 and W % 2 == 0 and C % 8 == 0
    H2, W2 = H // 2, W // 2
    HW, HW4 = H * W, (H * W) // 4
    C2, Co = w_ot.shape
    assert Co == C and w_qkv.shape[0] == C
    Ctot = w_qkv.shape[1]
    C8p = (Ctot - C2) // 2

    tc = _pick_pool_chunk(HW4) if tc is None else tc
    tq = _pick_query_tile(HW) if tq is None else tq
    assert HW4 % tc == 0 and HW % tq == 0

    # bf16 BEFORE the layout transpose: the relayout is a full-tensor HBM round
    # trip; doing it in f32 would double its bandwidth.
    xb = x_nchw.astype(jnp.bfloat16)
    # Rows permuted to (dh, dw, h2, w2): 2x2 pool candidates = 4 row blocks.
    xp = jnp.transpose(xb.reshape(B, C, H2, 2, W2, 2),
                       (0, 3, 5, 2, 4, 1)).reshape(B, HW, C)
    xp4 = xp.reshape(B, 4, HW4, C)          # free reshape of the same buffer

    gamma_arr = jnp.reshape(jnp.asarray(gamma, jnp.float32), (1,))

    # ---- kernel 1: fused QKV projection + max-pool (chunk-pipelined) --------
    k1_flops = 2 * B * HW * C * Ctot
    k1_bytes = 2 * (B * HW * C + C * Ctot
                    + B * (HW * C8p + C8p * HW4 + HW4 * C2))
    k1_vmem = _vmem_limit(
        2 * 2 * (4 * tc * C + 4 * tc * C8p + C8p * tc + tc * C2 + C * Ctot)
        + 4 * 2 * tc * Ctot)

    theta, phiT, g = pl.pallas_call(
        _proj_pool_kernel,
        out_shape=(jax.ShapeDtypeStruct((B, 4, HW4, C8p), jnp.bfloat16),
                   jax.ShapeDtypeStruct((B, C8p, HW4), jnp.bfloat16),
                   jax.ShapeDtypeStruct((B, HW4, C2), jnp.bfloat16)),
        grid=(B, HW4 // tc),
        in_specs=[
            pl.BlockSpec((1, 4, tc, C), lambda b, j: (b, 0, j, 0)),   # x chunk
            pl.BlockSpec((C, Ctot), lambda b, j: (0, 0)),             # fused W
            # TODO(synk): pipeline_mode=pl.Buffered(1) on the weight specs would
            # drop the duplicate weight buffer (v7x headroom); left at the
            # default double-buffering for compile safety.
        ],
        out_specs=(pl.BlockSpec((1, 4, tc, C8p), lambda b, j: (b, 0, j, 0)),
                   pl.BlockSpec((1, C8p, tc), lambda b, j: (b, 0, j)),
                   pl.BlockSpec((1, tc, C2), lambda b, j: (b, j, 0))),
        compiler_params=pltpu.CompilerParams(
            dimension_semantics=("parallel", "parallel"),
            vmem_limit_bytes=k1_vmem),
        cost_estimate=pl.CostEstimate(flops=k1_flops, transcendentals=0,
                                      bytes_accessed=k1_bytes),
    )(xp4, w_qkv)

    # ---- kernel 2: scores -> softmax -> attention -> output conv ------------
    k2_flops = 2 * B * HW * HW4 * (C8p + C2) + 2 * B * HW * C2 * C
    k2_trans = B * HW * HW4
    k2_bytes = 2 * (2 * B * HW * C + B * HW * C8p + B * C8p * HW4
                    + B * HW4 * C2 + C2 * C)
    k2_vmem = _vmem_limit(
        2 * 2 * (2 * tq * C + tq * C8p + C8p * HW4 + HW4 * C2 + C2 * C)
        + 4 * (3 * tq * HW4 + tq * (C2 + C)))

    out_perm = pl.pallas_call(
        _attention_kernel,
        out_shape=jax.ShapeDtypeStruct((B, HW, C), jnp.bfloat16),
        grid=(B, HW // tq),
        in_specs=[
            pl.BlockSpec(memory_space=pltpu.MemorySpace.SMEM),       # gamma
            pl.BlockSpec((1, tq, C), lambda b, q: (b, q, 0)),        # x tile
            pl.BlockSpec((1, tq, C8p), lambda b, q: (b, q, 0)),      # theta tile
            pl.BlockSpec((1, C8p, HW4), lambda b, q: (b, 0, 0)),     # phi^T full
            pl.BlockSpec((1, HW4, C2), lambda b, q: (b, 0, 0)),      # g full
            pl.BlockSpec((C2, C), lambda b, q: (0, 0)),              # o weight
        ],
        out_specs=pl.BlockSpec((1, tq, C), lambda b, q: (b, q, 0)),
        compiler_params=pltpu.CompilerParams(
            dimension_semantics=("parallel", "parallel"),
            vmem_limit_bytes=k2_vmem),
        cost_estimate=pl.CostEstimate(flops=k2_flops, transcendentals=k2_trans,
                                      bytes_accessed=k2_bytes),
    )(gamma_arr, xp, theta.reshape(B, HW, C8p), phiT, g, w_ot)

    # Invert the row permutation and return to NCHW (kept in bf16).
    out = out_perm.reshape(B, 2, 2, H2, W2, C)
    out = jnp.transpose(out, (0, 5, 3, 1, 4, 2)).reshape(B, C, H, W)
    return out


# --------------------------------------------------------------------------- #
# Pure-JAX f32 mirror of the PyTorch forward (NCHW), for verification.
# --------------------------------------------------------------------------- #
def reference(x, w_theta, w_phi, w_g, w_o, gamma):
    B, C, H, W = x.shape
    HW = H * W
    conv = lambda v, w: jnp.einsum('oc,bchw->bohw', w, v)
    theta = conv(x, w_theta)
    phi = conv(x, w_phi)
    g = conv(x, w_g)
    pool = lambda v: jnp.max(
        v.reshape(v.shape[0], v.shape[1], H // 2, 2, W // 2, 2), axis=(3, 5))
    theta = theta.reshape(B, C // 8, HW)
    phi = pool(phi).reshape(B, C // 8, HW // 4)
    g = pool(g).reshape(B, C // 2, HW // 4)
    s = jnp.einsum('bci,bcj->bij', theta, phi)
    beta = jax.nn.softmax(s, axis=-1)
    o = jnp.einsum('bcj,bij->bci', g, beta).reshape(B, C // 2, H, W)
    o = conv(o, w_o)
    return gamma * o + x


if __name__ == "__main__":
    # Small shapes consistent with AttentionBlock (C multiple of 8, H/W even).
    # C=128 keeps output stores lane-dense; H=W=32 -> HW=1024 gives 4 query
    # tiles at the default tq=256, exercising the multi-tile grid path.
    B, C, H, W = 2, 128, 32, 32
    key = jax.random.PRNGKey(0)
    kx, kt, kp, kg, ko = jax.random.split(key, 5)

    x = jax.random.normal(kx, (B, C, H, W), jnp.float32)

    def spectral_norm(w):
        # eval-mode equivalent of nn.utils.spectral_norm: divide by the top
        # singular value (exact SVD instead of the power-iteration estimate).
        return w / jnp.linalg.svd(w, compute_uv=False)[0]

    # Conv2d(k=1, bias=False) weights in PyTorch layout (C_out, C_in).
    w_theta = spectral_norm(0.1 * jax.random.normal(kt, (C // 8, C), jnp.float32))
    w_phi = spectral_norm(0.1 * jax.random.normal(kp, (C // 8, C), jnp.float32))
    w_g = spectral_norm(0.1 * jax.random.normal(kg, (C // 2, C), jnp.float32))
    w_o = spectral_norm(0.1 * jax.random.normal(ko, (C, C // 2), jnp.float32))

    # __init__ sets gamma = 0.0; use a nonzero value so the attention path
    # actually contributes (gamma=0 would trivially return x).
    gamma = 0.5

    w_qkv, w_ot = prepare_attention_params(w_theta, w_phi, w_g, w_o)

    out = attention_block(x, w_qkv, w_ot, gamma)
    out = jax.block_until_ready(out)

    ref = reference(x, w_theta, w_phi, w_g, w_o, gamma)
    # bf16 input/output, bf16 MXU operands and the approx reciprocal need
    # looser tolerances than a pure-f32 comparison (inference-grade numerics).
    np.testing.assert_allclose(np.asarray(out.astype(jnp.float32)),
                               np.asarray(ref), rtol=5e-2, atol=5e-2)
    print("KERNEL_OK")
</pallas_src>

<mosaic_0001>
module attributes {stable_mosaic.version = 11 : i64} {
  func.func @_proj_pool_kernel(%arg0: i32, %arg1: i32, %arg2: memref<1x4x256x128xbf16, #tpu.memory_space<vmem>>, %arg3: memref<128x320xbf16, #tpu.memory_space<vmem>>, %arg4: memref<1x4x256x128xbf16, #tpu.memory_space<vmem>>, %arg5: memref<1x128x256xbf16, #tpu.memory_space<vmem>>, %arg6: memref<1x256x64xbf16, #tpu.memory_space<vmem>>) attributes {dimension_semantics = [#tpu.dimension_semantics<parallel>, #tpu.dimension_semantics<parallel>], iteration_bounds = array<i64: 2, 1>, scalar_prefetch = 0 : i64, scratch_operands = 0 : i64, tpu.core_type = #tpu.core_type<tc>, window_params = [{transform_indices = @transform_0, window_bounds = array<i64: 1, 4, 256, 128>}, {pipeline_mode = #tpu.pipeline_mode<synchronous>, transform_indices = @transform_1, window_bounds = array<i64: 128, 320>}, {transform_indices = @transform_2, window_bounds = array<i64: 1, 4, 256, 128>}, {transform_indices = @transform_3, window_bounds = array<i64: 1, 128, 256>}, {transform_indices = @transform_4, window_bounds = array<i64: 1, 256, 64>}]} {
    %c0 = arith.constant 0 : index
    %c0_0 = arith.constant 0 : index
    %c0_1 = arith.constant 0 : index
    %c0_2 = arith.constant 0 : index
    %0 = vector.load %arg2[%c0, %c0_0, %c0_1, %c0_2] : memref<1x4x256x128xbf16, #tpu.memory_space<vmem>>, vector<1x1x256x128xbf16>
    %1 = vector.shape_cast %0 : vector<1x1x256x128xbf16> to vector<256x128xbf16>
    %c0_3 = arith.constant 0 : index
    %c0_4 = arith.constant 0 : index
    %2 = vector.load %arg3[%c0_3, %c0_4] : memref<128x320xbf16, #tpu.memory_space<vmem>>, vector<128x320xbf16>
    %cst = arith.constant dense<0.000000e+00> : vector<256x320xf32>
    %3 = tpu.matmul %1, %2, %cst {dimension_numbers = #tpu.dot_dimension_numbers<[1], [0], [0], [1], [0, 0, 1, 1], [], []>} : vector<256x128xbf16>, vector<128x320xbf16>, vector<256x320xf32> -> vector<256x320xf32>
    %4 = vector.extract_strided_slice %3 {offsets = [0, 0], sizes = [256, 128], strides = [1, 1]} : vector<256x320xf32> to vector<256x128xf32>
    %5 = arith.truncf %4 : vector<256x128xf32> to vector<256x128xbf16>
    %c0_5 = arith.constant 0 : index
    %c0_6 = arith.constant 0 : index
    %c0_7 = arith.constant 0 : index
    %c0_8 = arith.constant 0 : index
    %6 = vector.load %arg4[%c0_5, %c0_6, %c0_7, %c0_8] : memref<1x4x256x128xbf16, #tpu.memory_space<vmem>>, vector<1x1x256x128xbf16>
    %7 = vector.shape_cast %6 : vector<1x1x256x128xbf16> to vector<256x128xbf16>
    %8 = vector.shape_cast %5 : vector<256x128xbf16> to vector<1x1x256x128xbf16>
    tpu.vector_store %arg4[%c0_5, %c0_6, %c0_7, %c0_8], %8 {strides = array<i32>} : memref<1x4x256x128xbf16, #tpu.memory_space<vmem>>, vector<1x1x256x128xbf16>,
    %9 = vector.extract_strided_slice %3 {offsets = [0, 128], sizes = [256, 192], strides = [1, 1]} : vector<256x320xf32> to vector<256x192xf32>
    %c0_9 = arith.constant 0 : index
    %c1 = arith.constant 1 : index
    %c0_10 = arith.constant 0 : index
    %c0_11 = arith.constant 0 : index
    %10 = vector.load %arg2[%c0_9, %c1, %c0_10, %c0_11] : memref<1x4x256x128xbf16, #tpu.memory_space<vmem>>, vector<1x1x256x128xbf16>
    %11 = vector.shape_cast %10 : vector<1x1x256x128xbf16> to vector<256x128xbf16>
    %c0_12 = arith.constant 0 : index
    %c0_13 = arith.constant 0 : index
    %12 = vector.load %arg3[%c0_12, %c0_13] : memref<128x320xbf16, #tpu.memory_space<vmem>>, vector<128x320xbf16>
    %cst_14 = arith.constant dense<0.000000e+00> : vector<256x320xf32>
    %13 = tpu.matmul %11, %12, %cst_14 {dimension_numbers = #tpu.dot_dimension_numbers<[1], [0], [0], [1], [0, 0, 1, 1], [], []>} : vector<256x128xbf16>, vector<128x320xbf16>, vector<256x320xf32> -> vector<256x320xf32>
    %14 = vector.extract_strided_slice %13 {offsets = [0, 0], sizes = [256, 128], strides = [1, 1]} : vector<256x320xf32> to vector<256x128xf32>
    %15 = arith.truncf %14 : vector<256x128xf32> to vector<256x128xbf16>
    %c0_15 = arith.constant 0 : index
    %c1_16 = arith.constant 1 : index
    %c0_17 = arith.constant 0 : index
    %c0_18 = arith.constant 0 : index
    %16 = vector.load %arg4[%c0_15, %c1_16, %c0_17, %c0_18] : memref<1x4x256x128xbf16, #tpu.memory_space<vmem>>, vector<1x1x256x128xbf16>
    %17 = vector.shape_cast %16 : vector<1x1x256x128xbf16> to vector<256x128xbf16>
    %18 = vector.shape_cast %15 : vector<256x128xbf16> to vector<1x1x256x128xbf16>
    tpu.vector_store %arg4[%c0_15, %c1_16, %c0_17, %c0_18], %18 {strides = array<i32>} : memref<1x4x256x128xbf16, #tpu.memory_space<vmem>>, vector<1x1x256x128xbf16>,
    %19 = vector.extract_strided_slice %13 {offsets = [0, 128], sizes = [256, 192], strides = [1, 1]} : vector<256x320xf32> to vector<256x192xf32>
    %20 = arith.maximumf %9, %19 : vector<256x192xf32>
    %c0_19 = arith.constant 0 : index
    %c2 = arith.constant 2 : index
    %c0_20 = arith.constant 0 : index
    %c0_21 = arith.constant 0 : index
    %21 = vector.load %arg2[%c0_19, %c2, %c0_20, %c0_21] : memref<1x4x256x128xbf16, #tpu.memory_space<vmem>>, vector<1x1x256x128xbf16>
    %22 = vector.shape_cast %21 : vector<1x1x256x128xbf16> to vector<256x128xbf16>
    %c0_22 = arith.constant 0 : index
    %c0_23 = arith.constant 0 : index
    %23 = vector.load %arg3[%c0_22, %c0_23] : memref<128x320xbf16, #tpu.memory_space<vmem>>, vector<128x320xbf16>
    %cst_24 = arith.constant dense<0.000000e+00> : vector<256x320xf32>
    %24 = tpu.matmul %22, %23, %cst_24 {dimension_numbers = #tpu.dot_dimension_numbers<[1], [0], [0], [1], [0, 0, 1, 1], [], []>} : vector<256x128xbf16>, vector<128x320xbf16>, vector<256x320xf32> -> vector<256x320xf32>
    %25 = vector.extract_strided_slice %24 {offsets = [0, 0], sizes = [256, 128], strides = [1, 1]} : vector<256x320xf32> to vector<256x128xf32>
    %26 = arith.truncf %25 : vector<256x128xf32> to vector<256x128xbf16>
    %c0_25 = arith.constant 0 : index
    %c2_26 = arith.constant 2 : index
    %c0_27 = arith.constant 0 : index
    %c0_28 = arith.constant 0 : index
    %27 = vector.load %arg4[%c0_25, %c2_26, %c0_27, %c0_28] : memref<1x4x256x128xbf16, #tpu.memory_space<vmem>>, vector<1x1x256x128xbf16>
    %28 = vector.shape_cast %27 : vector<1x1x256x128xbf16> to vector<256x128xbf16>
    %29 = vector.shape_cast %26 : vector<256x128xbf16> to vector<1x1x256x128xbf16>
    tpu.vector_store %arg4[%c0_25, %c2_26, %c0_27, %c0_28], %29 {strides = array<i32>} : memref<1x4x256x128xbf16, #tpu.memory_space<vmem>>, vector<1x1x256x128xbf16>,
    %30 = vector.extract_strided_slice %24 {offsets = [0, 128], sizes = [256, 192], strides = [1, 1]} : vector<256x320xf32> to vector<256x192xf32>
    %31 = arith.maximumf %20, %30 : vector<256x192xf32>
    %c0_29 = arith.constant 0 : index
    %c3 = arith.constant 3 : index
    %c0_30 = arith.constant 0 : index
    %c0_31 = arith.constant 0 : index
    %32 = vector.load %arg2[%c0_29, %c3, %c0_30, %c0_31] : memref<1x4x256x128xbf16, #tpu.memory_space<vmem>>, vector<1x1x256x128xbf16>
    %33 = vector.shape_cast %32 : vector<1x1x256x128xbf16> to vector<256x128xbf16>
    %c0_32 = arith.constant 0 : index
    %c0_33 = arith.constant 0 : index
    %34 = vector.load %arg3[%c0_32, %c0_33] : memref<128x320xbf16, #tpu.memory_space<vmem>>, vector<128x320xbf16>
    %cst_34 = arith.constant dense<0.000000e+00> : vector<256x320xf32>
    %35 = tpu.matmul %33, %34, %cst_34 {dimension_numbers = #tpu.dot_dimension_numbers<[1], [0], [0], [1], [0, 0, 1, 1], [], []>} : vector<256x128xbf16>, vector<128x320xbf16>, vector<256x320xf32> -> vector<256x320xf32>
    %36 = vector.extract_strided_slice %35 {offsets = [0, 0], sizes = [256, 128], strides = [1, 1]} : vector<256x320xf32> to vector<256x128xf32>
    %37 = arith.truncf %36 : vector<256x128xf32> to vector<256x128xbf16>
    %c0_35 = arith.constant 0 : index
    %c3_36 = arith.constant 3 : index
    %c0_37 = arith.constant 0 : index
    %c0_38 = arith.constant 0 : index
    %38 = vector.load %arg4[%c0_35, %c3_36, %c0_37, %c0_38] : memref<1x4x256x128xbf16, #tpu.memory_space<vmem>>, vector<1x1x256x128xbf16>
    %39 = vector.shape_cast %38 : vector<1x1x256x128xbf16> to vector<256x128xbf16>
    %40 = vector.shape_cast %37 : vector<256x128xbf16> to vector<1x1x256x128xbf16>
    tpu.vector_store %arg4[%c0_35, %c3_36, %c0_37, %c0_38], %40 {strides = array<i32>} : memref<1x4x256x128xbf16, #tpu.memory_space<vmem>>, vector<1x1x256x128xbf16>,
    %41 = vector.extract_strided_slice %35 {offsets = [0, 128], sizes = [256, 192], strides = [1, 1]} : vector<256x320xf32> to vector<256x192xf32>
    %42 = arith.maximumf %31, %41 : vector<256x192xf32>
    %43 = vector.extract_strided_slice %42 {offsets = [0, 0], sizes = [256, 128], strides = [1, 1]} : vector<256x192xf32> to vector<256x128xf32>
    %44 = tpu.transpose %43, [1, 0] : vector<256x128xf32> -> vector<128x256xf32>
    %45 = arith.truncf %44 : vector<128x256xf32> to vector<128x256xbf16>
    %c0_39 = arith.constant 0 : index
    %c0_40 = arith.constant 0 : index
    %c0_41 = arith.constant 0 : index
    %46 = vector.load %arg5[%c0_39, %c0_40, %c0_41] : memref<1x128x256xbf16, #tpu.memory_space<vmem>>, vector<1x128x256xbf16>
    %47 = vector.shape_cast %46 : vector<1x128x256xbf16> to vector<128x256xbf16>
    %48 = vector.shape_cast %45 : vector<128x256xbf16> to vector<1x128x256xbf16>
    tpu.vector_store %arg5[%c0_39, %c0_40, %c0_41], %48 {strides = array<i32>} : memref<1x128x256xbf16, #tpu.memory_space<vmem>>, vector<1x128x256xbf16>,
    %49 = vector.extract_strided_slice %42 {offsets = [0, 128], sizes = [256, 64], strides = [1, 1]} : vector<256x192xf32> to vector<256x64xf32>
    %50 = arith.truncf %49 : vector<256x64xf32> to vector<256x64xbf16>
    %c0_42 = arith.constant 0 : index
    %c0_43 = arith.constant 0 : index
    %c0_44 = arith.constant 0 : index
    %51 = vector.load %arg6[%c0_42, %c0_43, %c0_44] : memref<1x256x64xbf16, #tpu.memory_space<vmem>>, vector<1x256x64xbf16>
    %52 = vector.shape_cast %51 : vector<1x256x64xbf16> to vector<256x64xbf16>
    %53 = vector.shape_cast %50 : vector<256x64xbf16> to vector<1x256x64xbf16>
    tpu.vector_store %arg6[%c0_42, %c0_43, %c0_44], %53 {strides = array<i32>} : memref<1x256x64xbf16, #tpu.memory_space<vmem>>, vector<1x256x64xbf16>,
    return
  }
  func.func @transform_0(%arg0: i32, %arg1: i32) -> (i32, i32, i32, i32) {
    %c0_i32 = arith.constant 0 : i32
    %c0_i32_0 = arith.constant 0 : i32
    %c0_i32_1 = arith.constant 0 : i32
    return %arg0, %c0_i32, %arg1, %c0_i32_0 : i32, i32, i32, i32
  }
  func.func @transform_1(%arg0: i32, %arg1: i32) -> (i32, i32) {
    %c0_i32 = arith.constant 0 : i32
    %c0_i32_0 = arith.constant 0 : i32
    %c0_i32_1 = arith.constant 0 : i32
    return %c0_i32, %c0_i32_0 : i32, i32
  }
  func.func @transform_2(%arg0: i32, %arg1: i32) -> (i32, i32, i32, i32) {
    %c0_i32 = arith.constant 0 : i32
    %c0_i32_0 = arith.constant 0 : i32
    %c0_i32_1 = arith.constant 0 : i32
    return %arg0, %c0_i32, %arg1, %c0_i32_0 : i32, i32, i32, i32
  }
  func.func @transform_3(%arg0: i32, %arg1: i32) -> (i32, i32, i32) {
    %c0_i32 = arith.constant 0 : i32
    %c0_i32_0 = arith.constant 0 : i32
    return %arg0, %c0_i32, %arg1 : i32, i32, i32
  }
  func.func @transform_4(%arg0: i32, %arg1: i32) -> (i32, i32, i32) {
    %c0_i32 = arith.constant 0 : i32
    %c0_i32_0 = arith.constant 0 : i32
    return %arg0, %arg1, %c0_i32 : i32, i32, i32
  }
}

</mosaic_0001>

<llo_original>
// kernel: tpu_custom_call.1
$region0: #{tpu_custom_call.1}
  #allocation0 [shape = 'u32[]', space=smem, size = 0x4, offset = 0x4, fixed_abs, tag = 'smem constant byte address 0x4 - core index']
  #allocation1 [shape = 'u32[144,128]{1,0:T(1,128)}', space=vmem, size = 0x12000, scoped, tag = 'internal scratch']
  %s0 = inlined_call_operand.hbm [shape: bf16[2,4,256,128], index: 0, kind: input, shape index: {}]
  %s1 = inlined_call_operand.vmem [shape: bf16[128,320], index: 1, kind: input, shape index: {}]
  %s2 = inlined_call_operand.hbm [shape: bf16[2,4,256,128], index: 2, kind: output, shape index: {0}]
  %s3 = inlined_call_operand.hbm [shape: bf16[2,128,256], index: 3, kind: output, shape index: {1}]
  %s4 = inlined_call_operand.vmem [shape: bf16[2,256,64], index: 4, kind: output, shape index: {2}]
  %5 = xla_tuple %s2, %s3, %s4
  %s6 = sld [smem:[#allocation0]]
  $region61: #{tpu_custom_call.1} parent=0
    _
  %s8 = ssub.s32 1, %s6
  %s9 = scalar_select 0, %s8, %s6
  $region1: #{tpu_custom_call.1} parent=0
    #allocation2 [shape = 'u8[524288]{0}', space=vmem, size = 0x80000, scoped, tag = 'input window, operand 0']
    #allocation3 [shape = 's32[2]{0}', space=sflag, size = 0x8, scoped, tag = 'scoped memory for tpu_custom_call.1']
    #allocation4 [shape = 's32[2]{0}', space=sflag, size = 0x8, scoped, tag = 'scoped memory for tpu_custom_call.1']
    #allocation5 [shape = 'u8[524288]{0}', space=vmem, size = 0x80000, scoped, tag = 'output window, operand 0']
    #allocation6 [shape = 'u8[131072]{0}', space=vmem, size = 0x20000, scoped, tag = 'output window, operand 1']
    #allocation7 [shape = 's32[2]{0}', space=sflag, size = 0x8, scoped, tag = 'scoped memory for tpu_custom_call.1']
    %10 = vsyncpa [#allocation3], 0
    %s11 = scalar_lea.sflag [#allocation3], 1
    %12 = vsyncpa %s11, 0
    %13 = vsyncpa [#allocation4], 0
    %s14 = scalar_lea.sflag [#allocation4], 1
    %15 = vsyncpa %s14, 0
    %16 = vsyncpa [#allocation7], 0
    %s17 = scalar_lea.sflag [#allocation7], 1
    %18 = vsyncpa %s17, 0
    loop: start=0, step=1, limit=4
    $region2: #{tpu_custom_call.1} parent=1 // loop_pre_header
      _
    $region3: #{tpu_custom_call.1} parent=1 // loop_header
      %s20 = sphi 0, %s24
      %p21 = scmp.ge.s32.totalorder %s20, 4
      %s27 = sphi 0, %s39
      %s28 = sphi 0, %s35
      %s29 = sphi 0, %s27
      %s30 = sphi 0, %s28
      %s31 = sphi 0, %s29
      %s32 = sphi 0, %s30
      %s44 = sphi 0, %s46
      %s47 = sphi 0, %s44
      %s48 = sphi 0, %s47
      %s64 = sphi 0, %s48
      %s68 = sphi 0, %s68
      %s70 = sphi 0, %s68
      %s71 = sphi 0, %s70
      %s85 = sphi 0, %s71
      %s93 = sphi 0, %s95
      %s96 = sphi 0, %s93
      %s97 = sphi 0, %s96
      %s113 = sphi 0, %s97
      %s121 = sphi 0, %s123
      %s124 = sphi 0, %s121
      %s125 = sphi 0, %s124
      %s141 = sphi 0, %s125
      %s149 = sphi 0, %s151
      %s152 = sphi 0, %s149
      %s153 = sphi 0, %s152
      %s169 = sphi 0, %s153
    $region4: #{tpu_custom_call.1} parent=1 // loop_header_branch
      %23 = sbr.rel (%p21) target = $region8
    $region5: #{tpu_custom_call.1} parent=1 // loop_body
      %s25 = ssub.s32 %s20, 1
      %s26 = ssub.s32 %s20, 2
      %s33 = sadd.s32 1, %s28
      %p34 = scmp.ge.s32.totalorder %s33, 1
      %s35 = scalar_select %p34, 0, %s33
      %s36 = sadd.s32 1, %s27
      %s37 = scalar_select %p34, %s36, %s27
      %p38 = scmp.ge.s32.totalorder %s37, 2
      %s39 = scalar_select %p38, 0, %s37
      %s40 = ssub.s32 %s27, %s39
      %s41 = ssub.s32 %s28, %s35
      %s42 = sor.u32 %s40, %s41
      %p43 = scmp.eq.s32.totalorder %s42, 0
      %s45 = sadd.s32 %s44, 1
      %s46 = scalar_select %p43, %s44, %s45
      %p49 = pneg %p43
      %p50 = scmp.eq.s32.totalorder %s20, 1
      %p51 = por %p49, %p50
      %p52 = scmp.ne.s32.totalorder %s44, %s47
      %p53 = scmp.eq.s32.totalorder %s20, 0
      %p54 = por %p52, %p53
      %p55 = scmp.ne.s32.totalorder %s44, %s47
      %p56 = scmp.eq.s32.totalorder %s25, 1
      %p57 = por %p55, %p56
      %p58 = scmp.ne.s32.totalorder %s47, %s48
      %p59 = scmp.eq.s32.totalorder %s25, 0
      %p60 = por %p58, %p59
      %p61 = scmp.ne.s32.totalorder %s47, %s48
      %p62 = scmp.eq.s32.totalorder %s26, 1
      %p63 = por %p61, %p62
      %p65 = scmp.ne.s32.totalorder %s48, %s64
      %p66 = scmp.eq.s32.totalorder %s26, 0
      %p67 = por %p65, %p66
      %s69 = sadd.s32 %s68, 1
      %p72 = scmp.eq.s32.totalorder %s20, 1
      %p73 = scmp.ne.s32.totalorder %s68, %s70
      %p74 = scmp.eq.s32.totalorder %s20, 0
      %p75 = por %p73, %p74
      %p76 = scmp.ne.s32.totalorder %s68, %s70
      %p77 = scmp.eq.s32.totalorder %s25, 1
      %p78 = por %p76, %p77
      %p79 = scmp.ne.s32.totalorder %s70, %s71
      %p80 = scmp.eq.s32.totalorder %s25, 0
      %p81 = por %p79, %p80
      %p82 = scmp.ne.s32.totalorder %s70, %s71
      %p83 = scmp.eq.s32.totalorder %s26, 1
      %p84 = por %p82, %p83
      %p86 = scmp.ne.s32.totalorder %s71, %s85
      %p87 = scmp.eq.s32.totalorder %s26, 0
      %p88 = por %p86, %p87
      %s89 = ssub.s32 %s27, %s39
      %s90 = ssub.s32 %s28, %s35
      %s91 = sor.u32 %s89, %s90
      %p92 = scmp.eq.s32.totalorder %s91, 0
      %s94 = sadd.s32 %s93, 1
      %s95 = scalar_select %p92, %s93, %s94
      %p98 = pneg %p92
      %p99 = scmp.eq.s32.totalorder %s20, 1
      %p100 = por %p98, %p99
      %p101 = scmp.ne.s32.totalorder %s93, %s96
      %p102 = scmp.eq.s32.totalorder %s20, 0
      %p103 = por %p101, %p102
      %p104 = scmp.ne.s32.totalorder %s93, %s96
      %p105 = scmp.eq.s32.totalorder %s25, 1
      %p106 = por %p104, %p105
      %p107 = scmp.ne.s32.totalorder %s96, %s97
      %p108 = scmp.eq.s32.totalorder %s25, 0
      %p109 = por %p107, %p108
      %p110 = scmp.ne.s32.totalorder %s96, %s97
      %p111 = scmp.eq.s32.totalorder %s26, 1
      %p112 = por %p110, %p111
      %p114 = scmp.ne.s32.totalorder %s97, %s113
      %p115 = scmp.eq.s32.totalorder %s26, 0
      %p116 = por %p114, %p115
      %s117 = ssub.s32 %s27, %s39
      %s118 = ssub.s32 %s28, %s35
      %s119 = sor.u32 %s117, %s118
      %p120 = scmp.eq.s32.totalorder %s119, 0
      %s122 = sadd.s32 %s121, 1
      %s123 = scalar_select %p120, %s121, %s122
      %p126 = pneg %p120
      %p127 = scmp.eq.s32.totalorder %s20, 1
      %p128 = por %p126, %p127
      %p129 = scmp.ne.s32.totalorder %s121, %s124
      %p130 = scmp.eq.s32.totalorder %s20, 0
      %p131 = por %p129, %p130
      %p132 = scmp.ne.s32.totalorder %s121, %s124
      %p133 = scmp.eq.s32.totalorder %s25, 1
      %p134 = por %p132, %p133
      %p135 = scmp.ne.s32.totalorder %s124, %s125
      %p136 = scmp.eq.s32.totalorder %s25, 0
      %p137 = por %p135, %p136
      %p138 = scmp.ne.s32.totalorder %s124, %s125
      %p139 = scmp.eq.s32.totalorder %s26, 1
      %p140 = por %p138, %p139
      %p142 = scmp.ne.s32.totalorder %s125, %s141
      %p143 = scmp.eq.s32.totalorder %s26, 0
      %p144 = por %p142, %p143
      %s145 = ssub.s32 %s27, %s39
      %s146 = ssub.s32 %s28, %s35
      %s147 = sor.u32 %s145, %s146
      %p148 = scmp.eq.s32.totalorder %s147, 0
      %s150 = sadd.s32 %s149, 1
      %s151 = scalar_select %p148, %s149, %s150
      %p154 = pneg %p148
      %p155 = scmp.eq.s32.totalorder %s20, 1
      %p156 = por %p154, %p155
      %p157 = scmp.ne.s32.totalorder %s149, %s152
      %p158 = scmp.eq.s32.totalorder %s20, 0
      %p159 = por %p157, %p158
      %p160 = scmp.ne.s32.totalorder %s149, %s152
      %p161 = scmp.eq.s32.totalorder %s25, 1
      %p162 = por %p160, %p161
      %p163 = scmp.ne.s32.totalorder %s152, %s153
      %p164 = scmp.eq.s32.totalorder %s25, 0
      %p165 = por %p163, %p164
      %p166 = scmp.ne.s32.totalorder %s152, %s153
      %p167 = scmp.eq.s32.totalorder %s26, 1
      %p168 = por %p166, %p167
      %p170 = scmp.ne.s32.totalorder %s153, %s169
      %p171 = scmp.eq.s32.totalorder %s26, 0
      %p172 = por %p170, %p171
      %p173 = scmp.le.s32.totalorder 1, %s20
      %p174 = scmp.lt.s32.totalorder %s20, 3
      %p175 = pnand %p173, %p174
      %p176 = pneg %p175
      // Predicated region
      $region9: #{tpu_custom_call.1} parent=5 // pred_check
        _
      $region10: #{tpu_custom_call.1} parent=5 // pred_check_branch
        %178 = sbr.rel (%p175) target = $region12
      $region11: #{tpu_custom_call.1} parent=5 // pred_region
        %s179 = ssub.s32 %s20, 1
        // Predicated region
        $region13: #{tpu_custom_call.1} parent=11 // pred_check
          %p180 = pneg %p81
        $region14: #{tpu_custom_call.1} parent=11 // pred_check_branch
          %182 = sbr.rel (%p180) target = $region16
        $region15: #{tpu_custom_call.1} parent=11 // pred_region
          _
        $region16: #{tpu_custom_call.1} parent=11 // pred_fallthru
          _
      $region12: #{tpu_custom_call.1} parent=5 // pred_fallthru
        _
      %p183 = scmp.lt.s32.totalorder %s20, 2
      // Predicated region
      $region17: #{tpu_custom_call.1} parent=5 // pred_check
        %p184 = pneg %p183
      $region18: #{tpu_custom_call.1} parent=5 // pred_check_branch
        %186 = sbr.rel (%p184) target = $region20
      $region19: #{tpu_custom_call.1} parent=5 // pred_region
        // Predicated region
        $region21: #{tpu_custom_call.1} parent=19 // pred_check
          %p187 = pneg %p54
        $region22: #{tpu_custom_call.1} parent=19 // pred_check_branch
          %189 = sbr.rel (%p187) target = $region24
        $region23: #{tpu_custom_call.1} parent=19 // pred_region
          %s190 = sand.u32 %s44, 1
          %s191 = scalar_lea.sflag [#allocation3], %s190
          %s192 = sand.u32 %s44, 1
          %s193 = smul.addr %s192, 512
          %s194 = scalar_lea.vmem [#allocation2], %s193
          %s195 = smul.u32 32, %s28
          %s197 = ssub.s32 8192, 8192
          %198 = vsyncadd %s191, %s197
          %s199 = smul.addr %s27, 128
          %s200 = sadd.s32 %s195, %s199
          %s201 = smul.addr %s200, 64
          %s202 = scalar_lea.hbm %s0, %s201
          %s203 = sshll.u32 %s194, 4
          %s204 = int_to_ptr.vmem [resolvable:$true] %s203
          %209 = dma.hbm_to_vmem [thread:$0]  %s202, 8192, %s204, %s191, 64, 64, 4
        $region24: #{tpu_custom_call.1} parent=19 // pred_fallthru
          _
      $region20: #{tpu_custom_call.1} parent=5 // pred_fallthru
        _
      %p210 = scmp.le.s32.totalorder 1, %s20
      %p211 = scmp.lt.s32.totalorder %s20, 3
      %p212 = pnand %p210, %p211
      %p213 = pneg %p212
      // Predicated region
      $region25: #{tpu_custom_call.1} parent=5 // pred_check
        _
      $region26: #{tpu_custom_call.1} parent=5 // pred_check_branch
        %215 = sbr.rel (%p212) target = $region28
      $region27: #{tpu_custom_call.1} parent=5 // pred_region
        %s216 = ssub.s32 %s20, 1
        %s217 = sand.u32 %s47, 1
        %s218 = scalar_lea.sflag [#allocation3], %s217
        %s219 = sand.u32 %s47, 1
        %s220 = smul.addr %s219, 512
        %s221 = scalar_lea.vmem [#allocation2], %s220
        // Predicated region
        $region29: #{tpu_custom_call.1} parent=27 // pred_check
          %p222 = pneg %p60
        $region30: #{tpu_custom_call.1} parent=27 // pred_check_branch
          %224 = sbr.rel (%p222) target = $region32
        $region31: #{tpu_custom_call.1} parent=27 // pred_region
          %225 = dma.done %s218, 8192
        $region32: #{tpu_custom_call.1} parent=27 // pred_fallthru
          _
        %s226 = sand.u32 %s47, 1
        %s227 = scalar_lea.sflag [#allocation3], %s226
        %s228 = sand.u32 %s47, 1
        %s229 = smul.addr %s228, 512
        %s230 = scalar_lea.vmem [#allocation2], %s229
        %p231 = pneg %p60
        %p232 = pneg %p57
        %p233 = pneg %p81
        %p234 = pneg %p78
        %p235 = pneg %p109
        %p236 = pneg %p106
        %s237 = sand.u32 %s96, 1
        %s238 = scalar_lea.sflag [#allocation4], %s237
        %s239 = sand.u32 %s96, 1
        %s240 = smul.addr %s239, 512
        %s241 = scalar_lea.vmem [#allocation5], %s240
        %p242 = pneg %p137
        %p243 = pneg %p134
        %s244 = sand.u32 %s124, 1
        %s245 = scalar_lea.sflag [#allocation7], %s244
        %s246 = sand.u32 %s124, 1
        %s247 = smul.addr %s246, 128
        %s248 = scalar_lea.vmem [#allocation6], %s247
        %p249 = pneg %p165
        %p250 = pneg %p162
        %s251 = smul.u32 32, %s30
        %p252 = scmp.lt.s32.totalorder %s29, 1
        %s253 = scalar_select %p252, %s29, 1
        %p254 = scmp.lt.s32.totalorder %s251, 31
        %s255 = scalar_select %p254, %s251, 31
        %s256 = smul.addr %s253, 32
        %s257 = sadd.s32 %s255, %s256
        %s258 = smul.addr %s257, 4
        %s259 = scalar_lea.vmem %s4, %s258
        %s260 = smul.u32 32, %s30
        %s261 = smul.u32 32, %s30
        %s262 = smul.u32 2, %s30
        %s263 = smul.u32 32, %s30
        %p264 = scmp.lt.s32.totalorder %s29, 1
        %s265 = scalar_select %p264, %s29, 1
        %p266 = scmp.lt.s32.totalorder %s263, 31
        %s267 = scalar_select %p266, %s263, 31
        %s268 = smul.addr %s265, 32
        %s269 = sadd.s32 %s267, %s268
        %s270 = smul.addr %s269, 4
        %s271 = scalar_lea.vmem %s4, %s270
        %s272 = smul.u32 32, %s30
        %v274 = vld [vmem:[%s221] sm:$0xf]
        %v275 = vld [vmem:[%s221 + $0x4] sm:$0xf]
        %v276 = vld [vmem:[%s221 + $0x8] sm:$0xf]
        %v277 = vld [vmem:[%s221 + $0xc] sm:$0xf]
        %v278 = vld [vmem:[%s221 + $0x10] sm:$0xf]
        %v279 = vld [vmem:[%s221 + $0x14] sm:$0xf]
        %v280 = vld [vmem:[%s221 + $0x18] sm:$0xf]
        %v281 = vld [vmem:[%s221 + $0x1c] sm:$0xf]
        %v282 = vld [vmem:[%s221 + $0x20] sm:$0xf]
        %v283 = vld [vmem:[%s221 + $0x24] sm:$0xf]
        %v284 = vld [vmem:[%s221 + $0x28] sm:$0xf]
        %v285 = vld [vmem:[%s221 + $0x2c] sm:$0xf]
        %v286 = vld [vmem:[%s221 + $0x30] sm:$0xf]
        %v287 = vld [vmem:[%s221 + $0x34] sm:$0xf]
        %v288 = vld [vmem:[%s221 + $0x38] sm:$0xf]
        %v289 = vld [vmem:[%s221 + $0x3c] sm:$0xf]
        %v290 = vld [vmem:[%s221 + $0x40] sm:$0xf]
        %v291 = vld [vmem:[%s221 + $0x44] sm:$0xf]
        %v292 = vld [vmem:[%s221 + $0x48] sm:$0xf]
        %v293 = vld [vmem:[%s221 + $0x4c] sm:$0xf]
        %v294 = vld [vmem:[%s221 + $0x50] sm:$0xf]
        %v295 = vld [vmem:[%s221 + $0x54] sm:$0xf]
        %v296 = vld [vmem:[%s221 + $0x58] sm:$0xf]
        %v297 = vld [vmem:[%s221 + $0x5c] sm:$0xf]
        %v298 = vld [vmem:[%s221 + $0x60] sm:$0xf]
        %v299 = vld [vmem:[%s221 + $0x64] sm:$0xf]
        %v300 = vld [vmem:[%s221 + $0x68] sm:$0xf]
        %v301 = vld [vmem:[%s221 + $0x6c] sm:$0xf]
        %v302 = vld [vmem:[%s221 + $0x70] sm:$0xf]
        %v303 = vld [vmem:[%s221 + $0x74] sm:$0xf]
        %v304 = vld [vmem:[%s221 + $0x78] sm:$0xf]
        %v305 = vld [vmem:[%s221 + $0x7c] sm:$0xf]
        %v306 = vld [vmem:[%s1] sm:$0xff]
        %v307 = vld [vmem:[%s1 + $0x8] sm:$0xf]
        %v308 = vld [vmem:[%s1 + $0xc] sm:$0xff]
        %v309 = vld [vmem:[%s1 + $0x14] sm:$0xf]
        %v310 = vld [vmem:[%s1 + $0x18] sm:$0xff]
        %v311 = vld [vmem:[%s1 + $0x20] sm:$0xf]
        %v312 = vld [vmem:[%s1 + $0x24] sm:$0xff]
        %v313 = vld [vmem:[%s1 + $0x2c] sm:$0xf]
        %v314 = vld [vmem:[%s1 + $0x30] sm:$0xff]
        %v315 = vld [vmem:[%s1 + $0x38] sm:$0xf]
        %v316 = vld [vmem:[%s1 + $0x3c] sm:$0xff]
        %v317 = vld [vmem:[%s1 + $0x44] sm:$0xf]
        %v318 = vld [vmem:[%s1 + $0x48] sm:$0xff]
        %v319 = vld [vmem:[%s1 + $0x50] sm:$0xf]
        %v320 = vld [vmem:[%s1 + $0x54] sm:$0xff]
        %v321 = vld [vmem:[%s1 + $0x5c] sm:$0xf]
        %v322 = vld [vmem:[%s1 + $0x60] sm:$0xff]
        %v323 = vld [vmem:[%s1 + $0x68] sm:$0xf]
        %v324 = vld [vmem:[%s1 + $0x6c] sm:$0xff]
        %v325 = vld [vmem:[%s1 + $0x74] sm:$0xf]
        %v326 = vld [vmem:[%s1 + $0x78] sm:$0xff]
        %v327 = vld [vmem:[%s1 + $0x80] sm:$0xf]
        %v328 = vld [vmem:[%s1 + $0x84] sm:$0xff]
        %v329 = vld [vmem:[%s1 + $0x8c] sm:$0xf]
        %v330 = vld [vmem:[%s1 + $0x90] sm:$0xff]
        %v331 = vld [vmem:[%s1 + $0x98] sm:$0xf]
        %v332 = vld [vmem:[%s1 + $0x9c] sm:$0xff]
        %v333 = vld [vmem:[%s1 + $0xa4] sm:$0xf]
        %v334 = vld [vmem:[%s1 + $0xa8] sm:$0xff]
        %v335 = vld [vmem:[%s1 + $0xb0] sm:$0xf]
        %v336 = vld [vmem:[%s1 + $0xb4] sm:$0xff]
        %v337 = vld [vmem:[%s1 + $0xbc] sm:$0xf]
        %v370 = vunpack.c.l.b16 %v274
        %v371 = vunpack.c.l.b16 %v275
        %v372 = vunpack.c.l.b16 %v276
        %v373 = vunpack.c.l.b16 %v277
        %v374 = vunpack.c.l.b16 %v278
        %v375 = vunpack.c.l.b16 %v279
        %v376 = vunpack.c.l.b16 %v280
        %v377 = vunpack.c.l.b16 %v281
        %v378 = vunpack.c.l.b16 %v282
        %v379 = vunpack.c.l.b16 %v283
        %v380 = vunpack.c.l.b16 %v284
        %v381 = vunpack.c.l.b16 %v285
        %v382 = vunpack.c.l.b16 %v286
        %v383 = vunpack.c.l.b16 %v287
        %v384 = vunpack.c.l.b16 %v288
        %v385 = vunpack.c.l.b16 %v289
        %v386 = vunpack.c.l.b16 %v290
        %v387 = vunpack.c.l.b16 %v291
        %v388 = vunpack.c.l.b16 %v292
        %v389 = vunpack.c.l.b16 %v293
        %v390 = vunpack.c.l.b16 %v294
        %v391 = vunpack.c.l.b16 %v295
        %v392 = vunpack.c.l.b16 %v296
        %v393 = vunpack.c.l.b16 %v297
        %v394 = vunpack.c.l.b16 %v298
        %v395 = vunpack.c.l.b16 %v299
        %v396 = vunpack.c.l.b16 %v300
        %v397 = vunpack.c.l.b16 %v301
        %v398 = vunpack.c.l.b16 %v302
        %v399 = vunpack.c.l.b16 %v303
        %v400 = vunpack.c.l.b16 %v304
        %v401 = vunpack.c.l.b16 %v305
        %v402 = vpack.c.b16 %v371, %v370
        %v403 = vpack.c.b16 %v373, %v372
        %v404 = vpack.c.b16 %v375, %v374
        %v405 = vpack.c.b16 %v377, %v376
        %v406 = vpack.c.b16 %v379, %v378
        %v407 = vpack.c.b16 %v381, %v380
        %v408 = vpack.c.b16 %v383, %v382
        %v409 = vpack.c.b16 %v385, %v384
        %v410 = vpack.c.b16 %v387, %v386
        %v411 = vpack.c.b16 %v389, %v388
        %v412 = vpack.c.b16 %v391, %v390
        %v413 = vpack.c.b16 %v393, %v392
        %v414 = vpack.c.b16 %v395, %v394
        %v415 = vpack.c.b16 %v397, %v396
        %v416 = vpack.c.b16 %v399, %v398
        %v417 = vpack.c.b16 %v401, %v400
        %v466 = vunpack.c.l.b16 %v306
        %v467 = vunpack.c.h.b16 %v306
        %v468 = vunpack.c.l.b16 %v307
        %v469 = vunpack.c.l.b16 %v308
        %v470 = vunpack.c.h.b16 %v308
        %v471 = vunpack.c.l.b16 %v309
        %v472 = vunpack.c.l.b16 %v310
        %v473 = vunpack.c.h.b16 %v310
        %v474 = vunpack.c.l.b16 %v311
        %v475 = vunpack.c.l.b16 %v312
        %v476 = vunpack.c.h.b16 %v312
        %v477 = vunpack.c.l.b16 %v313
        %v478 = vunpack.c.l.b16 %v314
        %v479 = vunpack.c.h.b16 %v314
        %v480 = vunpack.c.l.b16 %v315
        %v481 = vunpack.c.l.b16 %v316
        %v482 = vunpack.c.h.b16 %v316
        %v483 = vunpack.c.l.b16 %v317
        %v484 = vunpack.c.l.b16 %v318
        %v485 = vunpack.c.h.b16 %v318
        %v486 = vunpack.c.l.b16 %v319
        %v487 = vunpack.c.l.b16 %v320
        %v488 = vunpack.c.h.b16 %v320
        %v489 = vunpack.c.l.b16 %v321
        %v490 = vunpack.c.l.b16 %v322
        %v491 = vunpack.c.h.b16 %v322
        %v492 = vunpack.c.l.b16 %v323
        %v493 = vunpack.c.l.b16 %v324
        %v494 = vunpack.c.h.b16 %v324
        %v495 = vunpack.c.l.b16 %v325
        %v496 = vunpack.c.l.b16 %v326
        %v497 = vunpack.c.h.b16 %v326
        %v498 = vunpack.c.l.b16 %v327
        %v499 = vunpack.c.l.b16 %v328
        %v500 = vunpack.c.h.b16 %v328
        %v501 = vunpack.c.l.b16 %v329
        %v502 = vunpack.c.l.b16 %v330
        %v503 = vunpack.c.h.b16 %v330
        %v504 = vunpack.c.l.b16 %v331
        %v505 = vunpack.c.l.b16 %v332
        %v506 = vunpack.c.h.b16 %v332
        %v507 = vunpack.c.l.b16 %v333
        %v508 = vunpack.c.l.b16 %v334
        %v509 = vunpack.c.h.b16 %v334
        %v510 = vunpack.c.l.b16 %v335
        %v511 = vunpack.c.l.b16 %v336
        %v512 = vunpack.c.h.b16 %v336
        %v513 = vunpack.c.l.b16 %v337
        %v514 = vpack.c.b16 %v469, %v466
        %v515 = vpack.c.b16 %v470, %v467
        %v516 = vpack.c.b16 %v471, %v468
        %v517 = vpack.c.b16 %v475, %v472
        %v518 = vpack.c.b16 %v476, %v473
        %v519 = vpack.c.b16 %v477, %v474
        %v520 = vpack.c.b16 %v481, %v478
        %v521 = vpack.c.b16 %v482, %v479
        %v522 = vpack.c.b16 %v483, %v480
        %v523 = vpack.c.b16 %v487, %v484
        %v524 = vpack.c.b16 %v488, %v485
        %v525 = vpack.c.b16 %v489, %v486
        %v526 = vpack.c.b16 %v493, %v490
        %v527 = vpack.c.b16 %v494, %v491
        %v528 = vpack.c.b16 %v495, %v492
        %v529 = vpack.c.b16 %v499, %v496
        %v530 = vpack.c.b16 %v500, %v497
        %v531 = vpack.c.b16 %v501, %v498
        %v532 = vpack.c.b16 %v505, %v502
        %v533 = vpack.c.b16 %v506, %v503
        %v534 = vpack.c.b16 %v507, %v504
        %v535 = vpack.c.b16 %v511, %v508
        %v536 = vpack.c.b16 %v512, %v509
        %v537 = vpack.c.b16 %v513, %v510
        %562 = vmatprep.subr.bf16.mxu0 %v515
        %563 = vmatpush1.bf16.msra.mxu0 %v514
        %564 = vmatprep.subr.bf16.mxu0 %v518
        %565 = vmatpush1.bf16.msra.mxu0 %v517
        %566 = vmatprep.subr.bf16.mxu0 %v521
        %567 = vmatpush1.bf16.msra.mxu0 %v520
        %568 = vmatprep.subr.bf16.mxu0 %v524
        %569 = vmatpush1.bf16.msra.mxu0 %v523
        %570 = vmatprep.subr.bf16.mxu0 %v527
        %571 = vmatpush1.bf16.msra.mxu0 %v526
        %572 = vmatprep.subr.bf16.mxu0 %v530
        %573 = vmatpush1.bf16.msra.mxu0 %v529
        %574 = vmatprep.subr.bf16.mxu0 %v533
        %575 = vmatpush1.bf16.msra.mxu0 %v532
        %576 = vmatprep.subr.bf16.mxu0 %v536
        %577 = vmatpush1.bf16.msra.mxu0 %v535
        %578 = vmatprep.subr.bf16.mxu0 0
        %579 = vmatpush1.bf16.msra.mxu0 0
        %580 = vmatprep.subr.bf16.mxu0 0
        %581 = vmatpush1.bf16.msra.mxu0 0
        %582 = vmatprep.subr.bf16.mxu0 0
        %583 = vmatpush1.bf16.msra.mxu0 0
        %584 = vmatprep.subr.bf16.mxu0 0
        %585 = vmatpush1.bf16.msra.mxu0 0
        %586 = vmatprep.subr.bf16.mxu0 0
        %587 = vmatpush1.bf16.msra.mxu0 0
        %588 = vmatprep.subr.bf16.mxu0 0
        %589 = vmatpush1.bf16.msra.mxu0 0
        %590 = vmatprep.subr.bf16.mxu0 0
        %591 = vmatpush1.bf16.msra.mxu0 0
        %592 = vmatprep.subr.bf16.mxu0 0
        %593 = vmatpush1.bf16.msra.mxu0 0
        %594 = vmatprep.mubr.bf16.mxu0 0
        %595 = vmatmul.mubr.bf16.gmra.mrb[0].mxu0 %v402
        %v596 = vpop.f32.mrb[0].mxu0
        %v597 = vadd.f32 0.0, %v596
        %v598 = vpop.f32.mrb[0].mxu0
        %v599 = vadd.f32 0.0, %v598
        %v600 = vpop.f32.mrb[0].mxu0
        %v601 = vadd.f32 0.0, %v600
        %v602 = vpop.f32.mrb[0].mxu0
        %v603 = vadd.f32 0.0, %v602
        %604 = vmatprep.mubr.bf16.mxu0 0
        %605 = vmatmul.mubr.bf16.gmra.mrb[0].mxu0 %v403
        %v606 = vpop.f32.mrb[0].mxu0
        %v607 = vadd.f32 0.0, %v606
        %v608 = vpop.f32.mrb[0].mxu0
        %v609 = vadd.f32 0.0, %v608
        %v610 = vpop.f32.mrb[0].mxu0
        %v611 = vadd.f32 0.0, %v610
        %v612 = vpop.f32.mrb[0].mxu0
        %v613 = vadd.f32 0.0, %v612
        %614 = vmatprep.mubr.bf16.mxu0 0
        %615 = vmatmul.mubr.bf16.gmra.mrb[0].mxu0 %v404
        %v616 = vpop.f32.mrb[0].mxu0
        %v617 = vadd.f32 0.0, %v616
        %v618 = vpop.f32.mrb[0].mxu0
        %v619 = vadd.f32 0.0, %v618
        %v620 = vpop.f32.mrb[0].mxu0
        %v621 = vadd.f32 0.0, %v620
        %v622 = vpop.f32.mrb[0].mxu0
        %v623 = vadd.f32 0.0, %v622
        %624 = vmatprep.mubr.bf16.mxu0 0
        %625 = vmatmul.mubr.bf16.gmra.mrb[0].mxu0 %v405
        %v626 = vpop.f32.mrb[0].mxu0
        %v627 = vadd.f32 0.0, %v626
        %v628 = vpop.f32.mrb[0].mxu0
        %v629 = vadd.f32 0.0, %v628
        %v630 = vpop.f32.mrb[0].mxu0
        %v631 = vadd.f32 0.0, %v630
        %v632 = vpop.f32.mrb[0].mxu0
        %v633 = vadd.f32 0.0, %v632
        %634 = vmatprep.mubr.bf16.mxu0 0
        %635 = vmatmul.mubr.bf16.gmra.mrb[0].mxu0 %v406
        %v636 = vpop.f32.mrb[0].mxu0
        %v637 = vadd.f32 0.0, %v636
        %v638 = vpop.f32.mrb[0].mxu0
        %v639 = vadd.f32 0.0, %v638
        %v640 = vpop.f32.mrb[0].mxu0
        %v641 = vadd.f32 0.0, %v640
        %v642 = vpop.f32.mrb[0].mxu0
        %v643 = vadd.f32 0.0, %v642
        %644 = vmatprep.mubr.bf16.mxu0 0
        %645 = vmatmul.mubr.bf16.gmra.mrb[0].mxu0 %v407
        %v646 = vpop.f32.mrb[0].mxu0
        %v647 = vadd.f32 0.0, %v646
        %v648 = vpop.f32.mrb[0].mxu0
        %v649 = vadd.f32 0.0, %v648
        %v650 = vpop.f32.mrb[0].mxu0
        %v651 = vadd.f32 0.0, %v650
        %v652 = vpop.f32.mrb[0].mxu0
        %v653 = vadd.f32 0.0, %v652
        %654 = vmatprep.mubr.bf16.mxu0 0
        %655 = vmatmul.mubr.bf16.gmra.mrb[0].mxu0 %v408
        %v656 = vpop.f32.mrb[0].mxu0
        %v657 = vadd.f32 0.0, %v656
        %v658 = vpop.f32.mrb[0].mxu0
        %v659 = vadd.f32 0.0, %v658
        %v660 = vpop.f32.mrb[0].mxu0
        %v661 = vadd.f32 0.0, %v660
        %v662 = vpop.f32.mrb[0].mxu0
        %v663 = vadd.f32 0.0, %v662
        %664 = vmatprep.mubr.bf16.mxu0 0
        %665 = vmatmul.mubr.bf16.gmra.mrb[0].mxu0 %v409
        %v666 = vpop.f32.mrb[0].mxu0
        %v667 = vadd.f32 0.0, %v666
        %v668 = vpop.f32.mrb[0].mxu0
        %v669 = vadd.f32 0.0, %v668
        %v670 = vpop.f32.mrb[0].mxu0
        %v671 = vadd.f32 0.0, %v670
        %v672 = vpop.f32.mrb[0].mxu0
        %v673 = vadd.f32 0.0, %v672
        %674 = vmatprep.mubr.bf16.mxu0 0
        %675 = vmatmul.mubr.bf16.gmra.mrb[0].mxu0 %v410
        %v676 = vpop.f32.mrb[0].mxu0
        %v677 = vadd.f32 0.0, %v676
        %v678 = vpop.f32.mrb[0].mxu0
        %v679 = vadd.f32 0.0, %v678
        %v680 = vpop.f32.mrb[0].mxu0
        %v681 = vadd.f32 0.0, %v680
        %v682 = vpop.f32.mrb[0].mxu0
        %v683 = vadd.f32 0.0, %v682
        %684 = vmatprep.mubr.bf16.mxu0 0
        %685 = vmatmul.mubr.bf16.gmra.mrb[0].mxu0 %v411
        %v686 = vpop.f32.mrb[0].mxu0
        %v687 = vadd.f32 0.0, %v686
        %v688 = vpop.f32.mrb[0].mxu0
        %v689 = vadd.f32 0.0, %v688
        %v690 = vpop.f32.mrb[0].mxu0
        %v691 = vadd.f32 0.0, %v690
        %v692 = vpop.f32.mrb[0].mxu0
        %v693 = vadd.f32 0.0, %v692
        %694 = vmatprep.mubr.bf16.mxu0 0
        %695 = vmatmul.mubr.bf16.gmra.mrb[0].mxu0 %v412
        %v696 = vpop.f32.mrb[0].mxu0
        %v697 = vadd.f32 0.0, %v696
        %v698 = vpop.f32.mrb[0].mxu0
        %v699 = vadd.f32 0.0, %v698
        %v700 = vpop.f32.mrb[0].mxu0
        %v701 = vadd.f32 0.0, %v700
        %v702 = vpop.f32.mrb[0].mxu0
        %v703 = vadd.f32 0.0, %v702
        %704 = vmatprep.mubr.bf16.mxu0 0
        %705 = vmatmul.mubr.bf16.gmra.mrb[0].mxu0 %v413
        %v706 = vpop.f32.mrb[0].mxu0
        %v707 = vadd.f32 0.0, %v706
        %v708 = vpop.f32.mrb[0].mxu0
        %v709 = vadd.f32 0.0, %v708
        %v710 = vpop.f32.mrb[0].mxu0
        %v711 = vadd.f32 0.0, %v710
        %v712 = vpop.f32.mrb[0].mxu0
        %v713 = vadd.f32 0.0, %v712
        %714 = vmatprep.mubr.bf16.mxu0 0
        %715 = vmatmul.mubr.bf16.gmra.mrb[0].mxu0 %v414
        %v716 = vpop.f32.mrb[0].mxu0
        %v717 = vadd.f32 0.0, %v716
        %v718 = vpop.f32.mrb[0].mxu0
        %v719 = vadd.f32 0.0, %v718
        %v720 = vpop.f32.mrb[0].mxu0
        %v721 = vadd.f32 0.0, %v720
        %v722 = vpop.f32.mrb[0].mxu0
        %v723 = vadd.f32 0.0, %v722
        %724 = vmatprep.mubr.bf16.mxu0 0
        %725 = vmatmul.mubr.bf16.gmra.mrb[0].mxu0 %v415
        %v726 = vpop.f32.mrb[0].mxu0
        %v727 = vadd.f32 0.0, %v726
        %v728 = vpop.f32.mrb[0].mxu0
        %v729 = vadd.f32 0.0, %v728
        %v730 = vpop.f32.mrb[0].mxu0
        %v731 = vadd.f32 0.0, %v730
        %v732 = vpop.f32.mrb[0].mxu0
        %v733 = vadd.f32 0.0, %v732
        %734 = vmatprep.mubr.bf16.mxu0 0
        %735 = vmatmul.mubr.bf16.gmra.mrb[0].mxu0 %v416
        %v736 = vpop.f32.mrb[0].mxu0
        %v737 = vadd.f32 0.0, %v736
        %v738 = vpop.f32.mrb[0].mxu0
        %v739 = vadd.f32 0.0, %v738
        %v740 = vpop.f32.mrb[0].mxu0
        %v741 = vadd.f32 0.0, %v740
        %v742 = vpop.f32.mrb[0].mxu0
        %v743 = vadd.f32 0.0, %v742
        %744 = vmatprep.mubr.bf16.mxu0 0
        %745 = vmatmul.mubr.bf16.gmra.mrb[0].mxu0 %v417
        %v746 = vpop.f32.mrb[0].mxu0
        %v747 = vadd.f32 0.0, %v746
        %v748 = vpop.f32.mrb[0].mxu0
        %v749 = vadd.f32 0.0, %v748
        %v750 = vpop.f32.mrb[0].mxu0
        %v751 = vadd.f32 0.0, %v750
        %v752 = vpop.f32.mrb[0].mxu0
        %v753 = vadd.f32 0.0, %v752
        %754 = vdwg.mxu0
        %755 = vmatprep.subr.bf16.mxu0 0
        %756 = vmatpush1.bf16.msra.mxu0 %v516
        %757 = vmatprep.subr.bf16.mxu0 0
        %758 = vmatpush1.bf16.msra.mxu0 %v519
        %759 = vmatprep.subr.bf16.mxu0 0
        %760 = vmatpush1.bf16.msra.mxu0 %v522
        %761 = vmatprep.subr.bf16.mxu0 0
        %762 = vmatpush1.bf16.msra.mxu0 %v525
        %763 = vmatprep.subr.bf16.mxu0 0
        %764 = vmatpush1.bf16.msra.mxu0 %v528
        %765 = vmatprep.subr.bf16.mxu0 0
        %766 = vmatpush1.bf16.msra.mxu0 %v531
        %767 = vmatprep.subr.bf16.mxu0 0
        %768 = vmatpush1.bf16.msra.mxu0 %v534
        %769 = vmatprep.subr.bf16.mxu0 0
        %770 = vmatpush1.bf16.msra.mxu0 %v537
        %771 = vmatprep.subr.bf16.mxu0 0
        %772 = vmatpush1.bf16.msra.mxu0 0
        %773 = vmatprep.subr.bf16.mxu0 0
        %774 = vmatpush1.bf16.msra.mxu0 0
        %775 = vmatprep.subr.bf16.mxu0 0
        %776 = vmatpush1.bf16.msra.mxu0 0
        %777 = vmatprep.subr.bf16.mxu0 0
        %778 = vmatpush1.bf16.msra.mxu0 0
        %779 = vmatprep.subr.bf16.mxu0 0
        %780 = vmatpush1.bf16.msra.mxu0 0
        %781 = vmatprep.subr.bf16.mxu0 0
        %782 = vmatpush1.bf16.msra.mxu0 0
        %783 = vmatprep.subr.bf16.mxu0 0
        %784 = vmatpush1.bf16.msra.mxu0 0
        %785 = vmatprep.subr.bf16.mxu0 0
        %786 = vmatpush1.bf16.msra.mxu0 0
        %787 = vmatprep.mubr.bf16.mxu0 0
        %788 = vmatmul.mubr.bf16.gmra.mrb[0].mxu0 %v402
        %v789 = vpop.f32.mrb[0].mxu0
        %v790 = vadd.f32 0.0, %v789
        %v791 = vpop.f32.mrb[0].mxu0
        %v792 = vpop.f32.mrb[0].mxu0
        %v793 = vadd.f32 0.0, %v792
        %v794 = vpop.f32.mrb[0].mxu0
        %795 = vmatprep.mubr.bf16.mxu0 0
        %796 = vmatmul.mubr.bf16.gmra.mrb[0].mxu0 %v403
        %v797 = vpop.f32.mrb[0].mxu0
        %v798 = vadd.f32 0.0, %v797
        %v799 = vpop.f32.mrb[0].mxu0
        %v800 = vpop.f32.mrb[0].mxu0
        %v801 = vadd.f32 0.0, %v800
        %v802 = vpop.f32.mrb[0].mxu0
        %803 = vmatprep.mubr.bf16.mxu0 0
        %804 = vmatmul.mubr.bf16.gmra.mrb[0].mxu0 %v404
        %v805 = vpop.f32.mrb[0].mxu0
        %v806 = vadd.f32 0.0, %v805
        %v807 = vpop.f32.mrb[0].mxu0
        %v808 = vpop.f32.mrb[0].mxu0
        %v809 = vadd.f32 0.0, %v808
        %v810 = vpop.f32.mrb[0].mxu0
        %811 = vmatprep.mubr.bf16.mxu0 0
        %812 = vmatmul.mubr.bf16.gmra.mrb[0].mxu0 %v405
        %v813 = vpop.f32.mrb[0].mxu0
        %v814 = vadd.f32 0.0, %v813
        %v815 = vpop.f32.mrb[0].mxu0
        %v816 = vpop.f32.mrb[0].mxu0
        %v817 = vadd.f32 0.0, %v816
        %v818 = vpop.f32.mrb[0].mxu0
        %819 = vmatprep.mubr.bf16.mxu0 0
        %820 = vmatmul.mubr.bf16.gmra.mrb[0].mxu0 %v406
        %v821 = vpop.f32.mrb[0].mxu0
        %v822 = vadd.f32 0.0, %v821
        %v823 = vpop.f32.mrb[0].mxu0
        %v824 = vpop.f32.mrb[0].mxu0
        %v825 = vadd.f32 0.0, %v824
        %v826 = vpop.f32.mrb[0].mxu0
        %827 = vmatprep.mubr.bf16.mxu0 0
        %828 = vmatmul.mubr.bf16.gmra.mrb[0].mxu0 %v407
        %v829 = vpop.f32.mrb[0].mxu0
        %v830 = vadd.f32 0.0, %v829
        %v831 = vpop.f32.mrb[0].mxu0
        %v832 = vpop.f32.mrb[0].mxu0
        %v833 = vadd.f32 0.0, %v832
        %v834 = vpop.f32.mrb[0].mxu0
        %835 = vmatprep.mubr.bf16.mxu0 0
        %836 = vmatmul.mubr.bf16.gmra.mrb[0].mxu0 %v408
        %v837 = vpop.f32.mrb[0].mxu0
        %v838 = vadd.f32 0.0, %v837
        %v839 = vpop.f32.mrb[0].mxu0
        %v840 = vpop.f32.mrb[0].mxu0
        %v841 = vadd.f32 0.0, %v840
        %v842 = vpop.f32.mrb[0].mxu0
        %843 = vmatprep.mubr.bf16.mxu0 0
        %844 = vmatmul.mubr.bf16.gmra.mrb[0].mxu0 %v409
        %v845 = vpop.f32.mrb[0].mxu0
        %v846 = vadd.f32 0.0, %v845
        %v847 = vpop.f32.mrb[0].mxu0
        %v848 = vpop.f32.mrb[0].mxu0
        %v849 = vadd.f32 0.0, %v848
        %v850 = vpop.f32.mrb[0].mxu0
        %851 = vmatprep.mubr.bf16.mxu0 0
        %852 = vmatmul.mubr.bf16.gmra.mrb[0].mxu0 %v410
        %v853 = vpop.f32.mrb[0].mxu0
        %v854 = vadd.f32 0.0, %v853
        %v855 = vpop.f32.mrb[0].mxu0
        %v856 = vpop.f32.mrb[0].mxu0
        %v857 = vadd.f32 0.0, %v856
        %v858 = vpop.f32.mrb[0].mxu0
        %859 = vmatprep.mubr.bf16.mxu0 0
        %860 = vmatmul.mubr.bf16.gmra.mrb[0].mxu0 %v411
        %v861 = vpop.f32.mrb[0].mxu0
        %v862 = vadd.f32 0.0, %v861
        %v863 = vpop.f32.mrb[0].mxu0
        %v864 = vpop.f32.mrb[0].mxu0
        %v865 = vadd.f32 0.0, %v864
        %v866 = vpop.f32.mrb[0].mxu0
        %867 = vmatprep.mubr.bf16.mxu0 0
        %868 = vmatmul.mubr.bf16.gmra.mrb[0].mxu0 %v412
        %v869 = vpop.f32.mrb[0].mxu0
        %v870 = vadd.f32 0.0, %v869
        %v871 = vpop.f32.mrb[0].mxu0
        %v872 = vpop.f32.mrb[0].mxu0
        %v873 = vadd.f32 0.0, %v872
        %v874 = vpop.f32.mrb[0].mxu0
        %875 = vmatprep.mubr.bf16.mxu0 0
        %876 = vmatmul.mubr.bf16.gmra.mrb[0].mxu0 %v413
        %v877 = vpop.f32.mrb[0].mxu0
        %v878 = vadd.f32 0.0, %v877
        %v879 = vpop.f32.mrb[0].mxu0
        %v880 = vpop.f32.mrb[0].mxu0
        %v881 = vadd.f32 0.0, %v880
        %v882 = vpop.f32.mrb[0].mxu0
        %883 = vmatprep.mubr.bf16.mxu0 0
        %884 = vmatmul.mubr.bf16.gmra.mrb[0].mxu0 %v414
        %v885 = vpop.f32.mrb[0].mxu0
        %v886 = vadd.f32 0.0, %v885
        %v887 = vpop.f32.mrb[0].mxu0
        %v888 = vpop.f32.mrb[0].mxu0
        %v889 = vadd.f32 0.0, %v888
        %v890 = vpop.f32.mrb[0].mxu0
        %891 = vmatprep.mubr.bf16.mxu0 0
        %892 = vmatmul.mubr.bf16.gmra.mrb[0].mxu0 %v415
        %v893 = vpop.f32.mrb[0].mxu0
        %v894 = vadd.f32 0.0, %v893
        %v895 = vpop.f32.mrb[0].mxu0
        %v896 = vpop.f32.mrb[0].mxu0
        %v897 = vadd.f32 0.0, %v896
        %v898 = vpop.f32.mrb[0].mxu0
        %899 = vmatprep.mubr.bf16.mxu0 0
        %900 = vmatmul.mubr.bf16.gmra.mrb[0].mxu0 %v416
        %v901 = vpop.f32.mrb[0].mxu0
        %v902 = vadd.f32 0.0, %v901
        %v903 = vpop.f32.mrb[0].mxu0
        %v904 = vpop.f32.mrb[0].mxu0
        %v905 = vadd.f32 0.0, %v904
        %v906 = vpop.f32.mrb[0].mxu0
        %907 = vmatprep.mubr.bf16.mxu0 0
        %908 = vmatmul.mubr.bf16.gmra.mrb[0].mxu0 %v417
        %v909 = vpop.f32.mrb[0].mxu0
        %v910 = vadd.f32 0.0, %v909
        %v911 = vpop.f32.mrb[0].mxu0
        %v912 = vpop.f32.mrb[0].mxu0
        %v913 = vadd.f32 0.0, %v912
        %v914 = vpop.f32.mrb[0].mxu0
        %915 = vdwg.mxu0
        %v916 = vpack.c.bf16 %v601, %v597
        %v917 = vpack.c.bf16 %v611, %v607
        %v918 = vpack.c.bf16 %v621, %v617
        %v919 = vpack.c.bf16 %v631, %v627
        %v920 = vpack.c.bf16 %v641, %v637
        %v921 = vpack.c.bf16 %v651, %v647
        %v922 = vpack.c.bf16 %v661, %v657
        %v923 = vpack.c.bf16 %v671, %v667
        %v924 = vpack.c.bf16 %v681, %v677
        %v925 = vpack.c.bf16 %v691, %v687
        %v926 = vpack.c.bf16 %v701, %v697
        %v927 = vpack.c.bf16 %v711, %v707
        %v928 = vpack.c.bf16 %v721, %v717
        %v929 = vpack.c.bf16 %v731, %v727
        %v930 = vpack.c.bf16 %v741, %v737
        %v931 = vpack.c.bf16 %v751, %v747
        %v948 = vunpack.c.l.b16 %v916
        %v949 = vunpack.c.h.b16 %v916
        %v950 = vunpack.c.l.b16 %v917
        %v951 = vunpack.c.h.b16 %v917
        %v952 = vunpack.c.l.b16 %v918
        %v953 = vunpack.c.h.b16 %v918
        %v954 = vunpack.c.l.b16 %v919
        %v955 = vunpack.c.h.b16 %v919
        %v956 = vunpack.c.l.b16 %v920
        %v957 = vunpack.c.h.b16 %v920
        %v958 = vunpack.c.l.b16 %v921
        %v959 = vunpack.c.h.b16 %v921
        %v960 = vunpack.c.l.b16 %v922
        %v961 = vunpack.c.h.b16 %v922
        %v962 = vunpack.c.l.b16 %v923
        %v963 = vunpack.c.h.b16 %v923
        %v964 = vunpack.c.l.b16 %v924
        %v965 = vunpack.c.h.b16 %v924
        %v966 = vunpack.c.l.b16 %v925
        %v967 = vunpack.c.h.b16 %v925
        %v968 = vunpack.c.l.b16 %v926
        %v969 = vunpack.c.h.b16 %v926
        %v970 = vunpack.c.l.b16 %v927
        %v971 = vunpack.c.h.b16 %v927
        %v972 = vunpack.c.l.b16 %v928
        %v973 = vunpack.c.h.b16 %v928
        %v974 = vunpack.c.l.b16 %v929
        %v975 = vunpack.c.h.b16 %v929
        %v976 = vunpack.c.l.b16 %v930
        %v977 = vunpack.c.h.b16 %v930
        %v978 = vunpack.c.l.b16 %v931
        %v979 = vunpack.c.h.b16 %v931
        %v980 = vpack.c.b16 %v948, %v948
        %v981 = vpack.c.b16 %v949, %v949
        %v982 = vpack.c.b16 %v950, %v950
        %v983 = vpack.c.b16 %v951, %v951
        %v984 = vpack.c.b16 %v952, %v952
        %v985 = vpack.c.b16 %v953, %v953
        %v986 = vpack.c.b16 %v954, %v954
        %v987 = vpack.c.b16 %v955, %v955
        %v988 = vpack.c.b16 %v956, %v956
        %v989 = vpack.c.b16 %v957, %v957
        %v990 = vpack.c.b16 %v958, %v958
        %v991 = vpack.c.b16 %v959, %v959
        %v992 = vpack.c.b16 %v960, %v960
        %v993 = vpack.c.b16 %v961, %v961
        %v994 = vpack.c.b16 %v962, %v962
        %v995 = vpack.c.b16 %v963, %v963
        %v996 = vpack.c.b16 %v964, %v964
        %v997 = vpack.c.b16 %v965, %v965
        %v998 = vpack.c.b16 %v966, %v966
        %v999 = vpack.c.b16 %v967, %v967
        %v1000 = vpack.c.b16 %v968, %v968
        %v1001 = vpack.c.b16 %v969, %v969
        %v1002 = vpack.c.b16 %v970, %v970
        %v1003 = vpack.c.b16 %v971, %v971
        %v1004 = vpack.c.b16 %v972, %v972
        %v1005 = vpack.c.b16 %v973, %v973
        %v1006 = vpack.c.b16 %v974, %v974
        %v1007 = vpack.c.b16 %v975, %v975
        %v1008 = vpack.c.b16 %v976, %v976
        %v1009 = vpack.c.b16 %v977, %v977
        %v1010 = vpack.c.b16 %v978, %v978
        %v1011 = vpack.c.b16 %v979, %v979
        %1044 = vst [vmem:[%s241] sm:$0xf] %v980
        %1045 = vst [vmem:[%s241 + $0x4] sm:$0xf] %v981
        %1046 = vst [vmem:[%s241 + $0x8] sm:$0xf] %v982
        %1047 = vst [vmem:[%s241 + $0xc] sm:$0xf] %v983
        %1048 = vst [vmem:[%s241 + $0x10] sm:$0xf] %v984
        %1049 = vst [vmem:[%s241 + $0x14] sm:$0xf] %v985
        %1050 = vst [vmem:[%s241 + $0x18] sm:$0xf] %v986
        %1051 = vst [vmem:[%s241 + $0x1c] sm:$0xf] %v987
        %1052 = vst [vmem:[%s241 + $0x20] sm:$0xf] %v988
        %1053 = vst [vmem:[%s241 + $0x24] sm:$0xf] %v989
        %1054 = vst [vmem:[%s241 + $0x28] sm:$0xf] %v990
        %1055 = vst [vmem:[%s241 + $0x2c] sm:$0xf] %v991
        %1056 = vst [vmem:[%s241 + $0x30] sm:$0xf] %v992
        %1057 = vst [vmem:[%s241 + $0x34] sm:$0xf] %v993
        %1058 = vst [vmem:[%s241 + $0x38] sm:$0xf] %v994
        %1059 = vst [vmem:[%s241 + $0x3c] sm:$0xf] %v995
        %1060 = vst [vmem:[%s241 + $0x40] sm:$0xf] %v996
        %1061 = vst [vmem:[%s241 + $0x44] sm:$0xf] %v997
        %1062 = vst [vmem:[%s241 + $0x48] sm:$0xf] %v998
        %1063 = vst [vmem:[%s241 + $0x4c] sm:$0xf] %v999
        %1064 = vst [vmem:[%s241 + $0x50] sm:$0xf] %v1000
        %1065 = vst [vmem:[%s241 + $0x54] sm:$0xf] %v1001
        %1066 = vst [vmem:[%s241 + $0x58] sm:$0xf] %v1002
        %1067 = vst [vmem:[%s241 + $0x5c] sm:$0xf] %v1003
        %1068 = vst [vmem:[%s241 + $0x60] sm:$0xf] %v1004
        %1069 = vst [vmem:[%s241 + $0x64] sm:$0xf] %v1005
        %1070 = vst [vmem:[%s241 + $0x68] sm:$0xf] %v1006
        %1071 = vst [vmem:[%s241 + $0x6c] sm:$0xf] %v1007
        %1072 = vst [vmem:[%s241 + $0x70] sm:$0xf] %v1008
        %1073 = vst [vmem:[%s241 + $0x74] sm:$0xf] %v1009
        %1074 = vst [vmem:[%s241 + $0x78] sm:$0xf] %v1010
        %1075 = vst [vmem:[%s241 + $0x7c] sm:$0xf] %v1011
        %s1076 = scalar_lea.vmem %s221, 128 [#allocation2]
        %v1077 = vld [vmem:[%s1076] sm:$0xf]
        %v1078 = vld [vmem:[%s1076 + $0x4] sm:$0xf]
        %v1079 = vld [vmem:[%s1076 + $0x8] sm:$0xf]
        %v1080 = vld [vmem:[%s1076 + $0xc] sm:$0xf]
        %v1081 = vld [vmem:[%s1076 + $0x10] sm:$0xf]
        %v1082 = vld [vmem:[%s1076 + $0x14] sm:$0xf]
        %v1083 = vld [vmem:[%s1076 + $0x18] sm:$0xf]
        %v1084 = vld [vmem:[%s1076 + $0x1c] sm:$0xf]
        %v1085 = vld [vmem:[%s1076 + $0x20] sm:$0xf]
        %v1086 = vld [vmem:[%s1076 + $0x24] sm:$0xf]
        %v1087 = vld [vmem:[%s1076 + $0x28] sm:$0xf]
        %v1088 = vld [vmem:[%s1076 + $0x2c] sm:$0xf]
        %v1089 = vld [vmem:[%s1076 + $0x30] sm:$0xf]
        %v1090 = vld [vmem:[%s1076 + $0x34] sm:$0xf]
        %v1091 = vld [vmem:[%s1076 + $0x38] sm:$0xf]
        %v1092 = vld [vmem:[%s1076 + $0x3c] sm:$0xf]
        %v1093 = vld [vmem:[%s1076 + $0x40] sm:$0xf]
        %v1094 = vld [vmem:[%s1076 + $0x44] sm:$0xf]
        %v1095 = vld [vmem:[%s1076 + $0x48] sm:$0xf]
        %v1096 = vld [vmem:[%s1076 + $0x4c] sm:$0xf]
        %v1097 = vld [vmem:[%s1076 + $0x50] sm:$0xf]
        %v1098 = vld [vmem:[%s1076 + $0x54] sm:$0xf]
        %v1099 = vld [vmem:[%s1076 + $0x58] sm:$0xf]
        %v1100 = vld [vmem:[%s1076 + $0x5c] sm:$0xf]
        %v1101 = vld [vmem:[%s1076 + $0x60] sm:$0xf]
        %v1102 = vld [vmem:[%s1076 + $0x64] sm:$0xf]
        %v1103 = vld [vmem:[%s1076 + $0x68] sm:$0xf]
        %v1104 = vld [vmem:[%s1076 + $0x6c] sm:$0xf]
        %v1105 = vld [vmem:[%s1076 + $0x70] sm:$0xf]
        %v1106 = vld [vmem:[%s1076 + $0x74] sm:$0xf]
        %v1107 = vld [vmem:[%s1076 + $0x78] sm:$0xf]
        %v1108 = vld [vmem:[%s1076 + $0x7c] sm:$0xf]
        %v1109 = vld [vmem:[%s1] sm:$0xff]
        %v1110 = vld [vmem:[%s1 + $0x8] sm:$0xf]
        %v1111 = vld [vmem:[%s1 + $0xc] sm:$0xff]
        %v1112 = vld [vmem:[%s1 + $0x14] sm:$0xf]
        %v1113 = vld [vmem:[%s1 + $0x18] sm:$0xff]
        %v1114 = vld [vmem:[%s1 + $0x20] sm:$0xf]
        %v1115 = vld [vmem:[%s1 + $0x24] sm:$0xff]
        %v1116 = vld [vmem:[%s1 + $0x2c] sm:$0xf]
        %v1117 = vld [vmem:[%s1 + $0x30] sm:$0xff]
        %v1118 = vld [vmem:[%s1 + $0x38] sm:$0xf]
        %v1119 = vld [vmem:[%s1 + $0x3c] sm:$0xff]
        %v1120 = vld [vmem:[%s1 + $0x44] sm:$0xf]
        %v1121 = vld [vmem:[%s1 + $0x48] sm:$0xff]
        %v1122 = vld [vmem:[%s1 + $0x50] sm:$0xf]
        %v1123 = vld [vmem:[%s1 + $0x54] sm:$0xff]
        %v1124 = vld [vmem:[%s1 + $0x5c] sm:$0xf]
        %v1125 = vld [vmem:[%s1 + $0x60] sm:$0xff]
        %v1126 = vld [vmem:[%s1 + $0x68] sm:$0xf]
        %v1127 = vld [vmem:[%s1 + $0x6c] sm:$0xff]
        %v1128 = vld [vmem:[%s1 + $0x74] sm:$0xf]
        %v1129 = vld [vmem:[%s1 + $0x78] sm:$0xff]
        %v1130 = vld [vmem:[%s1 + $0x80] sm:$0xf]
        %v1131 = vld [vmem:[%s1 + $0x84] sm:$0xff]
        %v1132 = vld [vmem:[%s1 + $0x8c] sm:$0xf]
        %v1133 = vld [vmem:[%s1 + $0x90] sm:$0xff]
        %v1134 = vld [vmem:[%s1 + $0x98] sm:$0xf]
        %v1135 = vld [vmem:[%s1 + $0x9c] sm:$0xff]
        %v1136 = vld [vmem:[%s1 + $0xa4] sm:$0xf]
        %v1137 = vld [vmem:[%s1 + $0xa8] sm:$0xff]
        %v1138 = vld [vmem:[%s1 + $0xb0] sm:$0xf]
        %v1139 = vld [vmem:[%s1 + $0xb4] sm:$0xff]
        %v1140 = vld [vmem:[%s1 + $0xbc] sm:$0xf]
        %v1173 = vunpack.c.l.b16 %v1077
        %v1174 = vunpack.c.l.b16 %v1078
        %v1175 = vunpack.c.l.b16 %v1079
        %v1176 = vunpack.c.l.b16 %v1080
        %v1177 = vunpack.c.l.b16 %v1081
        %v1178 = vunpack.c.l.b16 %v1082
        %v1179 = vunpack.c.l.b16 %v1083
        %v1180 = vunpack.c.l.b16 %v1084
        %v1181 = vunpack.c.l.b16 %v1085
        %v1182 = vunpack.c.l.b16 %v1086
        %v1183 = vunpack.c.l.b16 %v1087
        %v1184 = vunpack.c.l.b16 %v1088
        %v1185 = vunpack.c.l.b16 %v1089
        %v1186 = vunpack.c.l.b16 %v1090
        %v1187 = vunpack.c.l.b16 %v1091
        %v1188 = vunpack.c.l.b16 %v1092
        %v1189 = vunpack.c.l.b16 %v1093
        %v1190 = vunpack.c.l.b16 %v1094
        %v1191 = vunpack.c.l.b16 %v1095
        %v1192 = vunpack.c.l.b16 %v1096
        %v1193 = vunpack.c.l.b16 %v1097
        %v1194 = vunpack.c.l.b16 %v1098
        %v1195 = vunpack.c.l.b16 %v1099
        %v1196 = vunpack.c.l.b16 %v1100
        %v1197 = vunpack.c.l.b16 %v1101
        %v1198 = vunpack.c.l.b16 %v1102
        %v1199 = vunpack.c.l.b16 %v1103
        %v1200 = vunpack.c.l.b16 %v1104
        %v1201 = vunpack.c.l.b16 %v1105
        %v1202 = vunpack.c.l.b16 %v1106
        %v1203 = vunpack.c.l.b16 %v1107
        %v1204 = vunpack.c.l.b16 %v1108
        %v1205 = vpack.c.b16 %v1174, %v1173
        %v1206 = vpack.c.b16 %v1176, %v1175
        %v1207 = vpack.c.b16 %v1178, %v1177
        %v1208 = vpack.c.b16 %v1180, %v1179
        %v1209 = vpack.c.b16 %v1182, %v1181
        %v1210 = vpack.c.b16 %v1184, %v1183
        %v1211 = vpack.c.b16 %v1186, %v1185
        %v1212 = vpack.c.b16 %v1188, %v1187
        %v1213 = vpack.c.b16 %v1190, %v1189
        %v1214 = vpack.c.b16 %v1192, %v1191
        %v1215 = vpack.c.b16 %v1194, %v1193
        %v1216 = vpack.c.b16 %v1196, %v1195
        %v1217 = vpack.c.b16 %v1198, %v1197
        %v1218 = vpack.c.b16 %v1200, %v1199
        %v1219 = vpack.c.b16 %v1202, %v1201
        %v1220 = vpack.c.b16 %v1204, %v1203
        %v1269 = vunpack.c.l.b16 %v1109
        %v1270 = vunpack.c.h.b16 %v1109
        %v1271 = vunpack.c.l.b16 %v1110
        %v1272 = vunpack.c.l.b16 %v1111
        %v1273 = vunpack.c.h.b16 %v1111
        %v1274 = vunpack.c.l.b16 %v1112
        %v1275 = vunpack.c.l.b16 %v1113
        %v1276 = vunpack.c.h.b16 %v1113
        %v1277 = vunpack.c.l.b16 %v1114
        %v1278 = vunpack.c.l.b16 %v1115
        %v1279 = vunpack.c.h.b16 %v1115
        %v1280 = vunpack.c.l.b16 %v1116
        %v1281 = vunpack.c.l.b16 %v1117
        %v1282 = vunpack.c.h.b16 %v1117
        %v1283 = vunpack.c.l.b16 %v1118
        %v1284 = vunpack.c.l.b16 %v1119
        %v1285 = vunpack.c.h.b16 %v1119
        %v1286 = vunpack.c.l.b16 %v1120
        %v1287 = vunpack.c.l.b16 %v1121
        %v1288 = vunpack.c.h.b16 %v1121
        %v1289 = vunpack.c.l.b16 %v1122
        %v1290 = vunpack.c.l.b16 %v1123
        %v1291 = vunpack.c.h.b16 %v1123
        %v1292 = vunpack.c.l.b16 %v1124
        %v1293 = vunpack.c.l.b16 %v1125
        %v1294 = vunpack.c.h.b16 %v1125
        %v1295 = vunpack.c.l.b16 %v1126
        %v1296 = vunpack.c.l.b16 %v1127
        %v1297 = vunpack.c.h.b16 %v1127
        %v1298 = vunpack.c.l.b16 %v1128
        %v1299 = vunpack.c.l.b16 %v1129
        %v1300 = vunpack.c.h.b16 %v1129
        %v1301 = vunpack.c.l.b16 %v1130
        %v1302 = vunpack.c.l.b16 %v1131
        %v1303 = vunpack.c.h.b16 %v1131
        %v1304 = vunpack.c.l.b16 %v1132
        %v1305 = vunpack.c.l.b16 %v1133
        %v1306 = vunpack.c.h.b16 %v1133
        %v1307 = vunpack.c.l.b16 %v1134
        %v1308 = vunpack.c.l.b16 %v1135
        %v1309 = vunpack.c.h.b16 %v1135
        %v1310 = vunpack.c.l.b16 %v1136
        %v1311 = vunpack.c.l.b16 %v1137
        %v1312 = vunpack.c.h.b16 %v1137
        %v1313 = vunpack.c.l.b16 %v1138
        %v1314 = vunpack.c.l.b16 %v1139
        %v1315 = vunpack.c.h.b16 %v1139
        %v1316 = vunpack.c.l.b16 %v1140
        %v1317 = vpack.c.b16 %v1272, %v1269
        %v1318 = vpack.c.b16 %v1273, %v1270
        %v1319 = vpack.c.b16 %v1274, %v1271
        %v1320 = vpack.c.b16 %v1278, %v1275
        %v1321 = vpack.c.b16 %v1279, %v1276
        %v1322 = vpack.c.b16 %v1280, %v1277
        %v1323 = vpack.c.b16 %v1284, %v1281
        %v1324 = vpack.c.b16 %v1285, %v1282
        %v1325 = vpack.c.b16 %v1286, %v1283
        %v1326 = vpack.c.b16 %v1290, %v1287
        %v1327 = vpack.c.b16 %v1291, %v1288
        %v1328 = vpack.c.b16 %v1292, %v1289
        %v1329 = vpack.c.b16 %v1296, %v1293
        %v1330 = vpack.c.b16 %v1297, %v1294
        %v1331 = vpack.c.b16 %v1298, %v1295
        %v1332 = vpack.c.b16 %v1302, %v1299
        %v1333 = vpack.c.b16 %v1303, %v1300
        %v1334 = vpack.c.b16 %v1304, %v1301
        %v1335 = vpack.c.b16 %v1308, %v1305
        %v1336 = vpack.c.b16 %v1309, %v1306
        %v1337 = vpack.c.b16 %v1310, %v1307
        %v1338 = vpack.c.b16 %v1314, %v1311
        %v1339 = vpack.c.b16 %v1315, %v1312
        %v1340 = vpack.c.b16 %v1316, %v1313
        %1365 = vmatprep.subr.bf16.mxu0 %v1318
        %1366 = vmatpush1.bf16.msra.mxu0 %v1317
        %1367 = vmatprep.subr.bf16.mxu0 %v1321
        %1368 = vmatpush1.bf16.msra.mxu0 %v1320
        %1369 = vmatprep.subr.bf16.mxu0 %v1324
        %1370 = vmatpush1.bf16.msra.mxu0 %v1323
        %1371 = vmatprep.subr.bf16.mxu0 %v1327
        %1372 = vmatpush1.bf16.msra.mxu0 %v1326
        %1373 = vmatprep.subr.bf16.mxu0 %v1330
        %1374 = vmatpush1.bf16.msra.mxu0 %v1329
        %1375 = vmatprep.subr.bf16.mxu0 %v1333
        %1376 = vmatpush1.bf16.msra.mxu0 %v1332
        %1377 = vmatprep.subr.bf16.mxu0 %v1336
        %1378 = vmatpush1.bf16.msra.mxu0 %v1335
        %1379 = vmatprep.subr.bf16.mxu0 %v1339
        %1380 = vmatpush1.bf16.msra.mxu0 %v1338
        %1381 = vmatprep.subr.bf16.mxu0 0
        %1382 = vmatpush1.bf16.msra.mxu0 0
        %1383 = vmatprep.subr.bf16.mxu0 0
        %1384 = vmatpush1.bf16.msra.mxu0 0
        %1385 = vmatprep.subr.bf16.mxu0 0
        %1386 = vmatpush1.bf16.msra.mxu0 0
        %1387 = vmatprep.subr.bf16.mxu0 0
        %1388 = vmatpush1.bf16.msra.mxu0 0
        %1389 = vmatprep.subr.bf16.mxu0 0
        %1390 = vmatpush1.bf16.msra.mxu0 0
        %1391 = vmatprep.subr.bf16.mxu0 0
        %1392 = vmatpush1.bf16.msra.mxu0 0
        %1393 = vmatprep.subr.bf16.mxu0 0
        %1394 = vmatpush1.bf16.msra.mxu0 0
        %1395 = vmatprep.subr.bf16.mxu0 0
        %1396 = vmatpush1.bf16.msra.mxu0 0
        %1397 = vmatprep.mubr.bf16.mxu0 0
        %1398 = vmatmul.mubr.bf16.gmra.mrb[0].mxu0 %v1205
        %v1399 = vpop.f32.mrb[0].mxu0
        %v1400 = vadd.f32 0.0, %v1399
        %v1401 = vpop.f32.mrb[0].mxu0
        %v1402 = vadd.f32 0.0, %v1401
        %v1403 = vpop.f32.mrb[0].mxu0
        %v1404 = vadd.f32 0.0, %v1403
        %v1405 = vpop.f32.mrb[0].mxu0
        %v1406 = vadd.f32 0.0, %v1405
        %1407 = vmatprep.mubr.bf16.mxu0 0
        %1408 = vmatmul.mubr.bf16.gmra.mrb[0].mxu0 %v1206
        %v1409 = vpop.f32.mrb[0].mxu0
        %v1410 = vadd.f32 0.0, %v1409
        %v1411 = vpop.f32.mrb[0].mxu0
        %v1412 = vadd.f32 0.0, %v1411
        %v1413 = vpop.f32.mrb[0].mxu0
        %v1414 = vadd.f32 0.0, %v1413
        %v1415 = vpop.f32.mrb[0].mxu0
        %v1416 = vadd.f32 0.0, %v1415
        %1417 = vmatprep.mubr.bf16.mxu0 0
        %1418 = vmatmul.mubr.bf16.gmra.mrb[0].mxu0 %v1207
        %v1419 = vpop.f32.mrb[0].mxu0
        %v1420 = vadd.f32 0.0, %v1419
        %v1421 = vpop.f32.mrb[0].mxu0
        %v1422 = vadd.f32 0.0, %v1421
        %v1423 = vpop.f32.mrb[0].mxu0
        %v1424 = vadd.f32 0.0, %v1423
        %v1425 = vpop.f32.mrb[0].mxu0
        %v1426 = vadd.f32 0.0, %v1425
        %1427 = vmatprep.mubr.bf16.mxu0 0
        %1428 = vmatmul.mubr.bf16.gmra.mrb[0].mxu0 %v1208
        %v1429 = vpop.f32.mrb[0].mxu0
        %v1430 = vadd.f32 0.0, %v1429
        %v1431 = vpop.f32.mrb[0].mxu0
        %v1432 = vadd.f32 0.0, %v1431
        %v1433 = vpop.f32.mrb[0].mxu0
        %v1434 = vadd.f32 0.0, %v1433
        %v1435 = vpop.f32.mrb[0].mxu0
        %v1436 = vadd.f32 0.0, %v1435
        %1437 = vmatprep.mubr.bf16.mxu0 0
        %1438 = vmatmul.mubr.bf16.gmra.mrb[0].mxu0 %v1209
        %v1439 = vpop.f32.mrb[0].mxu0
        %v1440 = vadd.f32 0.0, %v1439
        %v1441 = vpop.f32.mrb[0].mxu0
        %v1442 = vadd.f32 0.0, %v1441
        %v1443 = vpop.f32.mrb[0].mxu0
        %v1444 = vadd.f32 0.0, %v1443
        %v1445 = vpop.f32.mrb[0].mxu0
        %v1446 = vadd.f32 0.0, %v1445
        %1447 = vmatprep.mubr.bf16.mxu0 0
        %1448 = vmatmul.mubr.bf16.gmra.mrb[0].mxu0 %v1210
        %v1449 = vpop.f32.mrb[0].mxu0
        %v1450 = vadd.f32 0.0, %v1449
        %v1451 = vpop.f32.mrb[0].mxu0
        %v1452 = vadd.f32 0.0, %v1451
        %v1453 = vpop.f32.mrb[0].mxu0
        %v1454 = vadd.f32 0.0, %v1453
        %v1455 = vpop.f32.mrb[0].mxu0
        %v1456 = vadd.f32 0.0, %v1455
        %1457 = vmatprep.mubr.bf16.mxu0 0
        %1458 = vmatmul.mubr.bf16.gmra.mrb[0].mxu0 %v1211
        %v1459 = vpop.f32.mrb[0].mxu0
        %v1460 = vadd.f32 0.0, %v1459
        %v1461 = vpop.f32.mrb[0].mxu0
        %v1462 = vadd.f32 0.0, %v1461
        %v1463 = vpop.f32.mrb[0].mxu0
        %v1464 = vadd.f32 0.0, %v1463
        %v1465 = vpop.f32.mrb[0].mxu0
        %v1466 = vadd.f32 0.0, %v1465
        %1467 = vmatprep.mubr.bf16.mxu0 0
        %1468 = vmatmul.mubr.bf16.gmra.mrb[0].mxu0 %v1212
        %v1469 = vpop.f32.mrb[0].mxu0
        %v1470 = vadd.f32 0.0, %v1469
        %v1471 = vpop.f32.mrb[0].mxu0
        %v1472 = vadd.f32 0.0, %v1471
        %v1473 = vpop.f32.mrb[0].mxu0
        %v1474 = vadd.f32 0.0, %v1473
        %v1475 = vpop.f32.mrb[0].mxu0
        %v1476 = vadd.f32 0.0, %v1475
        %1477 = vmatprep.mubr.bf16.mxu0 0
        %1478 = vmatmul.mubr.bf16.gmra.mrb[0].mxu0 %v1213
        %v1479 = vpop.f32.mrb[0].mxu0
        %v1480 = vadd.f32 0.0, %v1479
        %v1481 = vpop.f32.mrb[0].mxu0
        %v1482 = vadd.f32 0.0, %v1481
        %v1483 = vpop.f32.mrb[0].mxu0
        %v1484 = vadd.f32 0.0, %v1483
        %v1485 = vpop.f32.mrb[0].mxu0
        %v1486 = vadd.f32 0.0, %v1485
        %1487 = vmatprep.mubr.bf16.mxu0 0
        %1488 = vmatmul.mubr.bf16.gmra.mrb[0].mxu0 %v1214
        %v1489 = vpop.f32.mrb[0].mxu0
        %v1490 = vadd.f32 0.0, %v1489
        %v1491 = vpop.f32.mrb[0].mxu0
        %v1492 = vadd.f32 0.0, %v1491
        %v1493 = vpop.f32.mrb[0].mxu0
        %v1494 = vadd.f32 0.0, %v1493
        %v1495 = vpop.f32.mrb[0].mxu0
        %v1496 = vadd.f32 0.0, %v1495
        %1497 = vmatprep.mubr.bf16.mxu0 0
        %1498 = vmatmul.mubr.bf16.gmra.mrb[0].mxu0 %v1215
        %v1499 = vpop.f32.mrb[0].mxu0
        %v1500 = vadd.f32 0.0, %v1499
        %v1501 = vpop.f32.mrb[0].mxu0
        %v1502 = vadd.f32 0.0, %v1501
        %v1503 = vpop.f32.mrb[0].mxu0
        %v1504 = vadd.f32 0.0, %v1503
        %v1505 = vpop.f32.mrb[0].mxu0
        %v1506 = vadd.f32 0.0, %v1505
        %1507 = vmatprep.mubr.bf16.mxu0 0
        %1508 = vmatmul.mubr.bf16.gmra.mrb[0].mxu0 %v1216
        %v1509 = vpop.f32.mrb[0].mxu0
        %v1510 = vadd.f32 0.0, %v1509
        %v1511 = vpop.f32.mrb[0].mxu0
        %v1512 = vadd.f32 0.0, %v1511
        %v1513 = vpop.f32.mrb[0].mxu0
        %v1514 = vadd.f32 0.0, %v1513
        %v1515 = vpop.f32.mrb[0].mxu0
        %v1516 = vadd.f32 0.0, %v1515
        %1517 = vmatprep.mubr.bf16.mxu0 0
        %1518 = vmatmul.mubr.bf16.gmra.mrb[0].mxu0 %v1217
        %v1519 = vpop.f32.mrb[0].mxu0
        %v1520 = vadd.f32 0.0, %v1519
        %v1521 = vpop.f32.mrb[0].mxu0
        %v1522 = vadd.f32 0.0, %v1521
        %v1523 = vpop.f32.mrb[0].mxu0
        %v1524 = vadd.f32 0.0, %v1523
        %v1525 = vpop.f32.mrb[0].mxu0
        %v1526 = vadd.f32 0.0, %v1525
        %1527 = vmatprep.mubr.bf16.mxu0 0
        %1528 = vmatmul.mubr.bf16.gmra.mrb[0].mxu0 %v1218
        %v1529 = vpop.f32.mrb[0].mxu0
        %v1530 = vadd.f32 0.0, %v1529
        %v1531 = vpop.f32.mrb[0].mxu0
        %v1532 = vadd.f32 0.0, %v1531
        %v1533 = vpop.f32.mrb[0].mxu0
        %v1534 = vadd.f32 0.0, %v1533
        %v1535 = vpop.f32.mrb[0].mxu0
        %v1536 = vadd.f32 0.0, %v1535
        %1537 = vmatprep.mubr.bf16.mxu0 0
        %1538 = vmatmul.mubr.bf16.gmra.mrb[0].mxu0 %v1219
        %v1539 = vpop.f32.mrb[0].mxu0
        %v1540 = vadd.f32 0.0, %v1539
        %v1541 = vpop.f32.mrb[0].mxu0
        %v1542 = vadd.f32 0.0, %v1541
        %v1543 = vpop.f32.mrb[0].mxu0
        %v1544 = vadd.f32 0.0, %v1543
        %v1545 = vpop.f32.mrb[0].mxu0
        %v1546 = vadd.f32 0.0, %v1545
        %1547 = vmatprep.mubr.bf16.mxu0 0
        %1548 = vmatmul.mubr.bf16.gmra.mrb[0].mxu0 %v1220
        %v1549 = vpop.f32.mrb[0].mxu0
        %v1550 = vadd.f32 0.0, %v1549
        %v1551 = vpop.f32.mrb[0].mxu0
        %v1552 = vadd.f32 0.0, %v1551
        %v1553 = vpop.f32.mrb[0].mxu0
        %v1554 = vadd.f32 0.0, %v1553
        %v1555 = vpop.f32.mrb[0].mxu0
        %v1556 = vadd.f32 0.0, %v1555
        %1557 = vdwg.mxu0
        %1558 = vmatprep.subr.bf16.mxu0 0
        %1559 = vmatpush1.bf16.msra.mxu0 %v1319
        %1560 = vmatprep.subr.bf16.mxu0 0
        %1561 = vmatpush1.bf16.msra.mxu0 %v1322
        %1562 = vmatprep.subr.bf16.mxu0 0
        %1563 = vmatpush1.bf16.msra.mxu0 %v1325
        %1564 = vmatprep.subr.bf16.mxu0 0
        %1565 = vmatpush1.bf16.msra.mxu0 %v1328
        %1566 = vmatprep.subr.bf16.mxu0 0
        %1567 = vmatpush1.bf16.msra.mxu0 %v1331
        %1568 = vmatprep.subr.bf16.mxu0 0
        %1569 = vmatpush1.bf16.msra.mxu0 %v1334
        %1570 = vmatprep.subr.bf16.mxu0 0
        %1571 = vmatpush1.bf16.msra.mxu0 %v1337
        %1572 = vmatprep.subr.bf16.mxu0 0
        %1573 = vmatpush1.bf16.msra.mxu0 %v1340
        %1574 = vmatprep.subr.bf16.mxu0 0
        %1575 = vmatpush1.bf16.msra.mxu0 0
        %1576 = vmatprep.subr.bf16.mxu0 0
        %1577 = vmatpush1.bf16.msra.mxu0 0
        %1578 = vmatprep.subr.bf16.mxu0 0
        %1579 = vmatpush1.bf16.msra.mxu0 0
        %1580 = vmatprep.subr.bf16.mxu0 0
        %1581 = vmatpush1.bf16.msra.mxu0 0
        %1582 = vmatprep.subr.bf16.mxu0 0
        %1583 = vmatpush1.bf16.msra.mxu0 0
        %1584 = vmatprep.subr.bf16.mxu0 0
        %1585 = vmatpush1.bf16.msra.mxu0 0
        %1586 = vmatprep.subr.bf16.mxu0 0
        %1587 = vmatpush1.bf16.msra.mxu0 0
        %1588 = vmatprep.subr.bf16.mxu0 0
        %1589 = vmatpush1.bf16.msra.mxu0 0
        %1590 = vmatprep.mubr.bf16.mxu0 0
        %1591 = vmatmul.mubr.bf16.gmra.mrb[0].mxu0 %v1205
        %v1592 = vpop.f32.mrb[0].mxu0
        %v1593 = vadd.f32 0.0, %v1592
        %v1594 = vpop.f32.mrb[0].mxu0
        %v1595 = vpop.f32.mrb[0].mxu0
        %v1596 = vadd.f32 0.0, %v1595
        %v1597 = vpop.f32.mrb[0].mxu0
        %1598 = vmatprep.mubr.bf16.mxu0 0
        %1599 = vmatmul.mubr.bf16.gmra.mrb[0].mxu0 %v1206
        %v1600 = vpop.f32.mrb[0].mxu0
        %v1601 = vadd.f32 0.0, %v1600
        %v1602 = vpop.f32.mrb[0].mxu0
        %v1603 = vpop.f32.mrb[0].mxu0
        %v1604 = vadd.f32 0.0, %v1603
        %v1605 = vpop.f32.mrb[0].mxu0
        %1606 = vmatprep.mubr.bf16.mxu0 0
        %1607 = vmatmul.mubr.bf16.gmra.mrb[0].mxu0 %v1207
        %v1608 = vpop.f32.mrb[0].mxu0
        %v1609 = vadd.f32 0.0, %v1608
        %v1610 = vpop.f32.mrb[0].mxu0
        %v1611 = vpop.f32.mrb[0].mxu0
        %v1612 = vadd.f32 0.0, %v1611
        %v1613 = vpop.f32.mrb[0].mxu0
        %1614 = vmatprep.mubr.bf16.mxu0 0
        %1615 = vmatmul.mubr.bf16.gmra.mrb[0].mxu0 %v1208
        %v1616 = vpop.f32.mrb[0].mxu0
        %v1617 = vadd.f32 0.0, %v1616
        %v1618 = vpop.f32.mrb[0].mxu0
        %v1619 = vpop.f32.mrb[0].mxu0
        %v1620 = vadd.f32 0.0, %v1619
        %v1621 = vpop.f32.mrb[0].mxu0
        %1622 = vmatprep.mubr.bf16.mxu0 0
        %1623 = vmatmul.mubr.bf16.gmra.mrb[0].mxu0 %v1209
        %v1624 = vpop.f32.mrb[0].mxu0
        %v1625 = vadd.f32 0.0, %v1624
        %v1626 = vpop.f32.mrb[0].mxu0
        %v1627 = vpop.f32.mrb[0].mxu0
        %v1628 = vadd.f32 0.0, %v1627
        %v1629 = vpop.f32.mrb[0].mxu0
        %1630 = vmatprep.mubr.bf16.mxu0 0
        %1631 = vmatmul.mubr.bf16.gmra.mrb[0].mxu0 %v1210
        %v1632 = vpop.f32.mrb[0].mxu0
        %v1633 = vadd.f32 0.0, %v1632
        %v1634 = vpop.f32.mrb[0].mxu0
        %v1635 = vpop.f32.mrb[0].mxu0
        %v1636 = vadd.f32 0.0, %v1635
        %v1637 = vpop.f32.mrb[0].mxu0
        %1638 = vmatprep.mubr.bf16.mxu0 0
        %1639 = vmatmul.mubr.bf16.gmra.mrb[0].mxu0 %v1211
        %v1640 = vpop.f32.mrb[0].mxu0
        %v1641 = vadd.f32 0.0, %v1640
        %v1642 = vpop.f32.mrb[0].mxu0
        %v1643 = vpop.f32.mrb[0].mxu0
        %v1644 = vadd.f32 0.0, %v1643
        %v1645 = vpop.f32.mrb[0].mxu0
        %1646 = vmatprep.mubr.bf16.mxu0 0
        %1647 = vmatmul.mubr.bf16.gmra.mrb[0].mxu0 %v1212
        %v1648 = vpop.f32.mrb[0].mxu0
        %v1649 = vadd.f32 0.0, %v1648
        %v1650 = vpop.f32.mrb[0].mxu0
        %v1651 = vpop.f32.mrb[0].mxu0
        %v1652 = vadd.f32 0.0, %v1651
        %v1653 = vpop.f32.mrb[0].mxu0
        %1654 = vmatprep.mubr.bf16.mxu0 0
        %1655 = vmatmul.mubr.bf16.gmra.mrb[0].mxu0 %v1213
        %v1656 = vpop.f32.mrb[0].mxu0
        %v1657 = vadd.f32 0.0, %v1656
        %v1658 = vpop.f32.mrb[0].mxu0
        %v1659 = vpop.f32.mrb[0].mxu0
        %v1660 = vadd.f32 0.0, %v1659
        %v1661 = vpop.f32.mrb[0].mxu0
        %1662 = vmatprep.mubr.bf16.mxu0 0
        %1663 = vmatmul.mubr.bf16.gmra.mrb[0].mxu0 %v1214
        %v1664 = vpop.f32.mrb[0].mxu0
        %v1665 = vadd.f32 0.0, %v1664
        %v1666 = vpop.f32.mrb[0].mxu0
        %v1667 = vpop.f32.mrb[0].mxu0
        %v1668 = vadd.f32 0.0, %v1667
        %v1669 = vpop.f32.mrb[0].mxu0
        %1670 = vmatprep.mubr.bf16.mxu0 0
        %1671 = vmatmul.mubr.bf16.gmra.mrb[0].mxu0 %v1215
        %v1672 = vpop.f32.mrb[0].mxu0
        %v1673 = vadd.f32 0.0, %v1672
        %v1674 = vpop.f32.mrb[0].mxu0
        %v1675 = vpop.f32.mrb[0].mxu0
        %v1676 = vadd.f32 0.0, %v1675
        %v1677 = vpop.f32.mrb[0].mxu0
        %1678 = vmatprep.mubr.bf16.mxu0 0
        %1679 = vmatmul.mubr.bf16.gmra.mrb[0].mxu0 %v1216
        %v1680 = vpop.f32.mrb[0].mxu0
        %v1681 = vadd.f32 0.0, %v1680
        %v1682 = vpop.f32.mrb[0].mxu0
        %v1683 = vpop.f32.mrb[0].mxu0
        %v1684 = vadd.f32 0.0, %v1683
        %v1685 = vpop.f32.mrb[0].mxu0
        %1686 = vmatprep.mubr.bf16.mxu0 0
        %1687 = vmatmul.mubr.bf16.gmra.mrb[0].mxu0 %v1217
        %v1688 = vpop.f32.mrb[0].mxu0
        %v1689 = vadd.f32 0.0, %v1688
        %v1690 = vpop.f32.mrb[0].mxu0
        %v1691 = vpop.f32.mrb[0].mxu0
        %v1692 = vadd.f32 0.0, %v1691
        %v1693 = vpop.f32.mrb[0].mxu0
        %1694 = vmatprep.mubr.bf16.mxu0 0
        %1695 = vmatmul.mubr.bf16.gmra.mrb[0].mxu0 %v1218
        %v1696 = vpop.f32.mrb[0].mxu0
        %v1697 = vadd.f32 0.0, %v1696
        %v1698 = vpop.f32.mrb[0].mxu0
        %v1699 = vpop.f32.mrb[0].mxu0
        %v1700 = vadd.f32 0.0, %v1699
        %v1701 = vpop.f32.mrb[0].mxu0
        %1702 = vmatprep.mubr.bf16.mxu0 0
        %1703 = vmatmul.mubr.bf16.gmra.mrb[0].mxu0 %v1219
        %v1704 = vpop.f32.mrb[0].mxu0
        %v1705 = vadd.f32 0.0, %v1704
        %v1706 = vpop.f32.mrb[0].mxu0
        %v1707 = vpop.f32.mrb[0].mxu0
        %v1708 = vadd.f32 0.0, %v1707
        %v1709 = vpop.f32.mrb[0].mxu0
        %1710 = vmatprep.mubr.bf16.mxu0 0
        %1711 = vmatmul.mubr.bf16.gmra.mrb[0].mxu0 %v1220
        %v1712 = vpop.f32.mrb[0].mxu0
        %v1713 = vadd.f32 0.0, %v1712
        %v1714 = vpop.f32.mrb[0].mxu0
        %v1715 = vpop.f32.mrb[0].mxu0
        %v1716 = vadd.f32 0.0, %v1715
        %v1717 = vpop.f32.mrb[0].mxu0
        %1718 = vdwg.mxu0
        %v1719 = vpack.c.bf16 %v1404, %v1400
        %v1720 = vpack.c.bf16 %v1414, %v1410
        %v1721 = vpack.c.bf16 %v1424, %v1420
        %v1722 = vpack.c.bf16 %v1434, %v1430
        %v1723 = vpack.c.bf16 %v1444, %v1440
        %v1724 = vpack.c.bf16 %v1454, %v1450
        %v1725 = vpack.c.bf16 %v1464, %v1460
        %v1726 = vpack.c.bf16 %v1474, %v1470
        %v1727 = vpack.c.bf16 %v1484, %v1480
        %v1728 = vpack.c.bf16 %v1494, %v1490
        %v1729 = vpack.c.bf16 %v1504, %v1500
        %v1730 = vpack.c.bf16 %v1514, %v1510
        %v1731 = vpack.c.bf16 %v1524, %v1520
        %v1732 = vpack.c.bf16 %v1534, %v1530
        %v1733 = vpack.c.bf16 %v1544, %v1540
        %v1734 = vpack.c.bf16 %v1554, %v1550
        %v1751 = vunpack.c.l.b16 %v1719
        %v1752 = vunpack.c.h.b16 %v1719
        %v1753 = vunpack.c.l.b16 %v1720
        %v1754 = vunpack.c.h.b16 %v1720
        %v1755 = vunpack.c.l.b16 %v1721
        %v1756 = vunpack.c.h.b16 %v1721
        %v1757 = vunpack.c.l.b16 %v1722
        %v1758 = vunpack.c.h.b16 %v1722
        %v1759 = vunpack.c.l.b16 %v1723
        %v1760 = vunpack.c.h.b16 %v1723
        %v1761 = vunpack.c.l.b16 %v1724
        %v1762 = vunpack.c.h.b16 %v1724
        %v1763 = vunpack.c.l.b16 %v1725
        %v1764 = vunpack.c.h.b16 %v1725
        %v1765 = vunpack.c.l.b16 %v1726
        %v1766 = vunpack.c.h.b16 %v1726
        %v1767 = vunpack.c.l.b16 %v1727
        %v1768 = vunpack.c.h.b16 %v1727
        %v1769 = vunpack.c.l.b16 %v1728
        %v1770 = vunpack.c.h.b16 %v1728
        %v1771 = vunpack.c.l.b16 %v1729
        %v1772 = vunpack.c.h.b16 %v1729
        %v1773 = vunpack.c.l.b16 %v1730
        %v1774 = vunpack.c.h.b16 %v1730
        %v1775 = vunpack.c.l.b16 %v1731
        %v1776 = vunpack.c.h.b16 %v1731
        %v1777 = vunpack.c.l.b16 %v1732
        %v1778 = vunpack.c.h.b16 %v1732
        %v1779 = vunpack.c.l.b16 %v1733
        %v1780 = vunpack.c.h.b16 %v1733
        %v1781 = vunpack.c.l.b16 %v1734
        %v1782 = vunpack.c.h.b16 %v1734
        %v1783 = vpack.c.b16 %v1751, %v1751
        %v1784 = vpack.c.b16 %v1752, %v1752
        %v1785 = vpack.c.b16 %v1753, %v1753
        %v1786 = vpack.c.b16 %v1754, %v1754
        %v1787 = vpack.c.b16 %v1755, %v1755
        %v1788 = vpack.c.b16 %v1756, %v1756
        %v1789 = vpack.c.b16 %v1757, %v1757
        %v1790 = vpack.c.b16 %v1758, %v1758
        %v1791 = vpack.c.b16 %v1759, %v1759
        %v1792 = vpack.c.b16 %v1760, %v1760
        %v1793 = vpack.c.b16 %v1761, %v1761
        %v1794 = vpack.c.b16 %v1762, %v1762
        %v1795 = vpack.c.b16 %v1763, %v1763
        %v1796 = vpack.c.b16 %v1764, %v1764
        %v1797 = vpack.c.b16 %v1765, %v1765
        %v1798 = vpack.c.b16 %v1766, %v1766
        %v1799 = vpack.c.b16 %v1767, %v1767
        %v1800 = vpack.c.b16 %v1768, %v1768
        %v1801 = vpack.c.b16 %v1769, %v1769
        %v1802 = vpack.c.b16 %v1770, %v1770
        %v1803 = vpack.c.b16 %v1771, %v1771
        %v1804 = vpack.c.b16 %v1772, %v1772
        %v1805 = vpack.c.b16 %v1773, %v1773
        %v1806 = vpack.c.b16 %v1774, %v1774
        %v1807 = vpack.c.b16 %v1775, %v1775
        %v1808 = vpack.c.b16 %v1776, %v1776
        %v1809 = vpack.c.b16 %v1777, %v1777
        %v1810 = vpack.c.b16 %v1778, %v1778
        %v1811 = vpack.c.b16 %v1779, %v1779
        %v1812 = vpack.c.b16 %v1780, %v1780
        %v1813 = vpack.c.b16 %v1781, %v1781
        %v1814 = vpack.c.b16 %v1782, %v1782
        %s1847 = scalar_lea.vmem %s241, 128 [#allocation5]
        %1848 = vst [vmem:[%s1847] sm:$0xf] %v1783
        %1849 = vst [vmem:[%s1847 + $0x4] sm:$0xf] %v1784
        %1850 = vst [vmem:[%s1847 + $0x8] sm:$0xf] %v1785
        %1851 = vst [vmem:[%s1847 + $0xc] sm:$0xf] %v1786
        %1852 = vst [vmem:[%s1847 + $0x10] sm:$0xf] %v1787
        %1853 = vst [vmem:[%s1847 + $0x14] sm:$0xf] %v1788
        %1854 = vst [vmem:[%s1847 + $0x18] sm:$0xf] %v1789
        %1855 = vst [vmem:[%s1847 + $0x1c] sm:$0xf] %v1790
        %1856 = vst [vmem:[%s1847 + $0x20] sm:$0xf] %v1791
        %1857 = vst [vmem:[%s1847 + $0x24] sm:$0xf] %v1792
        %1858 = vst [vmem:[%s1847 + $0x28] sm:$0xf] %v1793
        %1859 = vst [vmem:[%s1847 + $0x2c] sm:$0xf] %v1794
        %1860 = vst [vmem:[%s1847 + $0x30] sm:$0xf] %v1795
        %1861 = vst [vmem:[%s1847 + $0x34] sm:$0xf] %v1796
        %1862 = vst [vmem:[%s1847 + $0x38] sm:$0xf] %v1797
        %1863 = vst [vmem:[%s1847 + $0x3c] sm:$0xf] %v1798
        %1864 = vst [vmem:[%s1847 + $0x40] sm:$0xf] %v1799
        %1865 = vst [vmem:[%s1847 + $0x44] sm:$0xf] %v1800
        %1866 = vst [vmem:[%s1847 + $0x48] sm:$0xf] %v1801
        %1867 = vst [vmem:[%s1847 + $0x4c] sm:$0xf] %v1802
        %1868 = vst [vmem:[%s1847 + $0x50] sm:$0xf] %v1803
        %1869 = vst [vmem:[%s1847 + $0x54] sm:$0xf] %v1804
        %1870 = vst [vmem:[%s1847 + $0x58] sm:$0xf] %v1805
        %1871 = vst [vmem:[%s1847 + $0x5c] sm:$0xf] %v1806
        %1872 = vst [vmem:[%s1847 + $0x60] sm:$0xf] %v1807
        %1873 = vst [vmem:[%s1847 + $0x64] sm:$0xf] %v1808
        %1874 = vst [vmem:[%s1847 + $0x68] sm:$0xf] %v1809
        %1875 = vst [vmem:[%s1847 + $0x6c] sm:$0xf] %v1810
        %1876 = vst [vmem:[%s1847 + $0x70] sm:$0xf] %v1811
        %1877 = vst [vmem:[%s1847 + $0x74] sm:$0xf] %v1812
        %1878 = vst [vmem:[%s1847 + $0x78] sm:$0xf] %v1813
        %1879 = vst [vmem:[%s1847 + $0x7c] sm:$0xf] %v1814
        %v1880 = vmax.f32 %v599, %v1402
        %v1881 = vmax.f32 %v790, %v1593
        %v1882 = vmax.f32 %v603, %v1406
        %v1883 = vmax.f32 %v793, %v1596
        %v1884 = vmax.f32 %v609, %v1412
        %v1885 = vmax.f32 %v798, %v1601
        %v1886 = vmax.f32 %v613, %v1416
        %v1887 = vmax.f32 %v801, %v1604
        %v1888 = vmax.f32 %v619, %v1422
        %v1889 = vmax.f32 %v806, %v1609
        %v1890 = vmax.f32 %v623, %v1426
        %v1891 = vmax.f32 %v809, %v1612
        %v1892 = vmax.f32 %v629, %v1432
        %v1893 = vmax.f32 %v814, %v1617
        %v1894 = vmax.f32 %v633, %v1436
        %v1895 = vmax.f32 %v817, %v1620
        %v1896 = vmax.f32 %v639, %v1442
        %v1897 = vmax.f32 %v822, %v1625
        %v1898 = vmax.f32 %v643, %v1446
        %v1899 = vmax.f32 %v825, %v1628
        %v1900 = vmax.f32 %v649, %v1452
        %v1901 = vmax.f32 %v830, %v1633
        %v1902 = vmax.f32 %v653, %v1456
        %v1903 = vmax.f32 %v833, %v1636
        %v1904 = vmax.f32 %v659, %v1462
        %v1905 = vmax.f32 %v838, %v1641
        %v1906 = vmax.f32 %v663, %v1466
        %v1907 = vmax.f32 %v841, %v1644
        %v1908 = vmax.f32 %v669, %v1472
        %v1909 = vmax.f32 %v846, %v1649
        %v1910 = vmax.f32 %v673, %v1476
        %v1911 = vmax.f32 %v849, %v1652
        %v1912 = vmax.f32 %v679, %v1482
        %v1913 = vmax.f32 %v854, %v1657
        %v1914 = vmax.f32 %v683, %v1486
        %v1915 = vmax.f32 %v857, %v1660
        %v1916 = vmax.f32 %v689, %v1492
        %v1917 = vmax.f32 %v862, %v1665
        %v1918 = vmax.f32 %v693, %v1496
        %v1919 = vmax.f32 %v865, %v1668
        %v1920 = vmax.f32 %v699, %v1502
        %v1921 = vmax.f32 %v870, %v1673
        %v1922 = vmax.f32 %v703, %v1506
        %v1923 = vmax.f32 %v873, %v1676
        %v1924 = vmax.f32 %v709, %v1512
        %v1925 = vmax.f32 %v878, %v1681
        %v1926 = vmax.f32 %v713, %v1516
        %v1927 = vmax.f32 %v881, %v1684
        %v1928 = vmax.f32 %v719, %v1522
        %v1929 = vmax.f32 %v886, %v1689
        %v1930 = vmax.f32 %v723, %v1526
        %v1931 = vmax.f32 %v889, %v1692
        %v1932 = vmax.f32 %v729, %v1532
        %v1933 = vmax.f32 %v894, %v1697
        %v1934 = vmax.f32 %v733, %v1536
        %v1935 = vmax.f32 %v897, %v1700
        %v1936 = vmax.f32 %v739, %v1542
        %v1937 = vmax.f32 %v902, %v1705
        %v1938 = vmax.f32 %v743, %v1546
        %v1939 = vmax.f32 %v905, %v1708
        %v1940 = vmax.f32 %v749, %v1552
        %v1941 = vmax.f32 %v910, %v1713
        %v1942 = vmax.f32 %v753, %v1556
        %v1943 = vmax.f32 %v913, %v1716
        %s1944 = scalar_lea.vmem %s221, 256 [#allocation2]
        %v1945 = vld [vmem:[%s1944] sm:$0xf]
        %v1946 = vld [vmem:[%s1944 + $0x4] sm:$0xf]
        %v1947 = vld [vmem:[%s1944 + $0x8] sm:$0xf]
        %v1948 = vld [vmem:[%s1944 + $0xc] sm:$0xf]
        %v1949 = vld [vmem:[%s1944 + $0x10] sm:$0xf]
        %v1950 = vld [vmem:[%s1944 + $0x14] sm:$0xf]
        %v1951 = vld [vmem:[%s1944 + $0x18] sm:$0xf]
        %v1952 = vld [vmem:[%s1944 + $0x1c] sm:$0xf]
        %v1953 = vld [vmem:[%s1944 + $0x20] sm:$0xf]
        %v1954 = vld [vmem:[%s1944 + $0x24] sm:$0xf]
        %v1955 = vld [vmem:[%s1944 + $0x28] sm:$0xf]
        %v1956 = vld [vmem:[%s1944 + $0x2c] sm:$0xf]
        %v1957 = vld [vmem:[%s1944 + $0x30] sm:$0xf]
        %v1958 = vld [vmem:[%s1944 + $0x34] sm:$0xf]
        %v1959 = vld [vmem:[%s1944 + $0x38] sm:$0xf]
        %v1960 = vld [vmem:[%s1944 + $0x3c] sm:$0xf]
        %v1961 = vld [vmem:[%s1944 + $0x40] sm:$0xf]
        %v1962 = vld [vmem:[%s1944 + $0x44] sm:$0xf]
        %v1963 = vld [vmem:[%s1944 + $0x48] sm:$0xf]
        %v1964 = vld [vmem:[%s1944 + $0x4c] sm:$0xf]
        %v1965 = vld [vmem:[%s1944 + $0x50] sm:$0xf]
        %v1966 = vld [vmem:[%s1944 + $0x54] sm:$0xf]
        %v1967 = vld [vmem:[%s1944 + $0x58] sm:$0xf]
        %v1968 = vld [vmem:[%s1944 + $0x5c] sm:$0xf]
        %v1969 = vld [vmem:[%s1944 + $0x60] sm:$0xf]
        %v1970 = vld [vmem:[%s1944 + $0x64] sm:$0xf]
        %v1971 = vld [vmem:[%s1944 + $0x68] sm:$0xf]
        %v1972 = vld [vmem:[%s1944 + $0x6c] sm:$0xf]
        %v1973 = vld [vmem:[%s1944 + $0x70] sm:$0xf]
        %v1974 = vld [vmem:[%s1944 + $0x74] sm:$0xf]
        %v1975 = vld [vmem:[%s1944 + $0x78] sm:$0xf]
        %v1976 = vld [vmem:[%s1944 + $0x7c] sm:$0xf]
        %v1977 = vld [vmem:[%s1] sm:$0xff]
        %v1978 = vld [vmem:[%s1 + $0x8] sm:$0xf]
        %v1979 = vld [vmem:[%s1 + $0xc] sm:$0xff]
        %v1980 = vld [vmem:[%s1 + $0x14] sm:$0xf]
        %v1981 = vld [vmem:[%s1 + $0x18] sm:$0xff]
        %v1982 = vld [vmem:[%s1 + $0x20] sm:$0xf]
        %v1983 = vld [vmem:[%s1 + $0x24] sm:$0xff]
        %v1984 = vld [vmem:[%s1 + $0x2c] sm:$0xf]
        %v1985 = vld [vmem:[%s1 + $0x30] sm:$0xff]
        %v1986 = vld [vmem:[%s1 + $0x38] sm:$0xf]
        %v1987 = vld [vmem:[%s1 + $0x3c] sm:$0xff]
        %v1988 = vld [vmem:[%s1 + $0x44] sm:$0xf]
        %v1989 = vld [vmem:[%s1 + $0x48] sm:$0xff]
        %v1990 = vld [vmem:[%s1 + $0x50] sm:$0xf]
        %v1991 = vld [vmem:[%s1 + $0x54] sm:$0xff]
        %v1992 = vld [vmem:[%s1 + $0x5c] sm:$0xf]
        %v1993 = vld [vmem:[%s1 + $0x60] sm:$0xff]
        %v1994 = vld [vmem:[%s1 + $0x68] sm:$0xf]
        %v1995 = vld [vmem:[%s1 + $0x6c] sm:$0xff]
        %v1996 = vld [vmem:[%s1 + $0x74] sm:$0xf]
        %v1997 = vld [vmem:[%s1 + $0x78] sm:$0xff]
        %v1998 = vld [vmem:[%s1 + $0x80] sm:$0xf]
        %v1999 = vld [vmem:[%s1 + $0x84] sm:$0xff]
        %v2000 = vld [vmem:[%s1 + $0x8c] sm:$0xf]
        %v2001 = vld [vmem:[%s1 + $0x90] sm:$0xff]
        %v2002 = vld [vmem:[%s1 + $0x98] sm:$0xf]
        %v2003 = vld [vmem:[%s1 + $0x9c] sm:$0xff]
        %v2004 = vld [vmem:[%s1 + $0xa4] sm:$0xf]
        %v2005 = vld [vmem:[%s1 + $0xa8] sm:$0xff]
        %v2006 = vld [vmem:[%s1 + $0xb0] sm:$0xf]
        %v2007 = vld [vmem:[%s1 + $0xb4] sm:$0xff]
        %v2008 = vld [vmem:[%s1 + $0xbc] sm:$0xf]
        %v2041 = vunpack.c.l.b16 %v1945
        %v2042 = vunpack.c.l.b16 %v1946
        %v2043 = vunpack.c.l.b16 %v1947
        %v2044 = vunpack.c.l.b16 %v1948
        %v2045 = vunpack.c.l.b16 %v1949
        %v2046 = vunpack.c.l.b16 %v1950
        %v2047 = vunpack.c.l.b16 %v1951
        %v2048 = vunpack.c.l.b16 %v1952
        %v2049 = vunpack.c.l.b16 %v1953
        %v2050 = vunpack.c.l.b16 %v1954
        %v2051 = vunpack.c.l.b16 %v1955
        %v2052 = vunpack.c.l.b16 %v1956
        %v2053 = vunpack.c.l.b16 %v1957
        %v2054 = vunpack.c.l.b16 %v1958
        %v2055 = vunpack.c.l.b16 %v1959
        %v2056 = vunpack.c.l.b16 %v1960
        %v2057 = vunpack.c.l.b16 %v1961
        %v2058 = vunpack.c.l.b16 %v1962
        %v2059 = vunpack.c.l.b16 %v1963
        %v2060 = vunpack.c.l.b16 %v1964
        %v2061 = vunpack.c.l.b16 %v1965
        %v2062 = vunpack.c.l.b16 %v1966
        %v2063 = vunpack.c.l.b16 %v1967
        %v2064 = vunpack.c.l.b16 %v1968
        %v2065 = vunpack.c.l.b16 %v1969
        %v2066 = vunpack.c.l.b16 %v1970
        %v2067 = vunpack.c.l.b16 %v1971
        %v2068 = vunpack.c.l.b16 %v1972
        %v2069 = vunpack.c.l.b16 %v1973
        %v2070 = vunpack.c.l.b16 %v1974
        %v2071 = vunpack.c.l.b16 %v1975
        %v2072 = vunpack.c.l.b16 %v1976
        %v2073 = vpack.c.b16 %v2042, %v2041
        %v2074 = vpack.c.b16 %v2044, %v2043
        %v2075 = vpack.c.b16 %v2046, %v2045
        %v2076 = vpack.c.b16 %v2048, %v2047
        %v2077 = vpack.c.b16 %v2050, %v2049
        %v2078 = vpack.c.b16 %v2052, %v2051
        %v2079 = vpack.c.b16 %v2054, %v2053
        %v2080 = vpack.c.b16 %v2056, %v2055
        %v2081 = vpack.c.b16 %v2058, %v2057
        %v2082 = vpack.c.b16 %v2060, %v2059
        %v2083 = vpack.c.b16 %v2062, %v2061
        %v2084 = vpack.c.b16 %v2064, %v2063
        %v2085 = vpack.c.b16 %v2066, %v2065
        %v2086 = vpack.c.b16 %v2068, %v2067
        %v2087 = vpack.c.b16 %v2070, %v2069
        %v2088 = vpack.c.b16 %v2072, %v2071
        %v2137 = vunpack.c.l.b16 %v1977
        %v2138 = vunpack.c.h.b16 %v1977
        %v2139 = vunpack.c.l.b16 %v1978
        %v2140 = vunpack.c.l.b16 %v1979
        %v2141 = vunpack.c.h.b16 %v1979
        %v2142 = vunpack.c.l.b16 %v1980
        %v2143 = vunpack.c.l.b16 %v1981
        %v2144 = vunpack.c.h.b16 %v1981
        %v2145 = vunpack.c.l.b16 %v1982
        %v2146 = vunpack.c.l.b16 %v1983
        %v2147 = vunpack.c.h.b16 %v1983
        %v2148 = vunpack.c.l.b16 %v1984
        %v2149 = vunpack.c.l.b16 %v1985
        %v2150 = vunpack.c.h.b16 %v1985
        %v2151 = vunpack.c.l.b16 %v1986
        %v2152 = vunpack.c.l.b16 %v1987
        %v2153 = vunpack.c.h.b16 %v1987
        %v2154 = vunpack.c.l.b16 %v1988
        %v2155 = vunpack.c.l.b16 %v1989
        %v2156 = vunpack.c.h.b16 %v1989
        %v2157 = vunpack.c.l.b16 %v1990
        %v2158 = vunpack.c.l.b16 %v1991
        %v2159 = vunpack.c.h.b16 %v1991
        %v2160 = vunpack.c.l.b16 %v1992
        %v2161 = vunpack.c.l.b16 %v1993
        %v2162 = vunpack.c.h.b16 %v1993
        %v2163 = vunpack.c.l.b16 %v1994
        %v2164 = vunpack.c.l.b16 %v1995
        %v2165 = vunpack.c.h.b16 %v1995
        %v2166 = vunpack.c.l.b16 %v1996
        %v2167 = vunpack.c.l.b16 %v1997
        %v2168 = vunpack.c.h.b16 %v1997
        %v2169 = vunpack.c.l.b16 %v1998
        %v2170 = vunpack.c.l.b16 %v1999
        %v2171 = vunpack.c.h.b16 %v1999
        %v2172 = vunpack.c.l.b16 %v2000
        %v2173 = vunpack.c.l.b16 %v2001
        %v2174 = vunpack.c.h.b16 %v2001
        %v2175 = vunpack.c.l.b16 %v2002
        %v2176 = vunpack.c.l.b16 %v2003
        %v2177 = vunpack.c.h.b16 %v2003
        %v2178 = vunpack.c.l.b16 %v2004
        %v2179 = vunpack.c.l.b16 %v2005
        %v2180 = vunpack.c.h.b16 %v2005
        %v2181 = vunpack.c.l.b16 %v2006
        %v2182 = vunpack.c.l.b16 %v2007
        %v2183 = vunpack.c.h.b16 %v2007
        %v2184 = vunpack.c.l.b16 %v2008
        %v2185 = vpack.c.b16 %v2140, %v2137
        %v2186 = vpack.c.b16 %v2141, %v2138
        %v2187 = vpack.c.b16 %v2142, %v2139
        %v2188 = vpack.c.b16 %v2146, %v2143
        %v2189 = vpack.c.b16 %v2147, %v2144
        %v2190 = vpack.c.b16 %v2148, %v2145
        %v2191 = vpack.c.b16 %v2152, %v2149
        %v2192 = vpack.c.b16 %v2153, %v2150
        %v2193 = vpack.c.b16 %v2154, %v2151
        %v2194 = vpack.c.b16 %v2158, %v2155
        %v2195 = vpack.c.b16 %v2159, %v2156
        %v2196 = vpack.c.b16 %v2160, %v2157
        %v2197 = vpack.c.b16 %v2164, %v2161
        %v2198 = vpack.c.b16 %v2165, %v2162
        %v2199 = vpack.c.b16 %v2166, %v2163
        %v2200 = vpack.c.b16 %v2170, %v2167
        %v2201 = vpack.c.b16 %v2171, %v2168
        %v2202 = vpack.c.b16 %v2172, %v2169
        %v2203 = vpack.c.b16 %v2176, %v2173
        %v2204 = vpack.c.b16 %v2177, %v2174
        %v2205 = vpack.c.b16 %v2178, %v2175
        %v2206 = vpack.c.b16 %v2182, %v2179
        %v2207 = vpack.c.b16 %v2183, %v2180
        %v2208 = vpack.c.b16 %v2184, %v2181
        %2233 = vmatprep.subr.bf16.mxu0 %v2186
        %2234 = vmatpush1.bf16.msra.mxu0 %v2185
        %2235 = vmatprep.subr.bf16.mxu0 %v2189
        %2236 = vmatpush1.bf16.msra.mxu0 %v2188
        %2237 = vmatprep.subr.bf16.mxu0 %v2192
        %2238 = vmatpush1.bf16.msra.mxu0 %v2191
        %2239 = vmatprep.subr.bf16.mxu0 %v2195
        %2240 = vmatpush1.bf16.msra.mxu0 %v2194
        %2241 = vmatprep.subr.bf16.mxu0 %v2198
        %2242 = vmatpush1.bf16.msra.mxu0 %v2197
        %2243 = vmatprep.subr.bf16.mxu0 %v2201
        %2244 = vmatpush1.bf16.msra.mxu0 %v2200
        %2245 = vmatprep.subr.bf16.mxu0 %v2204
        %2246 = vmatpush1.bf16.msra.mxu0 %v2203
        %2247 = vmatprep.subr.bf16.mxu0 %v2207
        %2248 = vmatpush1.bf16.msra.mxu0 %v2206
        %2249 = vmatprep.subr.bf16.mxu0 0
        %2250 = vmatpush1.bf16.msra.mxu0 0
        %2251 = vmatprep.subr.bf16.mxu0 0
        %2252 = vmatpush1.bf16.msra.mxu0 0
        %2253 = vmatprep.subr.bf16.mxu0 0
        %2254 = vmatpush1.bf16.msra.mxu0 0
        %2255 = vmatprep.subr.bf16.mxu0 0
        %2256 = vmatpush1.bf16.msra.mxu0 0
        %2257 = vmatprep.subr.bf16.mxu0 0
        %2258 = vmatpush1.bf16.msra.mxu0 0
        %2259 = vmatprep.subr.bf16.mxu0 0
        %2260 = vmatpush1.bf16.msra.mxu0 0
        %2261 = vmatprep.subr.bf16.mxu0 0
        %2262 = vmatpush1.bf16.msra.mxu0 0
        %2263 = vmatprep.subr.bf16.mxu0 0
        %2264 = vmatpush1.bf16.msra.mxu0 0
        %2265 = vmatprep.mubr.bf16.mxu0 0
        %2266 = vmatmul.mubr.bf16.gmra.mrb[0].mxu0 %v2073
        %v2267 = vpop.f32.mrb[0].mxu0
        %v2268 = vadd.f32 0.0, %v2267
        %v2269 = vpop.f32.mrb[0].mxu0
        %v2270 = vadd.f32 0.0, %v2269
        %v2271 = vpop.f32.mrb[0].mxu0
        %v2272 = vadd.f32 0.0, %v2271
        %v2273 = vpop.f32.mrb[0].mxu0
        %v2274 = vadd.f32 0.0, %v2273
        %2275 = vmatprep.mubr.bf16.mxu0 0
        %2276 = vmatmul.mubr.bf16.gmra.mrb[0].mxu0 %v2074
        %v2277 = vpop.f32.mrb[0].mxu0
        %v2278 = vadd.f32 0.0, %v2277
        %v2279 = vpop.f32.mrb[0].mxu0
        %v2280 = vadd.f32 0.0, %v2279
        %v2281 = vpop.f32.mrb[0].mxu0
        %v2282 = vadd.f32 0.0, %v2281
        %v2283 = vpop.f32.mrb[0].mxu0
        %v2284 = vadd.f32 0.0, %v2283
        %2285 = vmatprep.mubr.bf16.mxu0 0
        %2286 = vmatmul.mubr.bf16.gmra.mrb[0].mxu0 %v2075
        %v2287 = vpop.f32.mrb[0].mxu0
        %v2288 = vadd.f32 0.0, %v2287
        %v2289 = vpop.f32.mrb[0].mxu0
        %v2290 = vadd.f32 0.0, %v2289
        %v2291 = vpop.f32.mrb[0].mxu0
        %v2292 = vadd.f32 0.0, %v2291
        %v2293 = vpop.f32.mrb[0].mxu0
        %v2294 = vadd.f32 0.0, %v2293
        %2295 = vmatprep.mubr.bf16.mxu0 0
        %2296 = vmatmul.mubr.bf16.gmra.mrb[0].mxu0 %v2076
        %v2297 = vpop.f32.mrb[0].mxu0
        %v2298 = vadd.f32 0.0, %v2297
        %v2299 = vpop.f32.mrb[0].mxu0
        %v2300 = vadd.f32 0.0, %v2299
        %v2301 = vpop.f32.mrb[0].mxu0
        %v2302 = vadd.f32 0.0, %v2301
        %v2303 = vpop.f32.mrb[0].mxu0
        %v2304 = vadd.f32 0.0, %v2303
        %2305 = vmatprep.mubr.bf16.mxu0 0
        %2306 = vmatmul.mubr.bf16.gmra.mrb[0].mxu0 %v2077
        %v2307 = vpop.f32.mrb[0].mxu0
        %v2308 = vadd.f32 0.0, %v2307
        %v2309 = vpop.f32.mrb[0].mxu0
        %v2310 = vadd.f32 0.0, %v2309
        %v2311 = vpop.f32.mrb[0].mxu0
        %v2312 = vadd.f32 0.0, %v2311
        %v2313 = vpop.f32.mrb[0].mxu0
        %v2314 = vadd.f32 0.0, %v2313
        %2315 = vmatprep.mubr.bf16.mxu0 0
        %2316 = vmatmul.mubr.bf16.gmra.mrb[0].mxu0 %v2078
        %v2317 = vpop.f32.mrb[0].mxu0
        %v2318 = vadd.f32 0.0, %v2317
        %v2319 = vpop.f32.mrb[0].mxu0
        %v2320 = vadd.f32 0.0, %v2319
        %v2321 = vpop.f32.mrb[0].mxu0
        %v2322 = vadd.f32 0.0, %v2321
        %v2323 = vpop.f32.mrb[0].mxu0
        %v2324 = vadd.f32 0.0, %v2323
        %2325 = vmatprep.mubr.bf16.mxu0 0
        %2326 = vmatmul.mubr.bf16.gmra.mrb[0].mxu0 %v2079
        %v2327 = vpop.f32.mrb[0].mxu0
        %v2328 = vadd.f32 0.0, %v2327
        %v2329 = vpop.f32.mrb[0].mxu0
        %v2330 = vadd.f32 0.0, %v2329
        %v2331 = vpop.f32.mrb[0].mxu0
        %v2332 = vadd.f32 0.0, %v2331
        %v2333 = vpop.f32.mrb[0].mxu0
        %v2334 = vadd.f32 0.0, %v2333
        %2335 = vmatprep.mubr.bf16.mxu0 0
        %2336 = vmatmul.mubr.bf16.gmra.mrb[0].mxu0 %v2080
        %v2337 = vpop.f32.mrb[0].mxu0
        %v2338 = vadd.f32 0.0, %v2337
        %v2339 = vpop.f32.mrb[0].mxu0
        %v2340 = vadd.f32 0.0, %v2339
        %v2341 = vpop.f32.mrb[0].mxu0
        %v2342 = vadd.f32 0.0, %v2341
        %v2343 = vpop.f32.mrb[0].mxu0
        %v2344 = vadd.f32 0.0, %v2343
        %2345 = vmatprep.mubr.bf16.mxu0 0
        %2346 = vmatmul.mubr.bf16.gmra.mrb[0].mxu0 %v2081
        %v2347 = vpop.f32.mrb[0].mxu0
        %v2348 = vadd.f32 0.0, %v2347
        %v2349 = vpop.f32.mrb[0].mxu0
        %v2350 = vadd.f32 0.0, %v2349
        %v2351 = vpop.f32.mrb[0].mxu0
        %v2352 = vadd.f32 0.0, %v2351
        %v2353 = vpop.f32.mrb[0].mxu0
        %v2354 = vadd.f32 0.0, %v2353
        %2355 = vmatprep.mubr.bf16.mxu0 0
        %2356 = vmatmul.mubr.bf16.gmra.mrb[0].mxu0 %v2082
        %v2357 = vpop.f32.mrb[0].mxu0
        %v2358 = vadd.f32 0.0, %v2357
        %v2359 = vpop.f32.mrb[0].mxu0
        %v2360 = vadd.f32 0.0, %v2359
        %v2361 = vpop.f32.mrb[0].mxu0
        %v2362 = vadd.f32 0.0, %v2361
        %v2363 = vpop.f32.mrb[0].mxu0
        %v2364 = vadd.f32 0.0, %v2363
        %2365 = vmatprep.mubr.bf16.mxu0 0
        %2366 = vmatmul.mubr.bf16.gmra.mrb[0].mxu0 %v2083
        %v2367 = vpop.f32.mrb[0].mxu0
        %v2368 = vadd.f32 0.0, %v2367
        %v2369 = vpop.f32.mrb[0].mxu0
        %v2370 = vadd.f32 0.0, %v2369
        %v2371 = vpop.f32.mrb[0].mxu0
        %v2372 = vadd.f32 0.0, %v2371
        %v2373 = vpop.f32.mrb[0].mxu0
        %v2374 = vadd.f32 0.0, %v2373
        %2375 = vmatprep.mubr.bf16.mxu0 0
        %2376 = vmatmul.mubr.bf16.gmra.mrb[0].mxu0 %v2084
        %v2377 = vpop.f32.mrb[0].mxu0
        %v2378 = vadd.f32 0.0, %v2377
        %v2379 = vpop.f32.mrb[0].mxu0
        %v2380 = vadd.f32 0.0, %v2379
        %v2381 = vpop.f32.mrb[0].mxu0
        %v2382 = vadd.f32 0.0, %v2381
        %v2383 = vpop.f32.mrb[0].mxu0
        %v2384 = vadd.f32 0.0, %v2383
        %2385 = vmatprep.mubr.bf16.mxu0 0
        %2386 = vmatmul.mubr.bf16.gmra.mrb[0].mxu0 %v2085
        %v2387 = vpop.f32.mrb[0].mxu0
        %v2388 = vadd.f32 0.0, %v2387
        %v2389 = vpop.f32.mrb[0].mxu0
        %v2390 = vadd.f32 0.0, %v2389
        %v2391 = vpop.f32.mrb[0].mxu0
        %v2392 = vadd.f32 0.0, %v2391
        %v2393 = vpop.f32.mrb[0].mxu0
        %v2394 = vadd.f32 0.0, %v2393
        %2395 = vmatprep.mubr.bf16.mxu0 0
        %2396 = vmatmul.mubr.bf16.gmra.mrb[0].mxu0 %v2086
        %v2397 = vpop.f32.mrb[0].mxu0
        %v2398 = vadd.f32 0.0, %v2397
        %v2399 = vpop.f32.mrb[0].mxu0
        %v2400 = vadd.f32 0.0, %v2399
        %v2401 = vpop.f32.mrb[0].mxu0
        %v2402 = vadd.f32 0.0, %v2401
        %v2403 = vpop.f32.mrb[0].mxu0
        %v2404 = vadd.f32 0.0, %v2403
        %2405 = vmatprep.mubr.bf16.mxu0 0
        %2406 = vmatmul.mubr.bf16.gmra.mrb[0].mxu0 %v2087
        %v2407 = vpop.f32.mrb[0].mxu0
        %v2408 = vadd.f32 0.0, %v2407
        %v2409 = vpop.f32.mrb[0].mxu0
        %v2410 = vadd.f32 0.0, %v2409
        %v2411 = vpop.f32.mrb[0].mxu0
        %v2412 = vadd.f32 0.0, %v2411
        %v2413 = vpop.f32.mrb[0].mxu0
        %v2414 = vadd.f32 0.0, %v2413
        %2415 = vmatprep.mubr.bf16.mxu0 0
        %2416 = vmatmul.mubr.bf16.gmra.mrb[0].mxu0 %v2088
        %v2417 = vpop.f32.mrb[0].mxu0
        %v2418 = vadd.f32 0.0, %v2417
        %v2419 = vpop.f32.mrb[0].mxu0
        %v2420 = vadd.f32 0.0, %v2419
        %v2421 = vpop.f32.mrb[0].mxu0
        %v2422 = vadd.f32 0.0, %v2421
        %v2423 = vpop.f32.mrb[0].mxu0
        %v2424 = vadd.f32 0.0, %v2423
        %2425 = vdwg.mxu0
        %2426 = vmatprep.subr.bf16.mxu0 0
        %2427 = vmatpush1.bf16.msra.mxu0 %v2187
        %2428 = vmatprep.subr.bf16.mxu0 0
        %2429 = vmatpush1.bf16.msra.mxu0 %v2190
        %2430 = vmatprep.subr.bf16.mxu0 0
        %2431 = vmatpush1.bf16.msra.mxu0 %v2193
        %2432 = vmatprep.subr.bf16.mxu0 0
        %2433 = vmatpush1.bf16.msra.mxu0 %v2196
        %2434 = vmatprep.subr.bf16.mxu0 0
        %2435 = vmatpush1.bf16.msra.mxu0 %v2199
        %2436 = vmatprep.subr.bf16.mxu0 0
        %2437 = vmatpush1.bf16.msra.mxu0 %v2202
        %2438 = vmatprep.subr.bf16.mxu0 0
        %2439 = vmatpush1.bf16.msra.mxu0 %v2205
        %2440 = vmatprep.subr.bf16.mxu0 0
        %2441 = vmatpush1.bf16.msra.mxu0 %v2208
        %2442 = vmatprep.subr.bf16.mxu0 0
        %2443 = vmatpush1.bf16.msra.mxu0 0
        %2444 = vmatprep.subr.bf16.mxu0 0
        %2445 = vmatpush1.bf16.msra.mxu0 0
        %2446 = vmatprep.subr.bf16.mxu0 0
        %2447 = vmatpush1.bf16.msra.mxu0 0
        %2448 = vmatprep.subr.bf16.mxu0 0
        %2449 = vmatpush1.bf16.msra.mxu0 0
        %2450 = vmatprep.subr.bf16.mxu0 0
        %2451 = vmatpush1.bf16.msra.mxu0 0
        %2452 = vmatprep.subr.bf16.mxu0 0
        %2453 = vmatpush1.bf16.msra.mxu0 0
        %2454 = vmatprep.subr.bf16.mxu0 0
        %2455 = vmatpush1.bf16.msra.mxu0 0
        %2456 = vmatprep.subr.bf16.mxu0 0
        %2457 = vmatpush1.bf16.msra.mxu0 0
        %2458 = vmatprep.mubr.bf16.mxu0 0
        %2459 = vmatmul.mubr.bf16.gmra.mrb[0].mxu0 %v2073
        %v2460 = vpop.f32.mrb[0].mxu0
        %v2461 = vadd.f32 0.0, %v2460
        %v2462 = vpop.f32.mrb[0].mxu0
        %v2463 = vpop.f32.mrb[0].mxu0
        %v2464 = vadd.f32 0.0, %v2463
        %v2465 = vpop.f32.mrb[0].mxu0
        %2466 = vmatprep.mubr.bf16.mxu0 0
        %2467 = vmatmul.mubr.bf16.gmra.mrb[0].mxu0 %v2074
        %v2468 = vpop.f32.mrb[0].mxu0
        %v2469 = vadd.f32 0.0, %v2468
        %v2470 = vpop.f32.mrb[0].mxu0
        %v2471 = vpop.f32.mrb[0].mxu0
        %v2472 = vadd.f32 0.0, %v2471
        %v2473 = vpop.f32.mrb[0].mxu0
        %2474 = vmatprep.mubr.bf16.mxu0 0
        %2475 = vmatmul.mubr.bf16.gmra.mrb[0].mxu0 %v2075
        %v2476 = vpop.f32.mrb[0].mxu0
        %v2477 = vadd.f32 0.0, %v2476
        %v2478 = vpop.f32.mrb[0].mxu0
        %v2479 = vpop.f32.mrb[0].mxu0
        %v2480 = vadd.f32 0.0, %v2479
        %v2481 = vpop.f32.mrb[0].mxu0
        %2482 = vmatprep.mubr.bf16.mxu0 0
        %2483 = vmatmul.mubr.bf16.gmra.mrb[0].mxu0 %v2076
        %v2484 = vpop.f32.mrb[0].mxu0
        %v2485 = vadd.f32 0.0, %v2484
        %v2486 = vpop.f32.mrb[0].mxu0
        %v2487 = vpop.f32.mrb[0].mxu0
        %v2488 = vadd.f32 0.0, %v2487
        %v2489 = vpop.f32.mrb[0].mxu0
        %2490 = vmatprep.mubr.bf16.mxu0 0
        %2491 = vmatmul.mubr.bf16.gmra.mrb[0].mxu0 %v2077
        %v2492 = vpop.f32.mrb[0].mxu0
        %v2493 = vadd.f32 0.0, %v2492
        %v2494 = vpop.f32.mrb[0].mxu0
        %v2495 = vpop.f32.mrb[0].mxu0
        %v2496 = vadd.f32 0.0, %v2495
        %v2497 = vpop.f32.mrb[0].mxu0
        %2498 = vmatprep.mubr.bf16.mxu0 0
        %2499 = vmatmul.mubr.bf16.gmra.mrb[0].mxu0 %v2078
        %v2500 = vpop.f32.mrb[0].mxu0
        %v2501 = vadd.f32 0.0, %v2500
        %v2502 = vpop.f32.mrb[0].mxu0
        %v2503 = vpop.f32.mrb[0].mxu0
        %v2504 = vadd.f32 0.0, %v2503
        %v2505 = vpop.f32.mrb[0].mxu0
        %2506 = vmatprep.mubr.bf16.mxu0 0
        %2507 = vmatmul.mubr.bf16.gmra.mrb[0].mxu0 %v2079
        %v2508 = vpop.f32.mrb[0].mxu0
        %v2509 = vadd.f32 0.0, %v2508
        %v2510 = vpop.f32.mrb[0].mxu0
        %v2511 = vpop.f32.mrb[0].mxu0
        %v2512 = vadd.f32 0.0, %v2511
        %v2513 = vpop.f32.mrb[0].mxu0
        %2514 = vmatprep.mubr.bf16.mxu0 0
        %2515 = vmatmul.mubr.bf16.gmra.mrb[0].mxu0 %v2080
        %v2516 = vpop.f32.mrb[0].mxu0
        %v2517 = vadd.f32 0.0, %v2516
        %v2518 = vpop.f32.mrb[0].mxu0
        %v2519 = vpop.f32.mrb[0].mxu0
        %v2520 = vadd.f32 0.0, %v2519
        %v2521 = vpop.f32.mrb[0].mxu0
        %2522 = vmatprep.mubr.bf16.mxu0 0
        %2523 = vmatmul.mubr.bf16.gmra.mrb[0].mxu0 %v2081
        %v2524 = vpop.f32.mrb[0].mxu0
        %v2525 = vadd.f32 0.0, %v2524
        %v2526 = vpop.f32.mrb[0].mxu0
        %v2527 = vpop.f32.mrb[0].mxu0
        %v2528 = vadd.f32 0.0, %v2527
        %v2529 = vpop.f32.mrb[0].mxu0
        %2530 = vmatprep.mubr.bf16.mxu0 0
        %2531 = vmatmul.mubr.bf16.gmra.mrb[0].mxu0 %v2082
        %v2532 = vpop.f32.mrb[0].mxu0
        %v2533 = vadd.f32 0.0, %v2532
        %v2534 = vpop.f32.mrb[0].mxu0
        %v2535 = vpop.f32.mrb[0].mxu0
        %v2536 = vadd.f32 0.0, %v2535
        %v2537 = vpop.f32.mrb[0].mxu0
        %2538 = vmatprep.mubr.bf16.mxu0 0
        %2539 = vmatmul.mubr.bf16.gmra.mrb[0].mxu0 %v2083
        %v2540 = vpop.f32.mrb[0].mxu0
        %v2541 = vadd.f32 0.0, %v2540
        %v2542 = vpop.f32.mrb[0].mxu0
        %v2543 = vpop.f32.mrb[0].mxu0
        %v2544 = vadd.f32 0.0, %v2543
        %v2545 = vpop.f32.mrb[0].mxu0
        %2546 = vmatprep.mubr.bf16.mxu0 0
        %2547 = vmatmul.mubr.bf16.gmra.mrb[0].mxu0 %v2084
        %v2548 = vpop.f32.mrb[0].mxu0
        %v2549 = vadd.f32 0.0, %v2548
        %v2550 = vpop.f32.mrb[0].mxu0
        %v2551 = vpop.f32.mrb[0].mxu0
        %v2552 = vadd.f32 0.0, %v2551
        %v2553 = vpop.f32.mrb[0].mxu0
        %2554 = vmatprep.mubr.bf16.mxu0 0
        %2555 = vmatmul.mubr.bf16.gmra.mrb[0].mxu0 %v2085
        %v2556 = vpop.f32.mrb[0].mxu0
        %v2557 = vadd.f32 0.0, %v2556
        %v2558 = vpop.f32.mrb[0].mxu0
        %v2559 = vpop.f32.mrb[0].mxu0
        %v2560 = vadd.f32 0.0, %v2559
        %v2561 = vpop.f32.mrb[0].mxu0
        %2562 = vmatprep.mubr.bf16.mxu0 0
        %2563 = vmatmul.mubr.bf16.gmra.mrb[0].mxu0 %v2086
        %v2564 = vpop.f32.mrb[0].mxu0
        %v2565 = vadd.f32 0.0, %v2564
        %v2566 = vpop.f32.mrb[0].mxu0
        %v2567 = vpop.f32.mrb[0].mxu0
        %v2568 = vadd.f32 0.0, %v2567
        %v2569 = vpop.f32.mrb[0].mxu0
        %2570 = vmatprep.mubr.bf16.mxu0 0
        %2571 = vmatmul.mubr.bf16.gmra.mrb[0].mxu0 %v2087
        %v2572 = vpop.f32.mrb[0].mxu0
        %v2573 = vadd.f32 0.0, %v2572
        %v2574 = vpop.f32.mrb[0].mxu0
        %v2575 = vpop.f32.mrb[0].mxu0
        %v2576 = vadd.f32 0.0, %v2575
        %v2577 = vpop.f32.mrb[0].mxu0
        %2578 = vmatprep.mubr.bf16.mxu0 0
        %2579 = vmatmul.mubr.bf16.gmra.mrb[0].mxu0 %v2088
        %v2580 = vpop.f32.mrb[0].mxu0
        %v2581 = vadd.f32 0.0, %v2580
        %v2582 = vpop.f32.mrb[0].mxu0
        %v2583 = vpop.f32.mrb[0].mxu0
        %v2584 = vadd.f32 0.0, %v2583
        %v2585 = vpop.f32.mrb[0].mxu0
        %2586 = vdwg.mxu0
        %v2587 = vpack.c.bf16 %v2272, %v2268
        %v2588 = vpack.c.bf16 %v2282, %v2278
        %v2589 = vpack.c.bf16 %v2292, %v2288
        %v2590 = vpack.c.bf16 %v2302, %v2298
        %v2591 = vpack.c.bf16 %v2312, %v2308
        %v2592 = vpack.c.bf16 %v2322, %v2318
        %v2593 = vpack.c.bf16 %v2332, %v2328
        %v2594 = vpack.c.bf16 %v2342, %v2338
        %v2595 = vpack.c.bf16 %v2352, %v2348
        %v2596 = vpack.c.bf16 %v2362, %v2358
        %v2597 = vpack.c.bf16 %v2372, %v2368
        %v2598 = vpack.c.bf16 %v2382, %v2378
        %v2599 = vpack.c.bf16 %v2392, %v2388
        %v2600 = vpack.c.bf16 %v2402, %v2398
        %v2601 = vpack.c.bf16 %v2412, %v2408
        %v2602 = vpack.c.bf16 %v2422, %v2418
        %v2619 = vunpack.c.l.b16 %v2587
        %v2620 = vunpack.c.h.b16 %v2587
        %v2621 = vunpack.c.l.b16 %v2588
        %v2622 = vunpack.c.h.b16 %v2588
        %v2623 = vunpack.c.l.b16 %v2589
        %v2624 = vunpack.c.h.b16 %v2589
        %v2625 = vunpack.c.l.b16 %v2590
        %v2626 = vunpack.c.h.b16 %v2590
        %v2627 = vunpack.c.l.b16 %v2591
        %v2628 = vunpack.c.h.b16 %v2591
        %v2629 = vunpack.c.l.b16 %v2592
        %v2630 = vunpack.c.h.b16 %v2592
        %v2631 = vunpack.c.l.b16 %v2593
        %v2632 = vunpack.c.h.b16 %v2593
        %v2633 = vunpack.c.l.b16 %v2594
        %v2634 = vunpack.c.h.b16 %v2594
        %v2635 = vunpack.c.l.b16 %v2595
        %v2636 = vunpack.c.h.b16 %v2595
        %v2637 = vunpack.c.l.b16 %v2596
        %v2638 = vunpack.c.h.b16 %v2596
        %v2639 = vunpack.c.l.b16 %v2597
        %v2640 = vunpack.c.h.b16 %v2597
        %v2641 = vunpack.c.l.b16 %v2598
        %v2642 = vunpack.c.h.b16 %v2598
        %v2643 = vunpack.c.l.b16 %v2599
        %v2644 = vunpack.c.h.b16 %v2599
        %v2645 = vunpack.c.l.b16 %v2600
        %v2646 = vunpack.c.h.b16 %v2600
        %v2647 = vunpack.c.l.b16 %v2601
        %v2648 = vunpack.c.h.b16 %v2601
        %v2649 = vunpack.c.l.b16 %v2602
        %v2650 = vunpack.c.h.b16 %v2602
        %v2651 = vpack.c.b16 %v2619, %v2619
        %v2652 = vpack.c.b16 %v2620, %v2620
        %v2653 = vpack.c.b16 %v2621, %v2621
        %v2654 = vpack.c.b16 %v2622, %v2622
        %v2655 = vpack.c.b16 %v2623, %v2623
        %v2656 = vpack.c.b16 %v2624, %v2624
        %v2657 = vpack.c.b16 %v2625, %v2625
        %v2658 = vpack.c.b16 %v2626, %v2626
        %v2659 = vpack.c.b16 %v2627, %v2627
        %v2660 = vpack.c.b16 %v2628, %v2628
        %v2661 = vpack.c.b16 %v2629, %v2629
        %v2662 = vpack.c.b16 %v2630, %v2630
        %v2663 = vpack.c.b16 %v2631, %v2631
        %v2664 = vpack.c.b16 %v2632, %v2632
        %v2665 = vpack.c.b16 %v2633, %v2633
        %v2666 = vpack.c.b16 %v2634, %v2634
        %v2667 = vpack.c.b16 %v2635, %v2635
        %v2668 = vpack.c.b16 %v2636, %v2636
        %v2669 = vpack.c.b16 %v2637, %v2637
        %v2670 = vpack.c.b16 %v2638, %v2638
        %v2671 = vpack.c.b16 %v2639, %v2639
        %v2672 = vpack.c.b16 %v2640, %v2640
        %v2673 = vpack.c.b16 %v2641, %v2641
        %v2674 = vpack.c.b16 %v2642, %v2642
        %v2675 = vpack.c.b16 %v2643, %v2643
        %v2676 = vpack.c.b16 %v2644, %v2644
        %v2677 = vpack.c.b16 %v2645, %v2645
        %v2678 = vpack.c.b16 %v2646, %v2646
        %v2679 = vpack.c.b16 %v2647, %v2647
        %v2680 = vpack.c.b16 %v2648, %v2648
        %v2681 = vpack.c.b16 %v2649, %v2649
        %v2682 = vpack.c.b16 %v2650, %v2650
        %s2715 = scalar_lea.vmem %s241, 256 [#allocation5]
        %2716 = vst [vmem:[%s2715] sm:$0xf] %v2651
        %2717 = vst [vmem:[%s2715 + $0x4] sm:$0xf] %v2652
        %2718 = vst [vmem:[%s2715 + $0x8] sm:$0xf] %v2653
        %2719 = vst [vmem:[%s2715 + $0xc] sm:$0xf] %v2654
        %2720 = vst [vmem:[%s2715 + $0x10] sm:$0xf] %v2655
        %2721 = vst [vmem:[%s2715 + $0x14] sm:$0xf] %v2656
        %2722 = vst [vmem:[%s2715 + $0x18] sm:$0xf] %v2657
        %2723 = vst [vmem:[%s2715 + $0x1c] sm:$0xf] %v2658
        %2724 = vst [vmem:[%s2715 + $0x20] sm:$0xf] %v2659
        %2725 = vst [vmem:[%s2715 + $0x24] sm:$0xf] %v2660
        %2726 = vst [vmem:[%s2715 + $0x28] sm:$0xf] %v2661
        %2727 = vst [vmem:[%s2715 + $0x2c] sm:$0xf] %v2662
        %2728 = vst [vmem:[%s2715 + $0x30] sm:$0xf] %v2663
        %2729 = vst [vmem:[%s2715 + $0x34] sm:$0xf] %v2664
        %2730 = vst [vmem:[%s2715 + $0x38] sm:$0xf] %v2665
        %2731 = vst [vmem:[%s2715 + $0x3c] sm:$0xf] %v2666
        %2732 = vst [vmem:[%s2715 + $0x40] sm:$0xf] %v2667
        %2733 = vst [vmem:[%s2715 + $0x44] sm:$0xf] %v2668
        %2734 = vst [vmem:[%s2715 + $0x48] sm:$0xf] %v2669
        %2735 = vst [vmem:[%s2715 + $0x4c] sm:$0xf] %v2670
        %2736 = vst [vmem:[%s2715 + $0x50] sm:$0xf] %v2671
        %2737 = vst [vmem:[%s2715 + $0x54] sm:$0xf] %v2672
        %2738 = vst [vmem:[%s2715 + $0x58] sm:$0xf] %v2673
        %2739 = vst [vmem:[%s2715 + $0x5c] sm:$0xf] %v2674
        %2740 = vst [vmem:[%s2715 + $0x60] sm:$0xf] %v2675
        %2741 = vst [vmem:[%s2715 + $0x64] sm:$0xf] %v2676
        %2742 = vst [vmem:[%s2715 + $0x68] sm:$0xf] %v2677
        %2743 = vst [vmem:[%s2715 + $0x6c] sm:$0xf] %v2678
        %2744 = vst [vmem:[%s2715 + $0x70] sm:$0xf] %v2679
        %2745 = vst [vmem:[%s2715 + $0x74] sm:$0xf] %v2680
        %2746 = vst [vmem:[%s2715 + $0x78] sm:$0xf] %v2681
        %2747 = vst [vmem:[%s2715 + $0x7c] sm:$0xf] %v2682
        %v2748 = vmax.f32 %v1880, %v2270
        %v2749 = vmax.f32 %v1881, %v2461
        %v2750 = vmax.f32 %v1882, %v2274
        %v2751 = vmax.f32 %v1883, %v2464
        %v2752 = vmax.f32 %v1884, %v2280
        %v2753 = vmax.f32 %v1885, %v2469
        %v2754 = vmax.f32 %v1886, %v2284
        %v2755 = vmax.f32 %v1887, %v2472
        %v2756 = vmax.f32 %v1888, %v2290
        %v2757 = vmax.f32 %v1889, %v2477
        %v2758 = vmax.f32 %v1890, %v2294
        %v2759 = vmax.f32 %v1891, %v2480
        %v2760 = vmax.f32 %v1892, %v2300
        %v2761 = vmax.f32 %v1893, %v2485
        %v2762 = vmax.f32 %v1894, %v2304
        %v2763 = vmax.f32 %v1895, %v2488
        %v2764 = vmax.f32 %v1896, %v2310
        %v2765 = vmax.f32 %v1897, %v2493
        %v2766 = vmax.f32 %v1898, %v2314
        %v2767 = vmax.f32 %v1899, %v2496
        %v2768 = vmax.f32 %v1900, %v2320
        %v2769 = vmax.f32 %v1901, %v2501
        %v2770 = vmax.f32 %v1902, %v2324
        %v2771 = vmax.f32 %v1903, %v2504
        %v2772 = vmax.f32 %v1904, %v2330
        %v2773 = vmax.f32 %v1905, %v2509
        %v2774 = vmax.f32 %v1906, %v2334
        %v2775 = vmax.f32 %v1907, %v2512
        %v2776 = vmax.f32 %v1908, %v2340
        %v2777 = vmax.f32 %v1909, %v2517
        %v2778 = vmax.f32 %v1910, %v2344
        %v2779 = vmax.f32 %v1911, %v2520
        %v2780 = vmax.f32 %v1912, %v2350
        %v2781 = vmax.f32 %v1913, %v2525
        %v2782 = vmax.f32 %v1914, %v2354
        %v2783 = vmax.f32 %v1915, %v2528
        %v2784 = vmax.f32 %v1916, %v2360
        %v2785 = vmax.f32 %v1917, %v2533
        %v2786 = vmax.f32 %v1918, %v2364
        %v2787 = vmax.f32 %v1919, %v2536
        %v2788 = vmax.f32 %v1920, %v2370
        %v2789 = vmax.f32 %v1921, %v2541
        %v2790 = vmax.f32 %v1922, %v2374
        %v2791 = vmax.f32 %v1923, %v2544
        %v2792 = vmax.f32 %v1924, %v2380
        %v2793 = vmax.f32 %v1925, %v2549
        %v2794 = vmax.f32 %v1926, %v2384
        %v2795 = vmax.f32 %v1927, %v2552
        %v2796 = vmax.f32 %v1928, %v2390
        %v2797 = vmax.f32 %v1929, %v2557
        %v2798 = vmax.f32 %v1930, %v2394
        %v2799 = vmax.f32 %v1931, %v2560
        %v2800 = vmax.f32 %v1932, %v2400
        %v2801 = vmax.f32 %v1933, %v2565
        %v2802 = vmax.f32 %v1934, %v2404
        %v2803 = vmax.f32 %v1935, %v2568
        %v2804 = vmax.f32 %v1936, %v2410
        %v2805 = vmax.f32 %v1937, %v2573
        %v2806 = vmax.f32 %v1938, %v2414
        %v2807 = vmax.f32 %v1939, %v2576
        %v2808 = vmax.f32 %v1940, %v2420
        %v2809 = vmax.f32 %v1941, %v2581
        %v2810 = vmax.f32 %v1942, %v2424
        %v2811 = vmax.f32 %v1943, %v2584
        %s2812 = scalar_lea.vmem %s221, 384 [#allocation2]
        %v2813 = vld [vmem:[%s2812] sm:$0xf]
        %v2814 = vld [vmem:[%s2812 + $0x4] sm:$0xf]
        %v2815 = vld [vmem:[%s2812 + $0x8] sm:$0xf]
        %v2816 = vld [vmem:[%s2812 + $0xc] sm:$0xf]
        %v2817 = vld [vmem:[%s2812 + $0x10] sm:$0xf]
        %v2818 = vld [vmem:[%s2812 + $0x14] sm:$0xf]
        %v2819 = vld [vmem:[%s2812 + $0x18] sm:$0xf]
        %v2820 = vld [vmem:[%s2812 + $0x1c] sm:$0xf]
        %v2821 = vld [vmem:[%s2812 + $0x20] sm:$0xf]
        %v2822 = vld [vmem:[%s2812 + $0x24] sm:$0xf]
        %v2823 = vld [vmem:[%s2812 + $0x28] sm:$0xf]
        %v2824 = vld [vmem:[%s2812 + $0x2c] sm:$0xf]
        %v2825 = vld [vmem:[%s2812 + $0x30] sm:$0xf]
        %v2826 = vld [vmem:[%s2812 + $0x34] sm:$0xf]
        %v2827 = vld [vmem:[%s2812 + $0x38] sm:$0xf]
        %v2828 = vld [vmem:[%s2812 + $0x3c] sm:$0xf]
        %v2829 = vld [vmem:[%s2812 + $0x40] sm:$0xf]
        %v2830 = vld [vmem:[%s2812 + $0x44] sm:$0xf]
        %v2831 = vld [vmem:[%s2812 + $0x48] sm:$0xf]
        %v2832 = vld [vmem:[%s2812 + $0x4c] sm:$0xf]
        %v2833 = vld [vmem:[%s2812 + $0x50] sm:$0xf]
        %v2834 = vld [vmem:[%s2812 + $0x54] sm:$0xf]
        %v2835 = vld [vmem:[%s2812 + $0x58] sm:$0xf]
        %v2836 = vld [vmem:[%s2812 + $0x5c] sm:$0xf]
        %v2837 = vld [vmem:[%s2812 + $0x60] sm:$0xf]
        %v2838 = vld [vmem:[%s2812 + $0x64] sm:$0xf]
        %v2839 = vld [vmem:[%s2812 + $0x68] sm:$0xf]
        %v2840 = vld [vmem:[%s2812 + $0x6c] sm:$0xf]
        %v2841 = vld [vmem:[%s2812 + $0x70] sm:$0xf]
        %v2842 = vld [vmem:[%s2812 + $0x74] sm:$0xf]
        %v2843 = vld [vmem:[%s2812 + $0x78] sm:$0xf]
        %v2844 = vld [vmem:[%s2812 + $0x7c] sm:$0xf]
        %v2845 = vld [vmem:[%s1] sm:$0xff]
        %v2846 = vld [vmem:[%s1 + $0x8] sm:$0xf]
        %v2847 = vld [vmem:[%s1 + $0xc] sm:$0xff]
        %v2848 = vld [vmem:[%s1 + $0x14] sm:$0xf]
        %v2849 = vld [vmem:[%s1 + $0x18] sm:$0xff]
        %v2850 = vld [vmem:[%s1 + $0x20] sm:$0xf]
        %v2851 = vld [vmem:[%s1 + $0x24] sm:$0xff]
        %v2852 = vld [vmem:[%s1 + $0x2c] sm:$0xf]
        %v2853 = vld [vmem:[%s1 + $0x30] sm:$0xff]
        %v2854 = vld [vmem:[%s1 + $0x38] sm:$0xf]
        %v2855 = vld [vmem:[%s1 + $0x3c] sm:$0xff]
        %v2856 = vld [vmem:[%s1 + $0x44] sm:$0xf]
        %v2857 = vld [vmem:[%s1 + $0x48] sm:$0xff]
        %v2858 = vld [vmem:[%s1 + $0x50] sm:$0xf]
        %v2859 = vld [vmem:[%s1 + $0x54] sm:$0xff]
        %v2860 = vld [vmem:[%s1 + $0x5c] sm:$0xf]
        %v2861 = vld [vmem:[%s1 + $0x60] sm:$0xff]
        %v2862 = vld [vmem:[%s1 + $0x68] sm:$0xf]
        %v2863 = vld [vmem:[%s1 + $0x6c] sm:$0xff]
        %v2864 = vld [vmem:[%s1 + $0x74] sm:$0xf]
        %v2865 = vld [vmem:[%s1 + $0x78] sm:$0xff]
        %v2866 = vld [vmem:[%s1 + $0x80] sm:$0xf]
        %v2867 = vld [vmem:[%s1 + $0x84] sm:$0xff]
        %v2868 = vld [vmem:[%s1 + $0x8c] sm:$0xf]
        %v2869 = vld [vmem:[%s1 + $0x90] sm:$0xff]
        %v2870 = vld [vmem:[%s1 + $0x98] sm:$0xf]
        %v2871 = vld [vmem:[%s1 + $0x9c] sm:$0xff]
        %v2872 = vld [vmem:[%s1 + $0xa4] sm:$0xf]
        %v2873 = vld [vmem:[%s1 + $0xa8] sm:$0xff]
        %v2874 = vld [vmem:[%s1 + $0xb0] sm:$0xf]
        %v2875 = vld [vmem:[%s1 + $0xb4] sm:$0xff]
        %v2876 = vld [vmem:[%s1 + $0xbc] sm:$0xf]
        %v2909 = vunpack.c.l.b16 %v2813
        %v2910 = vunpack.c.l.b16 %v2814
        %v2911 = vunpack.c.l.b16 %v2815
        %v2912 = vunpack.c.l.b16 %v2816
        %v2913 = vunpack.c.l.b16 %v2817
        %v2914 = vunpack.c.l.b16 %v2818
        %v2915 = vunpack.c.l.b16 %v2819
        %v2916 = vunpack.c.l.b16 %v2820
        %v2917 = vunpack.c.l.b16 %v2821
        %v2918 = vunpack.c.l.b16 %v2822
        %v2919 = vunpack.c.l.b16 %v2823
        %v2920 = vunpack.c.l.b16 %v2824
        %v2921 = vunpack.c.l.b16 %v2825
        %v2922 = vunpack.c.l.b16 %v2826
        %v2923 = vunpack.c.l.b16 %v2827
        %v2924 = vunpack.c.l.b16 %v2828
        %v2925 = vunpack.c.l.b16 %v2829
        %v2926 = vunpack.c.l.b16 %v2830
        %v2927 = vunpack.c.l.b16 %v2831
        %v2928 = vunpack.c.l.b16 %v2832
        %v2929 = vunpack.c.l.b16 %v2833
        %v2930 = vunpack.c.l.b16 %v2834
        %v2931 = vunpack.c.l.b16 %v2835
        %v2932 = vunpack.c.l.b16 %v2836
        %v2933 = vunpack.c.l.b16 %v2837
        %v2934 = vunpack.c.l.b16 %v2838
        %v2935 = vunpack.c.l.b16 %v2839
        %v2936 = vunpack.c.l.b16 %v2840
        %v2937 = vunpack.c.l.b16 %v2841
        %v2938 = vunpack.c.l.b16 %v2842
        %v2939 = vunpack.c.l.b16 %v2843
        %v2940 = vunpack.c.l.b16 %v2844
        %v2941 = vpack.c.b16 %v2910, %v2909
        %v2942 = vpack.c.b16 %v2912, %v2911
        %v2943 = vpack.c.b16 %v2914, %v2913
        %v2944 = vpack.c.b16 %v2916, %v2915
        %v2945 = vpack.c.b16 %v2918, %v2917
        %v2946 = vpack.c.b16 %v2920, %v2919
        %v2947 = vpack.c.b16 %v2922, %v2921
        %v2948 = vpack.c.b16 %v2924, %v2923
        %v2949 = vpack.c.b16 %v2926, %v2925
        %v2950 = vpack.c.b16 %v2928, %v2927
        %v2951 = vpack.c.b16 %v2930, %v2929
        %v2952 = vpack.c.b16 %v2932, %v2931
        %v2953 = vpack.c.b16 %v2934, %v2933
        %v2954 = vpack.c.b16 %v2936, %v2935
        %v2955 = vpack.c.b16 %v2938, %v2937
        %v2956 = vpack.c.b16 %v2940, %v2939
        %v3005 = vunpack.c.l.b16 %v2845
        %v3006 = vunpack.c.h.b16 %v2845
        %v3007 = vunpack.c.l.b16 %v2846
        %v3008 = vunpack.c.l.b16 %v2847
        %v3009 = vunpack.c.h.b16 %v2847
        %v3010 = vunpack.c.l.b16 %v2848
        %v3011 = vunpack.c.l.b16 %v2849
        %v3012 = vunpack.c.h.b16 %v2849
        %v3013 = vunpack.c.l.b16 %v2850
        %v3014 = vunpack.c.l.b16 %v2851
        %v3015 = vunpack.c.h.b16 %v2851
        %v3016 = vunpack.c.l.b16 %v2852
        %v3017 = vunpack.c.l.b16 %v2853
        %v3018 = vunpack.c.h.b16 %v2853
        %v3019 = vunpack.c.l.b16 %v2854
        %v3020 = vunpack.c.l.b16 %v2855
        %v3021 = vunpack.c.h.b16 %v2855
        %v3022 = vunpack.c.l.b16 %v2856
        %v3023 = vunpack.c.l.b16 %v2857
        %v3024 = vunpack.c.h.b16 %v2857
        %v3025 = vunpack.c.l.b16 %v2858
        %v3026 = vunpack.c.l.b16 %v2859
        %v3027 = vunpack.c.h.b16 %v2859
        %v3028 = vunpack.c.l.b16 %v2860
        %v3029 = vunpack.c.l.b16 %v2861
        %v3030 = vunpack.c.h.b16 %v2861
        %v3031 = vunpack.c.l.b16 %v2862
        %v3032 = vunpack.c.l.b16 %v2863
        %v3033 = vunpack.c.h.b16 %v2863
        %v3034 = vunpack.c.l.b16 %v2864
        %v3035 = vunpack.c.l.b16 %v2865
        %v3036 = vunpack.c.h.b16 %v2865
        %v3037 = vunpack.c.l.b16 %v2866
        %v3038 = vunpack.c.l.b16 %v2867
        %v3039 = vunpack.c.h.b16 %v2867
        %v3040 = vunpack.c.l.b16 %v2868
        %v3041 = vunpack.c.l.b16 %v2869
        %v3042 = vunpack.c.h.b16 %v2869
        %v3043 = vunpack.c.l.b16 %v2870
        %v3044 = vunpack.c.l.b16 %v2871
        %v3045 = vunpack.c.h.b16 %v2871
        %v3046 = vunpack.c.l.b16 %v2872
        %v3047 = vunpack.c.l.b16 %v2873
        %v3048 = vunpack.c.h.b16 %v2873
        %v3049 = vunpack.c.l.b16 %v2874
        %v3050 = vunpack.c.l.b16 %v2875
        %v3051 = vunpack.c.h.b16 %v2875
        %v3052 = vunpack.c.l.b16 %v2876
        %v3053 = vpack.c.b16 %v3008, %v3005
        %v3054 = vpack.c.b16 %v3009, %v3006
        %v3055 = vpack.c.b16 %v3010, %v3007
        %v3056 = vpack.c.b16 %v3014, %v3011
        %v3057 = vpack.c.b16 %v3015, %v3012
        %v3058 = vpack.c.b16 %v3016, %v3013
        %v3059 = vpack.c.b16 %v3020, %v3017
        %v3060 = vpack.c.b16 %v3021, %v3018
        %v3061 = vpack.c.b16 %v3022, %v3019
        %v3062 = vpack.c.b16 %v3026, %v3023
        %v3063 = vpack.c.b16 %v3027, %v3024
        %v3064 = vpack.c.b16 %v3028, %v3025
        %v3065 = vpack.c.b16 %v3032, %v3029
        %v3066 = vpack.c.b16 %v3033, %v3030
        %v3067 = vpack.c.b16 %v3034, %v3031
        %v3068 = vpack.c.b16 %v3038, %v3035
        %v3069 = vpack.c.b16 %v3039, %v3036
        %v3070 = vpack.c.b16 %v3040, %v3037
        %v3071 = vpack.c.b16 %v3044, %v3041
        %v3072 = vpack.c.b16 %v3045, %v3042
        %v3073 = vpack.c.b16 %v3046, %v3043
        %v3074 = vpack.c.b16 %v3050, %v3047
        %v3075 = vpack.c.b16 %v3051, %v3048
        %v3076 = vpack.c.b16 %v3052, %v3049
        %3101 = vmatprep.subr.bf16.mxu0 %v3054
        %3102 = vmatpush1.bf16.msra.mxu0 %v3053
        %3103 = vmatprep.subr.bf16.mxu0 %v3057
        %3104 = vmatpush1.bf16.msra.mxu0 %v3056
        %3105 = vmatprep.subr.bf16.mxu0 %v3060
        %3106 = vmatpush1.bf16.msra.mxu0 %v3059
        %3107 = vmatprep.subr.bf16.mxu0 %v3063
        %3108 = vmatpush1.bf16.msra.mxu0 %v3062
        %3109 = vmatprep.subr.bf16.mxu0 %v3066
        %3110 = vmatpush1.bf16.msra.mxu0 %v3065
        %3111 = vmatprep.subr.bf16.mxu0 %v3069
        %3112 = vmatpush1.bf16.msra.mxu0 %v3068
        %3113 = vmatprep.subr.bf16.mxu0 %v3072
        %3114 = vmatpush1.bf16.msra.mxu0 %v3071
        %3115 = vmatprep.subr.bf16.mxu0 %v3075
        %3116 = vmatpush1.bf16.msra.mxu0 %v3074
        %3117 = vmatprep.subr.bf16.mxu0 0
        %3118 = vmatpush1.bf16.msra.mxu0 0
        %3119 = vmatprep.subr.bf16.mxu0 0
        %3120 = vmatpush1.bf16.msra.mxu0 0
        %3121 = vmatprep.subr.bf16.mxu0 0
        %3122 = vmatpush1.bf16.msra.mxu0 0
        %3123 = vmatprep.subr.bf16.mxu0 0
        %3124 = vmatpush1.bf16.msra.mxu0 0
        %3125 = vmatprep.subr.bf16.mxu0 0
        %3126 = vmatpush1.bf16.msra.mxu0 0
        %3127 = vmatprep.subr.bf16.mxu0 0
        %3128 = vmatpush1.bf16.msra.mxu0 0
        %3129 = vmatprep.subr.bf16.mxu0 0
        %3130 = vmatpush1.bf16.msra.mxu0 0
        %3131 = vmatprep.subr.bf16.mxu0 0
        %3132 = vmatpush1.bf16.msra.mxu0 0
        %3133 = vmatprep.mubr.bf16.mxu0 0
        %3134 = vmatmul.mubr.bf16.gmra.mrb[0].mxu0 %v2941
        %v3135 = vpop.f32.mrb[0].mxu0
        %v3136 = vadd.f32 0.0, %v3135
        %v3137 = vpop.f32.mrb[0].mxu0
        %v3138 = vadd.f32 0.0, %v3137
        %v3139 = vpop.f32.mrb[0].mxu0
        %v3140 = vadd.f32 0.0, %v3139
        %v3141 = vpop.f32.mrb[0].mxu0
        %v3142 = vadd.f32 0.0, %v3141
        %3143 = vmatprep.mubr.bf16.mxu0 0
        %3144 = vmatmul.mubr.bf16.gmra.mrb[0].mxu0 %v2942
        %v3145 = vpop.f32.mrb[0].mxu0
        %v3146 = vadd.f32 0.0, %v3145
        %v3147 = vpop.f32.mrb[0].mxu0
        %v3148 = vadd.f32 0.0, %v3147
        %v3149 = vpop.f32.mrb[0].mxu0
        %v3150 = vadd.f32 0.0, %v3149
        %v3151 = vpop.f32.mrb[0].mxu0
        %v3152 = vadd.f32 0.0, %v3151
        %3153 = vmatprep.mubr.bf16.mxu0 0
        %3154 = vmatmul.mubr.bf16.gmra.mrb[0].mxu0 %v2943
        %v3155 = vpop.f32.mrb[0].mxu0
        %v3156 = vadd.f32 0.0, %v3155
        %v3157 = vpop.f32.mrb[0].mxu0
        %v3158 = vadd.f32 0.0, %v3157
        %v3159 = vpop.f32.mrb[0].mxu0
        %v3160 = vadd.f32 0.0, %v3159
        %v3161 = vpop.f32.mrb[0].mxu0
        %v3162 = vadd.f32 0.0, %v3161
        %3163 = vmatprep.mubr.bf16.mxu0 0
        %3164 = vmatmul.mubr.bf16.gmra.mrb[0].mxu0 %v2944
        %v3165 = vpop.f32.mrb[0].mxu0
        %v3166 = vadd.f32 0.0, %v3165
        %v3167 = vpop.f32.mrb[0].mxu0
        %v3168 = vadd.f32 0.0, %v3167
        %v3169 = vpop.f32.mrb[0].mxu0
        %v3170 = vadd.f32 0.0, %v3169
        %v3171 = vpop.f32.mrb[0].mxu0
        %v3172 = vadd.f32 0.0, %v3171
        %3173 = vmatprep.mubr.bf16.mxu0 0
        %3174 = vmatmul.mubr.bf16.gmra.mrb[0].mxu0 %v2945
        %v3175 = vpop.f32.mrb[0].mxu0
        %v3176 = vadd.f32 0.0, %v3175
        %v3177 = vpop.f32.mrb[0].mxu0
        %v3178 = vadd.f32 0.0, %v3177
        %v3179 = vpop.f32.mrb[0].mxu0
        %v3180 = vadd.f32 0.0, %v3179
        %v3181 = vpop.f32.mrb[0].mxu0
        %v3182 = vadd.f32 0.0, %v3181
        %3183 = vmatprep.mubr.bf16.mxu0 0
        %3184 = vmatmul.mubr.bf16.gmra.mrb[0].mxu0 %v2946
        %v3185 = vpop.f32.mrb[0].mxu0
        %v3186 = vadd.f32 0.0, %v3185
        %v3187 = vpop.f32.mrb[0].mxu0
        %v3188 = vadd.f32 0.0, %v3187
        %v3189 = vpop.f32.mrb[0].mxu0
        %v3190 = vadd.f32 0.0, %v3189
        %v3191 = vpop.f32.mrb[0].mxu0
        %v3192 = vadd.f32 0.0, %v3191
        %3193 = vmatprep.mubr.bf16.mxu0 0
        %3194 = vmatmul.mubr.bf16.gmra.mrb[0].mxu0 %v2947
        %v3195 = vpop.f32.mrb[0].mxu0
        %v3196 = vadd.f32 0.0, %v3195
        %v3197 = vpop.f32.mrb[0].mxu0
        %v3198 = vadd.f32 0.0, %v3197
        %v3199 = vpop.f32.mrb[0].mxu0
        %v3200 = vadd.f32 0.0, %v3199
        %v3201 = vpop.f32.mrb[0].mxu0
        %v3202 = vadd.f32 0.0, %v3201
        %3203 = vmatprep.mubr.bf16.mxu0 0
        %3204 = vmatmul.mubr.bf16.gmra.mrb[0].mxu0 %v2948
        %v3205 = vpop.f32.mrb[0].mxu0
        %v3206 = vadd.f32 0.0, %v3205
        %v3207 = vpop.f32.mrb[0].mxu0
        %v3208 = vadd.f32 0.0, %v3207
        %v3209 = vpop.f32.mrb[0].mxu0
        %v3210 = vadd.f32 0.0, %v3209
        %v3211 = vpop.f32.mrb[0].mxu0
        %v3212 = vadd.f32 0.0, %v3211
        %3213 = vmatprep.mubr.bf16.mxu0 0
        %3214 = vmatmul.mubr.bf16.gmra.mrb[0].mxu0 %v2949
        %v3215 = vpop.f32.mrb[0].mxu0
        %v3216 = vadd.f32 0.0, %v3215
        %v3217 = vpop.f32.mrb[0].mxu0
        %v3218 = vadd.f32 0.0, %v3217
        %v3219 = vpop.f32.mrb[0].mxu0
        %v3220 = vadd.f32 0.0, %v3219
        %v3221 = vpop.f32.mrb[0].mxu0
        %v3222 = vadd.f32 0.0, %v3221
        %3223 = vmatprep.mubr.bf16.mxu0 0
        %3224 = vmatmul.mubr.bf16.gmra.mrb[0].mxu0 %v2950
        %v3225 = vpop.f32.mrb[0].mxu0
        %v3226 = vadd.f32 0.0, %v3225
        %v3227 = vpop.f32.mrb[0].mxu0
        %v3228 = vadd.f32 0.0, %v3227
        %v3229 = vpop.f32.mrb[0].mxu0
        %v3230 = vadd.f32 0.0, %v3229
        %v3231 = vpop.f32.mrb[0].mxu0
        %v3232 = vadd.f32 0.0, %v3231
        %3233 = vmatprep.mubr.bf16.mxu0 0
        %3234 = vmatmul.mubr.bf16.gmra.mrb[0].mxu0 %v2951
        %v3235 = vpop.f32.mrb[0].mxu0
        %v3236 = vadd.f32 0.0, %v3235
        %v3237 = vpop.f32.mrb[0].mxu0
        %v3238 = vadd.f32 0.0, %v3237
        %v3239 = vpop.f32.mrb[0].mxu0
        %v3240 = vadd.f32 0.0, %v3239
        %v3241 = vpop.f32.mrb[0].mxu0
        %v3242 = vadd.f32 0.0, %v3241
        %3243 = vmatprep.mubr.bf16.mxu0 0
        %3244 = vmatmul.mubr.bf16.gmra.mrb[0].mxu0 %v2952
        %v3245 = vpop.f32.mrb[0].mxu0
        %v3246 = vadd.f32 0.0, %v3245
        %v3247 = vpop.f32.mrb[0].mxu0
        %v3248 = vadd.f32 0.0, %v3247
        %v3249 = vpop.f32.mrb[0].mxu0
        %v3250 = vadd.f32 0.0, %v3249
        %v3251 = vpop.f32.mrb[0].mxu0
        %v3252 = vadd.f32 0.0, %v3251
        %3253 = vmatprep.mubr.bf16.mxu0 0
        %3254 = vmatmul.mubr.bf16.gmra.mrb[0].mxu0 %v2953
        %v3255 = vpop.f32.mrb[0].mxu0
        %v3256 = vadd.f32 0.0, %v3255
        %v3257 = vpop.f32.mrb[0].mxu0
        %v3258 = vadd.f32 0.0, %v3257
        %v3259 = vpop.f32.mrb[0].mxu0
        %v3260 = vadd.f32 0.0, %v3259
        %v3261 = vpop.f32.mrb[0].mxu0
        %v3262 = vadd.f32 0.0, %v3261
        %3263 = vmatprep.mubr.bf16.mxu0 0
        %3264 = vmatmul.mubr.bf16.gmra.mrb[0].mxu0 %v2954
        %v3265 = vpop.f32.mrb[0].mxu0
        %v3266 = vadd.f32 0.0, %v3265
        %v3267 = vpop.f32.mrb[0].mxu0
        %v3268 = vadd.f32 0.0, %v3267
        %v3269 = vpop.f32.mrb[0].mxu0
        %v3270 = vadd.f32 0.0, %v3269
        %v3271 = vpop.f32.mrb[0].mxu0
        %v3272 = vadd.f32 0.0, %v3271
        %3273 = vmatprep.mubr.bf16.mxu0 0
        %3274 = vmatmul.mubr.bf16.gmra.mrb[0].mxu0 %v2955
        %v3275 = vpop.f32.mrb[0].mxu0
        %v3276 = vadd.f32 0.0, %v3275
        %v3277 = vpop.f32.mrb[0].mxu0
        %v3278 = vadd.f32 0.0, %v3277
        %v3279 = vpop.f32.mrb[0].mxu0
        %v3280 = vadd.f32 0.0, %v3279
        %v3281 = vpop.f32.mrb[0].mxu0
        %v3282 = vadd.f32 0.0, %v3281
        %3283 = vmatprep.mubr.bf16.mxu0 0
        %3284 = vmatmul.mubr.bf16.gmra.mrb[0].mxu0 %v2956
        %v3285 = vpop.f32.mrb[0].mxu0
        %v3286 = vadd.f32 0.0, %v3285
        %v3287 = vpop.f32.mrb[0].mxu0
        %v3288 = vadd.f32 0.0, %v3287
        %v3289 = vpop.f32.mrb[0].mxu0
        %v3290 = vadd.f32 0.0, %v3289
        %v3291 = vpop.f32.mrb[0].mxu0
        %v3292 = vadd.f32 0.0, %v3291
        %3293 = vdwg.mxu0
        %3294 = vmatprep.subr.bf16.mxu0 0
        %3295 = vmatpush1.bf16.msra.mxu0 %v3055
        %3296 = vmatprep.subr.bf16.mxu0 0
        %3297 = vmatpush1.bf16.msra.mxu0 %v3058
        %3298 = vmatprep.subr.bf16.mxu0 0
        %3299 = vmatpush1.bf16.msra.mxu0 %v3061
        %3300 = vmatprep.subr.bf16.mxu0 0
        %3301 = vmatpush1.bf16.msra.mxu0 %v3064
        %3302 = vmatprep.subr.bf16.mxu0 0
        %3303 = vmatpush1.bf16.msra.mxu0 %v3067
        %3304 = vmatprep.subr.bf16.mxu0 0
        %3305 = vmatpush1.bf16.msra.mxu0 %v3070
        %3306 = vmatprep.subr.bf16.mxu0 0
        %3307 = vmatpush1.bf16.msra.mxu0 %v3073
        %3308 = vmatprep.subr.bf16.mxu0 0
        %3309 = vmatpush1.bf16.msra.mxu0 %v3076
        %3310 = vmatprep.subr.bf16.mxu0 0
        %3311 = vmatpush1.bf16.msra.mxu0 0
        %3312 = vmatprep.subr.bf16.mxu0 0
        %3313 = vmatpush1.bf16.msra.mxu0 0
        %3314 = vmatprep.subr.bf16.mxu0 0
        %3315 = vmatpush1.bf16.msra.mxu0 0
        %3316 = vmatprep.subr.bf16.mxu0 0
        %3317 = vmatpush1.bf16.msra.mxu0 0
        %3318 = vmatprep.subr.bf16.mxu0 0
        %3319 = vmatpush1.bf16.msra.mxu0 0
        %3320 = vmatprep.subr.bf16.mxu0 0
        %3321 = vmatpush1.bf16.msra.mxu0 0
        %3322 = vmatprep.subr.bf16.mxu0 0
        %3323 = vmatpush1.bf16.msra.mxu0 0
        %3324 = vmatprep.subr.bf16.mxu0 0
        %3325 = vmatpush1.bf16.msra.mxu0 0
        %3326 = vmatprep.mubr.bf16.mxu0 0
        %3327 = vmatmul.mubr.bf16.gmra.mrb[0].mxu0 %v2941
        %v3328 = vpop.f32.mrb[0].mxu0
        %v3329 = vadd.f32 0.0, %v3328
        %v3330 = vpop.f32.mrb[0].mxu0
        %v3331 = vpop.f32.mrb[0].mxu0
        %v3332 = vadd.f32 0.0, %v3331
        %v3333 = vpop.f32.mrb[0].mxu0
        %3334 = vmatprep.mubr.bf16.mxu0 0
        %3335 = vmatmul.mubr.bf16.gmra.mrb[0].mxu0 %v2942
        %v3336 = vpop.f32.mrb[0].mxu0
        %v3337 = vadd.f32 0.0, %v3336
        %v3338 = vpop.f32.mrb[0].mxu0
        %v3339 = vpop.f32.mrb[0].mxu0
        %v3340 = vadd.f32 0.0, %v3339
        %v3341 = vpop.f32.mrb[0].mxu0
        %3342 = vmatprep.mubr.bf16.mxu0 0
        %3343 = vmatmul.mubr.bf16.gmra.mrb[0].mxu0 %v2943
        %v3344 = vpop.f32.mrb[0].mxu0
        %v3345 = vadd.f32 0.0, %v3344
        %v3346 = vpop.f32.mrb[0].mxu0
        %v3347 = vpop.f32.mrb[0].mxu0
        %v3348 = vadd.f32 0.0, %v3347
        %v3349 = vpop.f32.mrb[0].mxu0
        %3350 = vmatprep.mubr.bf16.mxu0 0
        %3351 = vmatmul.mubr.bf16.gmra.mrb[0].mxu0 %v2944
        %v3352 = vpop.f32.mrb[0].mxu0
        %v3353 = vadd.f32 0.0, %v3352
        %v3354 = vpop.f32.mrb[0].mxu0
        %v3355 = vpop.f32.mrb[0].mxu0
        %v3356 = vadd.f32 0.0, %v3355
        %v3357 = vpop.f32.mrb[0].mxu0
        %3358 = vmatprep.mubr.bf16.mxu0 0
        %3359 = vmatmul.mubr.bf16.gmra.mrb[0].mxu0 %v2945
        %v3360 = vpop.f32.mrb[0].mxu0
        %v3361 = vadd.f32 0.0, %v3360
        %v3362 = vpop.f32.mrb[0].mxu0
        %v3363 = vpop.f32.mrb[0].mxu0
        %v3364 = vadd.f32 0.0, %v3363
        %v3365 = vpop.f32.mrb[0].mxu0
        %3366 = vmatprep.mubr.bf16.mxu0 0
        %3367 = vmatmul.mubr.bf16.gmra.mrb[0].mxu0 %v2946
        %v3368 = vpop.f32.mrb[0].mxu0
        %v3369 = vadd.f32 0.0, %v3368
        %v3370 = vpop.f32.mrb[0].mxu0
        %v3371 = vpop.f32.mrb[0].mxu0
        %v3372 = vadd.f32 0.0, %v3371
        %v3373 = vpop.f32.mrb[0].mxu0
        %3374 = vmatprep.mubr.bf16.mxu0 0
        %3375 = vmatmul.mubr.bf16.gmra.mrb[0].mxu0 %v2947
        %v3376 = vpop.f32.mrb[0].mxu0
        %v3377 = vadd.f32 0.0, %v3376
        %v3378 = vpop.f32.mrb[0].mxu0
        %v3379 = vpop.f32.mrb[0].mxu0
        %v3380 = vadd.f32 0.0, %v3379
        %v3381 = vpop.f32.mrb[0].mxu0
        %3382 = vmatprep.mubr.bf16.mxu0 0
        %3383 = vmatmul.mubr.bf16.gmra.mrb[0].mxu0 %v2948
        %v3384 = vpop.f32.mrb[0].mxu0
        %v3385 = vadd.f32 0.0, %v3384
        %v3386 = vpop.f32.mrb[0].mxu0
        %v3387 = vpop.f32.mrb[0].mxu0
        %v3388 = vadd.f32 0.0, %v3387
        %v3389 = vpop.f32.mrb[0].mxu0
        %3390 = vmatprep.mubr.bf16.mxu0 0
        %3391 = vmatmul.mubr.bf16.gmra.mrb[0].mxu0 %v2949
        %v3392 = vpop.f32.mrb[0].mxu0
        %v3393 = vadd.f32 0.0, %v3392
        %v3394 = vpop.f32.mrb[0].mxu0
        %v3395 = vpop.f32.mrb[0].mxu0
        %v3396 = vadd.f32 0.0, %v3395
        %v3397 = vpop.f32.mrb[0].mxu0
        %3398 = vmatprep.mubr.bf16.mxu0 0
        %3399 = vmatmul.mubr.bf16.gmra.mrb[0].mxu0 %v2950
        %v3400 = vpop.f32.mrb[0].mxu0
        %v3401 = vadd.f32 0.0, %v3400
        %v3402 = vpop.f32.mrb[0].mxu0
        %v3403 = vpop.f32.mrb[0].mxu0
        %v3404 = vadd.f32 0.0, %v3403
        %v3405 = vpop.f32.mrb[0].mxu0
        %3406 = vmatprep.mubr.bf16.mxu0 0
        %3407 = vmatmul.mubr.bf16.gmra.mrb[0].mxu0 %v2951
        %v3408 = vpop.f32.mrb[0].mxu0
        %v3409 = vadd.f32 0.0, %v3408
        %v3410 = vpop.f32.mrb[0].mxu0
        %v3411 = vpop.f32.mrb[0].mxu0
        %v3412 = vadd.f32 0.0, %v3411
        %v3413 = vpop.f32.mrb[0].mxu0
        %3414 = vmatprep.mubr.bf16.mxu0 0
        %3415 = vmatmul.mubr.bf16.gmra.mrb[0].mxu0 %v2952
        %v3416 = vpop.f32.mrb[0].mxu0
        %v3417 = vadd.f32 0.0, %v3416
        %v3418 = vpop.f32.mrb[0].mxu0
        %v3419 = vpop.f32.mrb[0].mxu0
        %v3420 = vadd.f32 0.0, %v3419
        %v3421 = vpop.f32.mrb[0].mxu0
        %3422 = vmatprep.mubr.bf16.mxu0 0
        %3423 = vmatmul.mubr.bf16.gmra.mrb[0].mxu0 %v2953
        %v3424 = vpop.f32.mrb[0].mxu0
        %v3425 = vadd.f32 0.0, %v3424
        %v3426 = vpop.f32.mrb[0].mxu0
        %v3427 = vpop.f32.mrb[0].mxu0
        %v3428 = vadd.f32 0.0, %v3427
        %v3429 = vpop.f32.mrb[0].mxu0
        %3430 = vmatprep.mubr.bf16.mxu0 0
        %3431 = vmatmul.mubr.bf16.gmra.mrb[0].mxu0 %v2954
        %v3432 = vpop.f32.mrb[0].mxu0
        %v3433 = vadd.f32 0.0, %v3432
        %v3434 = vpop.f32.mrb[0].mxu0
        %v3435 = vpop.f32.mrb[0].mxu0
        %v3436 = vadd.f32 0.0, %v3435
        %v3437 = vpop.f32.mrb[0].mxu0
        %3438 = vmatprep.mubr.bf16.mxu0 0
        %3439 = vmatmul.mubr.bf16.gmra.mrb[0].mxu0 %v2955
        %v3440 = vpop.f32.mrb[0].mxu0
        %v3441 = vadd.f32 0.0, %v3440
        %v3442 = vpop.f32.mrb[0].mxu0
        %v3443 = vpop.f32.mrb[0].mxu0
        %v3444 = vadd.f32 0.0, %v3443
        %v3445 = vpop.f32.mrb[0].mxu0
        %3446 = vmatprep.mubr.bf16.mxu0 0
        %3447 = vmatmul.mubr.bf16.gmra.mrb[0].mxu0 %v2956
        %v3448 = vpop.f32.mrb[0].mxu0
        %v3449 = vadd.f32 0.0, %v3448
        %v3450 = vpop.f32.mrb[0].mxu0
        %v3451 = vpop.f32.mrb[0].mxu0
        %v3452 = vadd.f32 0.0, %v3451
        %v3453 = vpop.f32.mrb[0].mxu0
        %3454 = vdwg.mxu0
        %v3455 = vpack.c.bf16 %v3140, %v3136
        %v3456 = vpack.c.bf16 %v3150, %v3146
        %v3457 = vpack.c.bf16 %v3160, %v3156
        %v3458 = vpack.c.bf16 %v3170, %v3166
        %v3459 = vpack.c.bf16 %v3180, %v3176
        %v3460 = vpack.c.bf16 %v3190, %v3186
        %v3461 = vpack.c.bf16 %v3200, %v3196
        %v3462 = vpack.c.bf16 %v3210, %v3206
        %v3463 = vpack.c.bf16 %v3220, %v3216
        %v3464 = vpack.c.bf16 %v3230, %v3226
        %v3465 = vpack.c.bf16 %v3240, %v3236
        %v3466 = vpack.c.bf16 %v3250, %v3246
        %v3467 = vpack.c.bf16 %v3260, %v3256
        %v3468 = vpack.c.bf16 %v3270, %v3266
        %v3469 = vpack.c.bf16 %v3280, %v3276
        %v3470 = vpack.c.bf16 %v3290, %v3286
        %v3487 = vunpack.c.l.b16 %v3455
        %v3488 = vunpack.c.h.b16 %v3455
        %v3489 = vunpack.c.l.b16 %v3456
        %v3490 = vunpack.c.h.b16 %v3456
        %v3491 = vunpack.c.l.b16 %v3457
        %v3492 = vunpack.c.h.b16 %v3457
        %v3493 = vunpack.c.l.b16 %v3458
        %v3494 = vunpack.c.h.b16 %v3458
        %v3495 = vunpack.c.l.b16 %v3459
        %v3496 = vunpack.c.h.b16 %v3459
        %v3497 = vunpack.c.l.b16 %v3460
        %v3498 = vunpack.c.h.b16 %v3460
        %v3499 = vunpack.c.l.b16 %v3461
        %v3500 = vunpack.c.h.b16 %v3461
        %v3501 = vunpack.c.l.b16 %v3462
        %v3502 = vunpack.c.h.b16 %v3462
        %v3503 = vunpack.c.l.b16 %v3463
        %v3504 = vunpack.c.h.b16 %v3463
        %v3505 = vunpack.c.l.b16 %v3464
        %v3506 = vunpack.c.h.b16 %v3464
        %v3507 = vunpack.c.l.b16 %v3465
        %v3508 = vunpack.c.h.b16 %v3465
        %v3509 = vunpack.c.l.b16 %v3466
        %v3510 = vunpack.c.h.b16 %v3466
        %v3511 = vunpack.c.l.b16 %v3467
        %v3512 = vunpack.c.h.b16 %v3467
        %v3513 = vunpack.c.l.b16 %v3468
        %v3514 = vunpack.c.h.b16 %v3468
        %v3515 = vunpack.c.l.b16 %v3469
        %v3516 = vunpack.c.h.b16 %v3469
        %v3517 = vunpack.c.l.b16 %v3470
        %v3518 = vunpack.c.h.b16 %v3470
        %v3519 = vpack.c.b16 %v3487, %v3487
        %v3520 = vpack.c.b16 %v3488, %v3488
        %v3521 = vpack.c.b16 %v3489, %v3489
        %v3522 = vpack.c.b16 %v3490, %v3490
        %v3523 = vpack.c.b16 %v3491, %v3491
        %v3524 = vpack.c.b16 %v3492, %v3492
        %v3525 = vpack.c.b16 %v3493, %v3493
        %v3526 = vpack.c.b16 %v3494, %v3494
        %v3527 = vpack.c.b16 %v3495, %v3495
        %v3528 = vpack.c.b16 %v3496, %v3496
        %v3529 = vpack.c.b16 %v3497, %v3497
        %v3530 = vpack.c.b16 %v3498, %v3498
        %v3531 = vpack.c.b16 %v3499, %v3499
        %v3532 = vpack.c.b16 %v3500, %v3500
        %v3533 = vpack.c.b16 %v3501, %v3501
        %v3534 = vpack.c.b16 %v3502, %v3502
        %v3535 = vpack.c.b16 %v3503, %v3503
        %v3536 = vpack.c.b16 %v3504, %v3504
        %v3537 = vpack.c.b16 %v3505, %v3505
        %v3538 = vpack.c.b16 %v3506, %v3506
        %v3539 = vpack.c.b16 %v3507, %v3507
        %v3540 = vpack.c.b16 %v3508, %v3508
        %v3541 = vpack.c.b16 %v3509, %v3509
        %v3542 = vpack.c.b16 %v3510, %v3510
        %v3543 = vpack.c.b16 %v3511, %v3511
        %v3544 = vpack.c.b16 %v3512, %v3512
        %v3545 = vpack.c.b16 %v3513, %v3513
        %v3546 = vpack.c.b16 %v3514, %v3514
        %v3547 = vpack.c.b16 %v3515, %v3515
        %v3548 = vpack.c.b16 %v3516, %v3516
        %v3549 = vpack.c.b16 %v3517, %v3517
        %v3550 = vpack.c.b16 %v3518, %v3518
        %s3583 = scalar_lea.vmem %s241, 384 [#allocation5]
        %3584 = vst [vmem:[%s3583] sm:$0xf] %v3519
        %3585 = vst [vmem:[%s3583 + $0x4] sm:$0xf] %v3520
        %3586 = vst [vmem:[%s3583 + $0x8] sm:$0xf] %v3521
        %3587 = vst [vmem:[%s3583 + $0xc] sm:$0xf] %v3522
        %3588 = vst [vmem:[%s3583 + $0x10] sm:$0xf] %v3523
        %3589 = vst [vmem:[%s3583 + $0x14] sm:$0xf] %v3524
        %3590 = vst [vmem:[%s3583 + $0x18] sm:$0xf] %v3525
        %3591 = vst [vmem:[%s3583 + $0x1c] sm:$0xf] %v3526
        %3592 = vst [vmem:[%s3583 + $0x20] sm:$0xf] %v3527
        %3593 = vst [vmem:[%s3583 + $0x24] sm:$0xf] %v3528
        %3594 = vst [vmem:[%s3583 + $0x28] sm:$0xf] %v3529
        %3595 = vst [vmem:[%s3583 + $0x2c] sm:$0xf] %v3530
        %3596 = vst [vmem:[%s3583 + $0x30] sm:$0xf] %v3531
        %3597 = vst [vmem:[%s3583 + $0x34] sm:$0xf] %v3532
        %3598 = vst [vmem:[%s3583 + $0x38] sm:$0xf] %v3533
        %3599 = vst [vmem:[%s3583 + $0x3c] sm:$0xf] %v3534
        %3600 = vst [vmem:[%s3583 + $0x40] sm:$0xf] %v3535
        %3601 = vst [vmem:[%s3583 + $0x44] sm:$0xf] %v3536
        %3602 = vst [vmem:[%s3583 + $0x48] sm:$0xf] %v3537
        %3603 = vst [vmem:[%s3583 + $0x4c] sm:$0xf] %v3538
        %3604 = vst [vmem:[%s3583 + $0x50] sm:$0xf] %v3539
        %3605 = vst [vmem:[%s3583 + $0x54] sm:$0xf] %v3540
        %3606 = vst [vmem:[%s3583 + $0x58] sm:$0xf] %v3541
        %3607 = vst [vmem:[%s3583 + $0x5c] sm:$0xf] %v3542
        %3608 = vst [vmem:[%s3583 + $0x60] sm:$0xf] %v3543
        %3609 = vst [vmem:[%s3583 + $0x64] sm:$0xf] %v3544
        %3610 = vst [vmem:[%s3583 + $0x68] sm:$0xf] %v3545
        %3611 = vst [vmem:[%s3583 + $0x6c] sm:$0xf] %v3546
        %3612 = vst [vmem:[%s3583 + $0x70] sm:$0xf] %v3547
        %3613 = vst [vmem:[%s3583 + $0x74] sm:$0xf] %v3548
        %3614 = vst [vmem:[%s3583 + $0x78] sm:$0xf] %v3549
        %3615 = vst [vmem:[%s3583 + $0x7c] sm:$0xf] %v3550
        %v3616 = vmax.f32 %v2748, %v3138
        %v3617 = vmax.f32 %v2749, %v3329
        %v3618 = vmax.f32 %v2750, %v3142
        %v3619 = vmax.f32 %v2751, %v3332
        %v3620 = vmax.f32 %v2752, %v3148
        %v3621 = vmax.f32 %v2753, %v3337
        %v3622 = vmax.f32 %v2754, %v3152
        %v3623 = vmax.f32 %v2755, %v3340
        %v3624 = vmax.f32 %v2756, %v3158
        %v3625 = vmax.f32 %v2757, %v3345
        %v3626 = vmax.f32 %v2758, %v3162
        %v3627 = vmax.f32 %v2759, %v3348
        %v3628 = vmax.f32 %v2760, %v3168
        %v3629 = vmax.f32 %v2761, %v3353
        %v3630 = vmax.f32 %v2762, %v3172
        %v3631 = vmax.f32 %v2763, %v3356
        %v3632 = vmax.f32 %v2764, %v3178
        %v3633 = vmax.f32 %v2765, %v3361
        %v3634 = vmax.f32 %v2766, %v3182
        %v3635 = vmax.f32 %v2767, %v3364
        %v3636 = vmax.f32 %v2768, %v3188
        %v3637 = vmax.f32 %v2769, %v3369
        %v3638 = vmax.f32 %v2770, %v3192
        %v3639 = vmax.f32 %v2771, %v3372
        %v3640 = vmax.f32 %v2772, %v3198
        %v3641 = vmax.f32 %v2773, %v3377
        %v3642 = vmax.f32 %v2774, %v3202
        %v3643 = vmax.f32 %v2775, %v3380
        %v3644 = vmax.f32 %v2776, %v3208
        %v3645 = vmax.f32 %v2777, %v3385
        %v3646 = vmax.f32 %v2778, %v3212
        %v3647 = vmax.f32 %v2779, %v3388
        %v3648 = vmax.f32 %v2780, %v3218
        %v3649 = vmax.f32 %v2781, %v3393
        %v3650 = vmax.f32 %v2782, %v3222
        %v3651 = vmax.f32 %v2783, %v3396
        %v3652 = vmax.f32 %v2784, %v3228
        %v3653 = vmax.f32 %v2785, %v3401
        %v3654 = vmax.f32 %v2786, %v3232
        %v3655 = vmax.f32 %v2787, %v3404
        %v3656 = vmax.f32 %v2788, %v3238
        %v3657 = vmax.f32 %v2789, %v3409
        %v3658 = vmax.f32 %v2790, %v3242
        %v3659 = vmax.f32 %v2791, %v3412
        %v3660 = vmax.f32 %v2792, %v3248
        %v3661 = vmax.f32 %v2793, %v3417
        %v3662 = vmax.f32 %v2794, %v3252
        %v3663 = vmax.f32 %v2795, %v3420
        %v3664 = vmax.f32 %v2796, %v3258
        %v3665 = vmax.f32 %v2797, %v3425
        %v3666 = vmax.f32 %v2798, %v3262
        %v3667 = vmax.f32 %v2799, %v3428
        %v3668 = vmax.f32 %v2800, %v3268
        %v3669 = vmax.f32 %v2801, %v3433
        %v3670 = vmax.f32 %v2802, %v3272
        %v3671 = vmax.f32 %v2803, %v3436
        %v3672 = vmax.f32 %v2804, %v3278
        %v3673 = vmax.f32 %v2805, %v3441
        %v3674 = vmax.f32 %v2806, %v3282
        %v3675 = vmax.f32 %v2807, %v3444
        %v3676 = vmax.f32 %v2808, %v3288
        %v3677 = vmax.f32 %v2809, %v3449
        %v3678 = vmax.f32 %v2810, %v3292
        %v3679 = vmax.f32 %v2811, %v3452
        %3680 = vxpose.xlu0.b32.start [1/16] %v3616, 128
        %3681 = vxpose.xlu0.b32.cont [2/16] %v3618, 128
        %3682 = vxpose.xlu0.b32.cont [3/16] %v3620, 128
        %3683 = vxpose.xlu0.b32.cont [4/16] %v3622, 128
        %3684 = vxpose.xlu0.b32.cont [5/16] %v3624, 128
        %3685 = vxpose.xlu0.b32.cont [6/16] %v3626, 128
        %3686 = vxpose.xlu0.b32.cont [7/16] %v3628, 128
        %3687 = vxpose.xlu0.b32.cont [8/16] %v3630, 128
        %3688 = vxpose.xlu0.b32.cont [9/16] %v3632, 128
        %3689 = vxpose.xlu0.b32.cont [10/16] %v3634, 128
        %3690 = vxpose.xlu0.b32.cont [11/16] %v3636, 128
        %3691 = vxpose.xlu0.b32.cont [12/16] %v3638, 128
        %3692 = vxpose.xlu0.b32.cont [13/16] %v3640, 128
        %3693 = vxpose.xlu0.b32.cont [14/16] %v3642, 128
        %3694 = vxpose.xlu0.b32.cont [15/16] %v3644, 128
        %3695 = vxpose.xlu0.b32.end [16/16] %v3646, 128
        %v3696 = vpop.trf.xlu0
        %v3697 = vpop.trf.xlu0
        %v3698 = vpop.trf.xlu0
        %v3699 = vpop.trf.xlu0
        %v3700 = vpop.trf.xlu0
        %v3701 = vpop.trf.xlu0
        %v3702 = vpop.trf.xlu0
        %v3703 = vpop.trf.xlu0
        %v3704 = vpop.trf.xlu0
        %v3705 = vpop.trf.xlu0
        %v3706 = vpop.trf.xlu0
        %v3707 = vpop.trf.xlu0
        %v3708 = vpop.trf.xlu0
        %v3709 = vpop.trf.xlu0
        %v3710 = vpop.trf.xlu0
        %v3711 = vpop.trf.xlu0
        %3712 = vxpose.xlu0.b32.start [1/16] %v3648, 128
        %3713 = vxpose.xlu0.b32.cont [2/16] %v3650, 128
        %3714 = vxpose.xlu0.b32.cont [3/16] %v3652, 128
        %3715 = vxpose.xlu0.b32.cont [4/16] %v3654, 128
        %3716 = vxpose.xlu0.b32.cont [5/16] %v3656, 128
        %3717 = vxpose.xlu0.b32.cont [6/16] %v3658, 128
        %3718 = vxpose.xlu0.b32.cont [7/16] %v3660, 128
        %3719 = vxpose.xlu0.b32.cont [8/16] %v3662, 128
        %3720 = vxpose.xlu0.b32.cont [9/16] %v3664, 128
        %3721 = vxpose.xlu0.b32.cont [10/16] %v3666, 128
        %3722 = vxpose.xlu0.b32.cont [11/16] %v3668, 128
        %3723 = vxpose.xlu0.b32.cont [12/16] %v3670, 128
        %3724 = vxpose.xlu0.b32.cont [13/16] %v3672, 128
        %3725 = vxpose.xlu0.b32.cont [14/16] %v3674, 128
        %3726 = vxpose.xlu0.b32.cont [15/16] %v3676, 128
        %3727 = vxpose.xlu0.b32.end [16/16] %v3678, 128
        %v3728 = vpop.trf.xlu0
        %v3729 = vpop.trf.xlu0
        %v3730 = vpop.trf.xlu0
        %v3731 = vpop.trf.xlu0
        %v3732 = vpop.trf.xlu0
        %v3733 = vpop.trf.xlu0
        %v3734 = vpop.trf.xlu0
        %v3735 = vpop.trf.xlu0
        %v3736 = vpop.trf.xlu0
        %v3737 = vpop.trf.xlu0
        %v3738 = vpop.trf.xlu0
        %v3739 = vpop.trf.xlu0
        %v3740 = vpop.trf.xlu0
        %v3741 = vpop.trf.xlu0
        %v3742 = vpop.trf.xlu0
        %v3743 = vpop.trf.xlu0
        %v3744 = vpack.c.bf16 %v3697, %v3696
        %v3745 = vpack.c.bf16 %v3729, %v3728
        %v3746 = vpack.c.bf16 %v3699, %v3698
        %v3747 = vpack.c.bf16 %v3731, %v3730
        %v3748 = vpack.c.bf16 %v3701, %v3700
        %v3749 = vpack.c.bf16 %v3733, %v3732
        %v3750 = vpack.c.bf16 %v3703, %v3702
        %v3751 = vpack.c.bf16 %v3735, %v3734
        %v3752 = vpack.c.bf16 %v3705, %v3704
        %v3753 = vpack.c.bf16 %v3737, %v3736
        %v3754 = vpack.c.bf16 %v3707, %v3706
        %v3755 = vpack.c.bf16 %v3739, %v3738
        %v3756 = vpack.c.bf16 %v3709, %v3708
        %v3757 = vpack.c.bf16 %v3741, %v3740
        %v3758 = vpack.c.bf16 %v3711, %v3710
        %v3759 = vpack.c.bf16 %v3743, %v3742
        %v3776 = vunpack.c.l.b16 %v3744
        %v3777 = vunpack.c.l.b16 %v3745
        %v3778 = vunpack.c.h.b16 %v3744
        %v3779 = vunpack.c.h.b16 %v3745
        %v3780 = vunpack.c.l.b16 %v3746
        %v3781 = vunpack.c.l.b16 %v3747
        %v3782 = vunpack.c.h.b16 %v3746
        %v3783 = vunpack.c.h.b16 %v3747
        %v3784 = vunpack.c.l.b16 %v3748
        %v3785 = vunpack.c.l.b16 %v3749
        %v3786 = vunpack.c.h.b16 %v3748
        %v3787 = vunpack.c.h.b16 %v3749
        %v3788 = vunpack.c.l.b16 %v3750
        %v3789 = vunpack.c.l.b16 %v3751
        %v3790 = vunpack.c.h.b16 %v3750
        %v3791 = vunpack.c.h.b16 %v3751
        %v3792 = vunpack.c.l.b16 %v3752
        %v3793 = vunpack.c.l.b16 %v3753
        %v3794 = vunpack.c.h.b16 %v3752
        %v3795 = vunpack.c.h.b16 %v3753
        %v3796 = vunpack.c.l.b16 %v3754
        %v3797 = vunpack.c.l.b16 %v3755
        %v3798 = vunpack.c.h.b16 %v3754
        %v3799 = vunpack.c.h.b16 %v3755
        %v3800 = vunpack.c.l.b16 %v3756
        %v3801 = vunpack.c.l.b16 %v3757
        %v3802 = vunpack.c.h.b16 %v3756
        %v3803 = vunpack.c.h.b16 %v3757
        %v3804 = vunpack.c.l.b16 %v3758
        %v3805 = vunpack.c.l.b16 %v3759
        %v3806 = vunpack.c.h.b16 %v3758
        %v3807 = vunpack.c.h.b16 %v3759
        %v3808 = vpack.c.b16 %v3777, %v3776
        %v3809 = vpack.c.b16 %v3779, %v3778
        %v3810 = vpack.c.b16 %v3781, %v3780
        %v3811 = vpack.c.b16 %v3783, %v3782
        %v3812 = vpack.c.b16 %v3785, %v3784
        %v3813 = vpack.c.b16 %v3787, %v3786
        %v3814 = vpack.c.b16 %v3789, %v3788
        %v3815 = vpack.c.b16 %v3791, %v3790
        %v3816 = vpack.c.b16 %v3793, %v3792
        %v3817 = vpack.c.b16 %v3795, %v3794
        %v3818 = vpack.c.b16 %v3797, %v3796
        %v3819 = vpack.c.b16 %v3799, %v3798
        %v3820 = vpack.c.b16 %v3801, %v3800
        %v3821 = vpack.c.b16 %v3803, %v3802
        %v3822 = vpack.c.b16 %v3805, %v3804
        %v3823 = vpack.c.b16 %v3807, %v3806
        %3840 = vst [vmem:[%s248] sm:$0xff] %v3808
        %3841 = vst [vmem:[%s248 + $0x8] sm:$0xff] %v3809
        %3842 = vst [vmem:[%s248 + $0x10] sm:$0xff] %v3810
        %3843 = vst [vmem:[%s248 + $0x18] sm:$0xff] %v3811
        %3844 = vst [vmem:[%s248 + $0x20] sm:$0xff] %v3812
        %3845 = vst [vmem:[%s248 + $0x28] sm:$0xff] %v3813
        %3846 = vst [vmem:[%s248 + $0x30] sm:$0xff] %v3814
        %3847 = vst [vmem:[%s248 + $0x38] sm:$0xff] %v3815
        %3848 = vst [vmem:[%s248 + $0x40] sm:$0xff] %v3816
        %3849 = vst [vmem:[%s248 + $0x48] sm:$0xff] %v3817
        %3850 = vst [vmem:[%s248 + $0x50] sm:$0xff] %v3818
        %3851 = vst [vmem:[%s248 + $0x58] sm:$0xff] %v3819
        %3852 = vst [vmem:[%s248 + $0x60] sm:$0xff] %v3820
        %3853 = vst [vmem:[%s248 + $0x68] sm:$0xff] %v3821
        %3854 = vst [vmem:[%s248 + $0x70] sm:$0xff] %v3822
        %3855 = vst [vmem:[%s248 + $0x78] sm:$0xff] %v3823
        %v3856 = vpack.c.bf16 %v3619, %v3617
        %v3857 = vpack.c.bf16 %v3623, %v3621
        %v3858 = vpack.c.bf16 %v3627, %v3625
        %v3859 = vpack.c.bf16 %v3631, %v3629
        %v3860 = vpack.c.bf16 %v3635, %v3633
        %v3861 = vpack.c.bf16 %v3639, %v3637
        %v3862 = vpack.c.bf16 %v3643, %v3641
        %v3863 = vpack.c.bf16 %v3647, %v3645
        %v3864 = vpack.c.bf16 %v3651, %v3649
        %v3865 = vpack.c.bf16 %v3655, %v3653
        %v3866 = vpack.c.bf16 %v3659, %v3657
        %v3867 = vpack.c.bf16 %v3663, %v3661
        %v3868 = vpack.c.bf16 %v3667, %v3665
        %v3869 = vpack.c.bf16 %v3671, %v3669
        %v3870 = vpack.c.bf16 %v3675, %v3673
        %v3871 = vpack.c.bf16 %v3679, %v3677
        %v3888 = vunpack.c.l.b16 %v3856
        %v3889 = vunpack.c.h.b16 %v3856
        %v3890 = vunpack.c.l.b16 %v3857
        %v3891 = vunpack.c.h.b16 %v3857
        %v3892 = vunpack.c.l.b16 %v3858
        %v3893 = vunpack.c.h.b16 %v3858
        %v3894 = vunpack.c.l.b16 %v3859
        %v3895 = vunpack.c.h.b16 %v3859
        %v3896 = vunpack.c.l.b16 %v3860
        %v3897 = vunpack.c.h.b16 %v3860
        %v3898 = vunpack.c.l.b16 %v3861
        %v3899 = vunpack.c.h.b16 %v3861
        %v3900 = vunpack.c.l.b16 %v3862
        %v3901 = vunpack.c.h.b16 %v3862
        %v3902 = vunpack.c.l.b16 %v3863
        %v3903 = vunpack.c.h.b16 %v3863
        %v3904 = vunpack.c.l.b16 %v3864
        %v3905 = vunpack.c.h.b16 %v3864
        %v3906 = vunpack.c.l.b16 %v3865
        %v3907 = vunpack.c.h.b16 %v3865
        %v3908 = vunpack.c.l.b16 %v3866
        %v3909 = vunpack.c.h.b16 %v3866
        %v3910 = vunpack.c.l.b16 %v3867
        %v3911 = vunpack.c.h.b16 %v3867
        %v3912 = vunpack.c.l.b16 %v3868
        %v3913 = vunpack.c.h.b16 %v3868
        %v3914 = vunpack.c.l.b16 %v3869
        %v3915 = vunpack.c.h.b16 %v3869
        %v3916 = vunpack.c.l.b16 %v3870
        %v3917 = vunpack.c.h.b16 %v3870
        %v3918 = vunpack.c.l.b16 %v3871
        %v3919 = vunpack.c.h.b16 %v3871
        %v3920 = vpack.c.b16 %v3888, %v3888
        %v3921 = vpack.c.b16 %v3889, %v3889
        %v3922 = vpack.c.b16 %v3890, %v3890
        %v3923 = vpack.c.b16 %v3891, %v3891
        %v3924 = vpack.c.b16 %v3892, %v3892
        %v3925 = vpack.c.b16 %v3893, %v3893
        %v3926 = vpack.c.b16 %v3894, %v3894
        %v3927 = vpack.c.b16 %v3895, %v3895
        %v3928 = vpack.c.b16 %v3896, %v3896
        %v3929 = vpack.c.b16 %v3897, %v3897
        %v3930 = vpack.c.b16 %v3898, %v3898
        %v3931 = vpack.c.b16 %v3899, %v3899
        %v3932 = vpack.c.b16 %v3900, %v3900
        %v3933 = vpack.c.b16 %v3901, %v3901
        %v3934 = vpack.c.b16 %v3902, %v3902
        %v3935 = vpack.c.b16 %v3903, %v3903
        %v3936 = vpack.c.b16 %v3904, %v3904
        %v3937 = vpack.c.b16 %v3905, %v3905
        %v3938 = vpack.c.b16 %v3906, %v3906
        %v3939 = vpack.c.b16 %v3907, %v3907
        %v3940 = vpack.c.b16 %v3908, %v3908
        %v3941 = vpack.c.b16 %v3909, %v3909
        %v3942 = vpack.c.b16 %v3910, %v3910
        %v3943 = vpack.c.b16 %v3911, %v3911
        %v3944 = vpack.c.b16 %v3912, %v3912
        %v3945 = vpack.c.b16 %v3913, %v3913
        %v3946 = vpack.c.b16 %v3914, %v3914
        %v3947 = vpack.c.b16 %v3915, %v3915
        %v3948 = vpack.c.b16 %v3916, %v3916
        %v3949 = vpack.c.b16 %v3917, %v3917
        %v3950 = vpack.c.b16 %v3918, %v3918
        %v3951 = vpack.c.b16 %v3919, %v3919
        %vm3984 = vcmask 519168
        %3985 = vst.msk [vmem:[%s271] sm:$0xf] %vm3984, %v3920
        %3986 = vst.msk [vmem:[%s271 + $0x4] sm:$0xf] %vm3984, %v3921
        %3987 = vst.msk [vmem:[%s271 + $0x8] sm:$0xf] %vm3984, %v3922
        %3988 = vst.msk [vmem:[%s271 + $0xc] sm:$0xf] %vm3984, %v3923
        %3989 = vst.msk [vmem:[%s271 + $0x10] sm:$0xf] %vm3984, %v3924
        %3990 = vst.msk [vmem:[%s271 + $0x14] sm:$0xf] %vm3984, %v3925
        %3991 = vst.msk [vmem:[%s271 + $0x18] sm:$0xf] %vm3984, %v3926
        %3992 = vst.msk [vmem:[%s271 + $0x1c] sm:$0xf] %vm3984, %v3927
        %3993 = vst.msk [vmem:[%s271 + $0x20] sm:$0xf] %vm3984, %v3928
        %3994 = vst.msk [vmem:[%s271 + $0x24] sm:$0xf] %vm3984, %v3929
        %3995 = vst.msk [vmem:[%s271 + $0x28] sm:$0xf] %vm3984, %v3930
        %3996 = vst.msk [vmem:[%s271 + $0x2c] sm:$0xf] %vm3984, %v3931
        %3997 = vst.msk [vmem:[%s271 + $0x30] sm:$0xf] %vm3984, %v3932
        %3998 = vst.msk [vmem:[%s271 + $0x34] sm:$0xf] %vm3984, %v3933
        %3999 = vst.msk [vmem:[%s271 + $0x38] sm:$0xf] %vm3984, %v3934
        %4000 = vst.msk [vmem:[%s271 + $0x3c] sm:$0xf] %vm3984, %v3935
        %4001 = vst.msk [vmem:[%s271 + $0x40] sm:$0xf] %vm3984, %v3936
        %4002 = vst.msk [vmem:[%s271 + $0x44] sm:$0xf] %vm3984, %v3937
        %4003 = vst.msk [vmem:[%s271 + $0x48] sm:$0xf] %vm3984, %v3938
        %4004 = vst.msk [vmem:[%s271 + $0x4c] sm:$0xf] %vm3984, %v3939
        %4005 = vst.msk [vmem:[%s271 + $0x50] sm:$0xf] %vm3984, %v3940
        %4006 = vst.msk [vmem:[%s271 + $0x54] sm:$0xf] %vm3984, %v3941
        %4007 = vst.msk [vmem:[%s271 + $0x58] sm:$0xf] %vm3984, %v3942
        %4008 = vst.msk [vmem:[%s271 + $0x5c] sm:$0xf] %vm3984, %v3943
        %4009 = vst.msk [vmem:[%s271 + $0x60] sm:$0xf] %vm3984, %v3944
        %4010 = vst.msk [vmem:[%s271 + $0x64] sm:$0xf] %vm3984, %v3945
        %4011 = vst.msk [vmem:[%s271 + $0x68] sm:$0xf] %vm3984, %v3946
        %4012 = vst.msk [vmem:[%s271 + $0x6c] sm:$0xf] %vm3984, %v3947
        %4013 = vst.msk [vmem:[%s271 + $0x70] sm:$0xf] %vm3984, %v3948
        %4014 = vst.msk [vmem:[%s271 + $0x74] sm:$0xf] %vm3984, %v3949
        %4015 = vst.msk [vmem:[%s271 + $0x78] sm:$0xf] %vm3984, %v3950
        %4016 = vst.msk [vmem:[%s271 + $0x7c] sm:$0xf] %vm3984, %v3951
        %s4017 = sand.u32 %s96, 1
        %s4018 = scalar_lea.sflag [#allocation4], %s4017
        %s4019 = sand.u32 %s96, 1
        %s4020 = smul.addr %s4019, 512
        %s4021 = scalar_lea.vmem [#allocation5], %s4020
        %s4022 = sand.u32 %s124, 1
        %s4023 = scalar_lea.sflag [#allocation7], %s4022
        %s4024 = sand.u32 %s124, 1
        %s4025 = smul.addr %s4024, 128
        %s4026 = scalar_lea.vmem [#allocation6], %s4025
        %s4027 = smul.u32 32, %s30
        %p4028 = scmp.lt.s32.totalorder %s29, 1
        %s4029 = scalar_select %p4028, %s29, 1
        %p4030 = scmp.lt.s32.totalorder %s4027, 31
        %s4031 = scalar_select %p4030, %s4027, 31
        %s4032 = smul.addr %s4029, 32
        %s4033 = sadd.s32 %s4031, %s4032
        %s4034 = smul.addr %s4033, 4
        %s4035 = scalar_lea.vmem %s4, %s4034
        // Predicated region
        $region33: #{tpu_custom_call.1} parent=27 // pred_check
          %p4036 = pneg %p106
        $region34: #{tpu_custom_call.1} parent=27 // pred_check_branch
          %4038 = sbr.rel (%p4036) target = $region36
        $region35: #{tpu_custom_call.1} parent=27 // pred_region
          %s4039 = smul.u32 32, %s30
          %s4041 = ssub.s32 8192, 8192
          %4042 = vsyncadd %s4018, %s4041
          %s4043 = smul.addr %s29, 128
          %s4044 = sadd.s32 %s4039, %s4043
          %s4045 = smul.addr %s4044, 64
          %s4046 = scalar_lea.hbm %s2, %s4045
          %s4047 = sshll.u32 %s4021, 4
          %s4048 = int_to_ptr.vmem [resolvable:$true] %s4047
          %4053 = dma.vmem_to_hbm [thread:$0]  %s4048, 8192, %s4046, %s4018, 64, 64, 4
        $region36: #{tpu_custom_call.1} parent=27 // pred_fallthru
          _
        // Predicated region
        $region37: #{tpu_custom_call.1} parent=27 // pred_check
          %p4054 = pneg %p134
        $region38: #{tpu_custom_call.1} parent=27 // pred_check_branch
          %4056 = sbr.rel (%p4054) target = $region40
        $region39: #{tpu_custom_call.1} parent=27 // pred_region
          %s4057 = smul.u32 2, %s30
          %s4059 = ssub.s32 2048, 2048
          %4060 = vsyncadd %s4023, %s4059
          %s4061 = smul.addr %s29, 32
          %s4062 = sadd.s32 %s4057, %s4061
          %s4063 = smul.addr %s4062, 64
          %s4064 = scalar_lea.hbm %s3, %s4063
          %s4065 = sshll.u32 %s4026, 4
          %s4066 = int_to_ptr.vmem [resolvable:$true] %s4065
          %4071 = dma.vmem_to_hbm [thread:$0]  %s4066, 2048, %s4064, %s4023, 128, 128, 8
        $region40: #{tpu_custom_call.1} parent=27 // pred_fallthru
          _
        // Predicated region
        $region41: #{tpu_custom_call.1} parent=27 // pred_check
          %p4072 = pneg %p162
        $region42: #{tpu_custom_call.1} parent=27 // pred_check_branch
          %4074 = sbr.rel (%p4072) target = $region44
        $region43: #{tpu_custom_call.1} parent=27 // pred_region
          %s4075 = smul.u32 32, %s30
        $region44: #{tpu_custom_call.1} parent=27 // pred_fallthru
          _
      $region28: #{tpu_custom_call.1} parent=5 // pred_fallthru
        _
      %p4076 = scmp.le.s32.totalorder 2, %s20
      // Predicated region
      $region45: #{tpu_custom_call.1} parent=5 // pred_check
        %p4077 = pneg %p4076
      $region46: #{tpu_custom_call.1} parent=5 // pred_check_branch
        %4079 = sbr.rel (%p4077) target = $region48
      $region47: #{tpu_custom_call.1} parent=5 // pred_region
        %s4080 = ssub.s32 %s20, 2
        // Predicated region
        $region49: #{tpu_custom_call.1} parent=47 // pred_check
          %p4081 = pneg %p112
        $region50: #{tpu_custom_call.1} parent=47 // pred_check_branch
          %4083 = sbr.rel (%p4081) target = $region52
        $region51: #{tpu_custom_call.1} parent=47 // pred_region
          %s4084 = sand.u32 %s97, 1
          %s4085 = scalar_lea.sflag [#allocation4], %s4084
          %s4086 = sand.u32 %s97, 1
          %s4087 = smul.addr %s4086, 512
          %s4088 = scalar_lea.vmem [#allocation5], %s4087
          %4089 = dma.done %s4085, 8192
        $region52: #{tpu_custom_call.1} parent=47 // pred_fallthru
          _
        // Predicated region
        $region53: #{tpu_custom_call.1} parent=47 // pred_check
          %p4090 = pneg %p140
        $region54: #{tpu_custom_call.1} parent=47 // pred_check_branch
          %4092 = sbr.rel (%p4090) target = $region56
        $region55: #{tpu_custom_call.1} parent=47 // pred_region
          %s4093 = sand.u32 %s125, 1
          %s4094 = scalar_lea.sflag [#allocation7], %s4093
          %s4095 = sand.u32 %s125, 1
          %s4096 = smul.addr %s4095, 128
          %s4097 = scalar_lea.vmem [#allocation6], %s4096
          %4098 = dma.done %s4094, 2048
        $region56: #{tpu_custom_call.1} parent=47 // pred_fallthru
          _
        // Predicated region
        $region57: #{tpu_custom_call.1} parent=47 // pred_check
          %p4099 = pneg %p168
        $region58: #{tpu_custom_call.1} parent=47 // pred_check_branch
          %4101 = sbr.rel (%p4099) target = $region60
        $region59: #{tpu_custom_call.1} parent=47 // pred_region
          %s4102 = smul.u32 32, %s32
          %p4103 = scmp.lt.s32.totalorder %s31, 1
          %s4104 = scalar_select %p4103, %s31, 1
          %p4105 = scmp.lt.s32.totalorder %s4102, 31
          %s4106 = scalar_select %p4105, %s4102, 31
          %s4107 = smul.addr %s4104, 32
          %s4108 = sadd.s32 %s4106, %s4107
          %s4109 = smul.addr %s4108, 4
          %s4110 = scalar_lea.vmem %s4, %s4109
        $region60: #{tpu_custom_call.1} parent=47 // pred_fallthru
          _
      $region48: #{tpu_custom_call.1} parent=5 // pred_fallthru
        _
    $region6: #{tpu_custom_call.1} parent=1 // loop_footer
      %s24 = sadd.s32 1, %s20
    $region7: #{tpu_custom_call.1} parent=1 // loop_footer_branch
      %19 = sbr.rel target = $region3
    $region8: #{tpu_custom_call.1} parent=1 // loop_exit
      _
    %4111 = vsyncpa [#allocation3], 1
    %s4112 = scalar_lea.sflag [#allocation3], 1
    %4113 = vsyncpa %s4112, 1
    %4114 = vsyncpa [#allocation4], 1
    %s4115 = scalar_lea.sflag [#allocation4], 1
    %4116 = vsyncpa %s4115, 1
    %4117 = vsyncpa [#allocation7], 1
    %s4118 = scalar_lea.sflag [#allocation7], 1
    %4119 = vsyncpa %s4118, 1

</llo_original>
